<compile_context>
chip_gen: v5e
topology: v5e:2x2
jax: 0.10.0
libtpu: 0.0.40
codegen_flags: <defaults>
</compile_context>

<pallas_src>
import functools

import jax
import jax.numpy as jnp
from jax import lax
from jax.experimental import pallas as pl
from jax.experimental.pallas import tpu as pltpu

# ----- scaled-down config (structure identical to the PyTorch module) -----
LSTM_UNITS = 32                      # 512 in the original
DENSE_HIDDEN_UNITS = 4 * LSTM_UNITS  # = concat(max_pool, avg_pool) width
EMBED_SIZE = 32
MAX_FEATURES = 50
BATCH = 2
SEQ = 8


# ------------------------- fused forward-pass kernel -------------------------
def fused_forward_kernel(x_ref,
                         wih1f_ref, wih1b_ref, whh1f_ref, whh1b_ref,
                         b1f_ref, b1b_ref,
                         wih2f_ref, wih2b_ref, whh2f_ref, whh2b_ref,
                         b2f_ref, b2b_ref,
                         wd_ref, bd_ref, wo_ref, bo_ref,
                         out_ref,
                         xgf_ref, xgb_ref, seq1f_ref, seq1b_ref,
                         *, seq_len, batch, hidden):
    """Embedded input -> biLSTM -> biLSTM -> [max,mean]-pool -> dense head.

    x_ref:            (T*B, E)  embedded tokens, time-major-flat (row t*B + b)
    wih*{f,b}:        (D, 4H)   input->gate weights per direction, gate order [i|f|o|g]
    whh*{f,b}:        (H, 4H)   recurrent weights per direction (no zero blocks)
    b*{f,b}:          (1, 4H)   b_ih + b_hh per direction, same gate order
    wd/bd, wo/bo:     dense head (transposed)
    out_ref:          (B, 1)    the only HBM write of the whole network
    xg{f,b}_ref:      (T*B, 4H) scratch: hoisted input projections (reused by both layers)
    seq1{f,b}_ref:    (T*B, H)  scratch: layer-1 per-direction hidden sequence
    """
    H, B, T = hidden, batch, seq_len
    H2, H3 = 2 * H, 3 * H
    unroll = T if T <= 16 else 2
    zeros = jnp.zeros((B, H), jnp.float32)
    neg_inf = jnp.full((B, H), -jnp.inf, jnp.float32)

    def lstm_cell(x_gates, h, c, whh):
        # x_gates already holds x@W_ih + b_ih + b_hh, gate order [i | f | o | g].
        gates = x_gates + jnp.dot(h, whh, preferred_element_type=jnp.float32)
        sg = jax.nn.sigmoid(gates[:, :H3])          # i | f | o   (EUP)
        g = jnp.tanh(gates[:, H3:])                 # g
        c_new = sg[:, H:H2] * c + sg[:, :H] * g
        h_new = sg[:, H2:H3] * jnp.tanh(c_new)
        return h_new, c_new

    # ------------------------------ layer 1 ------------------------------
    # Hoisted input projection: one matmul per direction over all timesteps,
    # bias folded in.  Row block [t*B, (t+1)*B) of the scratch is timestep t.
    x = x_ref[...]
    xgf_ref[...] = jnp.dot(x, wih1f_ref[...],
                           preferred_element_type=jnp.float32) + b1f_ref[...]
    xgb_ref[...] = jnp.dot(x, wih1b_ref[...],
                           preferred_element_type=jnp.float32) + b1b_ref[...]

    wh1f = whh1f_ref[...]
    wh1b = whh1b_ref[...]

    def layer1_step(t, carry):
        h_f, c_f, h_b, c_b = carry
        rt = T - 1 - t
        h_f, c_f = lstm_cell(xgf_ref[pl.ds(t * B, B), :], h_f, c_f, wh1f)
        h_b, c_b = lstm_cell(xgb_ref[pl.ds(rt * B, B), :], h_b, c_b, wh1b)
        seq1f_ref[pl.ds(t * B, B), :] = h_f        # forward state at time t
        seq1b_ref[pl.ds(rt * B, B), :] = h_b       # backward state at time T-1-t
        return h_f, c_f, h_b, c_b

    lax.fori_loop(0, T, layer1_step, (zeros, zeros, zeros, zeros),
                  unroll=unroll)

    # ------------------------------ layer 2 ------------------------------
    # Input projection of [h_fwd | h_bwd]: rows 0:H of wih2* multiply the fwd
    # half, rows H:2H the bwd half (no concat of the layer-1 sequence needed).
    s1f = seq1f_ref[...]
    s1b = seq1b_ref[...]
    xgf_ref[...] = (jnp.dot(s1f, wih2f_ref[0:H, :], preferred_element_type=jnp.float32)
                    + jnp.dot(s1b, wih2f_ref[H:H2, :], preferred_element_type=jnp.float32)
                    + b2f_ref[...])
    xgb_ref[...] = (jnp.dot(s1f, wih2b_ref[0:H, :], preferred_element_type=jnp.float32)
                    + jnp.dot(s1b, wih2b_ref[H:H2, :], preferred_element_type=jnp.float32)
                    + b2b_ref[...])

    wh2f = whh2f_ref[...]
    wh2b = whh2b_ref[...]

    def layer2_step(t, carry):
        # max/mean pooling fused into the recurrence; layer-2 states never stored.
        h_f, c_f, h_b, c_b, mx_f, sm_f, mx_b, sm_b = carry
        rt = T - 1 - t
        h_f, c_f = lstm_cell(xgf_ref[pl.ds(t * B, B), :], h_f, c_f, wh2f)
        h_b, c_b = lstm_cell(xgb_ref[pl.ds(rt * B, B), :], h_b, c_b, wh2b)
        return (h_f, c_f, h_b, c_b,
                jnp.maximum(mx_f, h_f), sm_f + h_f,
                jnp.maximum(mx_b, h_b), sm_b + h_b)

    carry = lax.fori_loop(
        0, T, layer2_step,
        (zeros, zeros, zeros, zeros, neg_inf, zeros, neg_inf, zeros),
        unroll=unroll)
    mx_f, sm_f, mx_b, sm_b = carry[4:]

    # ----------------------------- dense head -----------------------------
    inv_t = 1.0 / T
    h_conc = jnp.concatenate(
        [mx_f, mx_b, sm_f * inv_t, sm_b * inv_t], axis=1)             # (B, 4H)
    lin1 = jnp.dot(h_conc, wd_ref[...],
                   preferred_element_type=jnp.float32) + bd_ref[...]
    hidden_v = h_conc + jnp.maximum(lin1, 0.0)                         # relu + residual
    out_ref[...] = jnp.dot(hidden_v, wo_ref[...],
                           preferred_element_type=jnp.float32) + bo_ref[...]


# ------------------------------- forward wrapper ------------------------------
def neural_net_forward(x_tokens, p):
    B, T = x_tokens.shape
    E = p["embedding"].shape[1]
    H = LSTM_UNITS
    # Embedding lookup (frozen weights) stays as XLA glue; everything after it
    # is one fused Pallas kernel.
    h_embedding = jnp.take(p["embedding"], x_tokens, axis=0)          # (B, T, E)
    # SpatialDropout(0.3) is identity at inference time.
    # TODO(synk): training-mode channel dropout not implemented (inference only).
    # Time-major flatten so the kernel's per-step reads are contiguous row blocks.
    x_flat = jnp.transpose(h_embedding, (1, 0, 2)).reshape(T * B, E)  # (T*B, E)
    vmem = pl.BlockSpec(memory_space=pltpu.MemorySpace.VMEM)
    # TODO(synk): at full size (H=512, T~220) add a "parallel" batch grid axis
    # (keep x 3-D (T, B, E) so batch tiles are rectangular) and cast weights to
    # bf16 so resident state fits v7x's 64 MiB VMEM and both TensorCores are used.
    out = pl.pallas_call(
        functools.partial(fused_forward_kernel, seq_len=T, batch=B, hidden=H),
        out_shape=jax.ShapeDtypeStruct((B, 1), jnp.float32),
        in_specs=[vmem] * 17,
        out_specs=vmem,
        scratch_shapes=[
            pltpu.VMEM((T * B, 4 * H), jnp.float32),   # xg fwd (reused by both layers)
            pltpu.VMEM((T * B, 4 * H), jnp.float32),   # xg bwd
            pltpu.VMEM((T * B, H), jnp.float32),       # layer-1 fwd hidden sequence
            pltpu.VMEM((T * B, H), jnp.float32),       # layer-1 bwd hidden sequence
        ],
        compiler_params=pltpu.CompilerParams(vmem_limit_bytes=32 * 1024 * 1024),
    )(x_flat,
      p["wih1f"], p["wih1b"], p["whh1f"], p["whh1b"], p["b1f"], p["b1b"],
      p["wih2f"], p["wih2b"], p["whh2f"], p["whh2b"], p["b2f"], p["b2b"],
      p["wd"], p["bd"], p["wo"], p["bo"])
    return jnp.squeeze(out, axis=-1)                                  # (B,)


# ------------------------------ parameter packing ------------------------------
GATE_PERM = (0, 1, 3, 2)   # PyTorch gate order [i, f, g, o] -> kernel [i, f, o, g]


def _pack_dir(w_ih, w_hh, b_ih, b_hh, hidden):
    """One direction of a PyTorch-layout LSTM -> (wih, whh, bias) for the kernel."""
    H = hidden
    D = w_ih.shape[1]
    perm = list(GATE_PERM)
    wih = w_ih.T.reshape(D, 4, H)[:, perm, :].reshape(D, 4 * H)
    whh = w_hh.T.reshape(H, 4, H)[:, perm, :].reshape(H, 4 * H)
    bias = (b_ih + b_hh).reshape(4, H)[perm, :].reshape(1, 4 * H)
    return wih, whh, bias


def pack_params(raw):
    p = {"embedding": raw["embedding"]}
    for idx, name in ((1, "lstm1"), (2, "lstm2")):
        for dir_name, tag in (("fwd", "f"), ("bwd", "b")):
            wih, whh, bias = _pack_dir(*raw[name][dir_name], LSTM_UNITS)
            p[f"wih{idx}{tag}"] = wih
            p[f"whh{idx}{tag}"] = whh
            p[f"b{idx}{tag}"] = bias
    p["wd"] = raw["linear1_w"].T
    p["bd"] = raw["linear1_b"].reshape(1, -1)
    p["wo"] = raw["linear_out_w"].T
    p["bo"] = raw["linear_out_b"].reshape(1, -1)
    return p


# --------------------- pure-JAX reference (correctness check) ------------------
def _lstm_dir_ref(x, w_ih, w_hh, b_ih, b_hh, hidden, reverse):
    H = hidden
    B = x.shape[0]
    if reverse:
        x = x[:, ::-1, :]

    def step(carry, x_t):
        h, c = carry
        gates = x_t @ w_ih.T + h @ w_hh.T + b_ih + b_hh
        i = jax.nn.sigmoid(gates[:, 0:H])
        f = jax.nn.sigmoid(gates[:, H:2 * H])
        g = jnp.tanh(gates[:, 2 * H:3 * H])
        o = jax.nn.sigmoid(gates[:, 3 * H:4 * H])
        c = f * c + i * g
        h = o * jnp.tanh(c)
        return (h, c), h

    init = (jnp.zeros((B, H), jnp.float32), jnp.zeros((B, H), jnp.float32))
    _, hs = lax.scan(step, init, jnp.transpose(x, (1, 0, 2)))
    hs = jnp.transpose(hs, (1, 0, 2))                                 # (B, T, H)
    return hs[:, ::-1, :] if reverse else hs


def neural_net_reference(x_tokens, raw):
    h = jnp.take(raw["embedding"], x_tokens, axis=0)
    for name in ("lstm1", "lstm2"):
        f = _lstm_dir_ref(h, *raw[name]["fwd"], LSTM_UNITS, reverse=False)
        b = _lstm_dir_ref(h, *raw[name]["bwd"], LSTM_UNITS, reverse=True)
        h = jnp.concatenate([f, b], axis=-1)
    avg_pool = jnp.mean(h, axis=1)
    max_pool = jnp.max(h, axis=1)
    h_conc = jnp.concatenate([max_pool, avg_pool], axis=-1)
    lin1 = jnp.maximum(h_conc @ raw["linear1_w"].T + raw["linear1_b"], 0.0)
    hidden = h_conc + lin1
    out = hidden @ raw["linear_out_w"].T + raw["linear_out_b"]
    return jnp.squeeze(out, axis=-1)


# ------------------------------ parameter init ---------------------------------
def _uniform(key, shape, scale):
    return jax.random.uniform(key, shape, jnp.float32, -scale, scale)


def init_raw_params(key):
    raw = {}
    key, k_emb = jax.random.split(key)
    raw["embedding"] = jax.random.normal(k_emb, (MAX_FEATURES, EMBED_SIZE),
                                         jnp.float32)

    def lstm_layer(key, input_size):
        scale = 1.0 / (LSTM_UNITS ** 0.5)
        layer = {}
        for name in ("fwd", "bwd"):
            key, k1, k2, k3, k4 = jax.random.split(key, 5)
            layer[name] = (_uniform(k1, (4 * LSTM_UNITS, input_size), scale),
                           _uniform(k2, (4 * LSTM_UNITS, LSTM_UNITS), scale),
                           _uniform(k3, (4 * LSTM_UNITS,), scale),
                           _uniform(k4, (4 * LSTM_UNITS,), scale))
        return layer, key

    raw["lstm1"], key = lstm_layer(key, EMBED_SIZE)
    raw["lstm2"], key = lstm_layer(key, 2 * LSTM_UNITS)

    def linear(key, in_f, out_f):
        scale = 1.0 / (in_f ** 0.5)
        key, k1, k2 = jax.random.split(key, 3)
        return _uniform(k1, (out_f, in_f), scale), _uniform(k2, (out_f,), scale), key

    raw["linear1_w"], raw["linear1_b"], key = linear(
        key, DENSE_HIDDEN_UNITS, DENSE_HIDDEN_UNITS)
    raw["linear_out_w"], raw["linear_out_b"], key = linear(
        key, DENSE_HIDDEN_UNITS, 1)
    return raw


# ------------------------------------ main --------------------------------------
if __name__ == "__main__":
    key = jax.random.PRNGKey(0)
    key, k_x = jax.random.split(key)
    raw = init_raw_params(key)
    packed = pack_params(raw)
    x_tokens = jax.random.randint(k_x, (BATCH, SEQ), 0, MAX_FEATURES,
                                  dtype=jnp.int32)

    fwd = jax.jit(neural_net_forward)
    result = fwd(x_tokens, packed)
    jax.block_until_ready(result)
    assert result.shape == (BATCH,), result.shape

    # Validate the fused kernel against a plain-JAX reference of the same model.
    ref = jax.jit(neural_net_reference)(x_tokens, raw)
    jax.block_until_ready(ref)
    assert jnp.allclose(result, ref, rtol=2e-3, atol=2e-3), (result, ref)

    print("KERNEL_OK")
</pallas_src>

<mosaic_0001>
module attributes {stable_mosaic.version = 11 : i64} {
  func.func @fused_forward_kernel(%arg0: memref<16x32xf32, #tpu.memory_space<vmem>>, %arg1: memref<32x128xf32, #tpu.memory_space<vmem>>, %arg2: memref<32x128xf32, #tpu.memory_space<vmem>>, %arg3: memref<32x128xf32, #tpu.memory_space<vmem>>, %arg4: memref<32x128xf32, #tpu.memory_space<vmem>>, %arg5: memref<1x128xf32, #tpu.memory_space<vmem>>, %arg6: memref<1x128xf32, #tpu.memory_space<vmem>>, %arg7: memref<64x128xf32, #tpu.memory_space<vmem>>, %arg8: memref<64x128xf32, #tpu.memory_space<vmem>>, %arg9: memref<32x128xf32, #tpu.memory_space<vmem>>, %arg10: memref<32x128xf32, #tpu.memory_space<vmem>>, %arg11: memref<1x128xf32, #tpu.memory_space<vmem>>, %arg12: memref<1x128xf32, #tpu.memory_space<vmem>>, %arg13: memref<128x128xf32, #tpu.memory_space<vmem>>, %arg14: memref<1x128xf32, #tpu.memory_space<vmem>>, %arg15: memref<128x1xf32, #tpu.memory_space<vmem>>, %arg16: memref<1x1xf32, #tpu.memory_space<vmem>>, %arg17: memref<2x1xf32, #tpu.memory_space<vmem>>, %arg18: memref<16x128xf32, #tpu.memory_space<vmem>>, %arg19: memref<16x128xf32, #tpu.memory_space<vmem>>, %arg20: memref<16x32xf32, #tpu.memory_space<vmem>>, %arg21: memref<16x32xf32, #tpu.memory_space<vmem>>) attributes {dimension_semantics = [], scalar_prefetch = 0 : i64, scratch_operands = 4 : i64, tpu.core_type = #tpu.core_type<tc>} {
    %cst = arith.constant 0.000000e+00 : f32
    %0 = vector.broadcast %cst : f32 to vector<2x32xf32>
    %cst_0 = arith.constant 0xFF800000 : f32
    %1 = vector.broadcast %cst_0 : f32 to vector<2x32xf32>
    %c0 = arith.constant 0 : index
    %c0_1 = arith.constant 0 : index
    %2 = vector.load %arg0[%c0, %c0_1] : memref<16x32xf32, #tpu.memory_space<vmem>>, vector<16x32xf32>
    %c0_2 = arith.constant 0 : index
    %c0_3 = arith.constant 0 : index
    %3 = vector.load %arg1[%c0_2, %c0_3] : memref<32x128xf32, #tpu.memory_space<vmem>>, vector<32x128xf32>
    %cst_4 = arith.constant dense<0.000000e+00> : vector<16x128xf32>
    %4 = tpu.matmul %2, %3, %cst_4 {dimension_numbers = #tpu.dot_dimension_numbers<[1], [0], [0], [1], [0, 0, 1, 1], [], []>} : vector<16x32xf32>, vector<32x128xf32>, vector<16x128xf32> -> vector<16x128xf32>
    %c0_5 = arith.constant 0 : index
    %c0_6 = arith.constant 0 : index
    %5 = vector.load %arg5[%c0_5, %c0_6] : memref<1x128xf32, #tpu.memory_space<vmem>>, vector<1x128xf32>
    %6 = vector.broadcast %5 : vector<1x128xf32> to vector<16x128xf32>
    %7 = arith.addf %4, %6 : vector<16x128xf32>
    %c0_7 = arith.constant 0 : index
    %c0_8 = arith.constant 0 : index
    %8 = vector.load %arg18[%c0_7, %c0_8] : memref<16x128xf32, #tpu.memory_space<vmem>>, vector<16x128xf32>
    tpu.vector_store %arg18[%c0_7, %c0_8], %7 {strides = array<i32>} : memref<16x128xf32, #tpu.memory_space<vmem>>, vector<16x128xf32>,
    %c0_9 = arith.constant 0 : index
    %c0_10 = arith.constant 0 : index
    %9 = vector.load %arg2[%c0_9, %c0_10] : memref<32x128xf32, #tpu.memory_space<vmem>>, vector<32x128xf32>
    %cst_11 = arith.constant dense<0.000000e+00> : vector<16x128xf32>
    %10 = tpu.matmul %2, %9, %cst_11 {dimension_numbers = #tpu.dot_dimension_numbers<[1], [0], [0], [1], [0, 0, 1, 1], [], []>} : vector<16x32xf32>, vector<32x128xf32>, vector<16x128xf32> -> vector<16x128xf32>
    %c0_12 = arith.constant 0 : index
    %c0_13 = arith.constant 0 : index
    %11 = vector.load %arg6[%c0_12, %c0_13] : memref<1x128xf32, #tpu.memory_space<vmem>>, vector<1x128xf32>
    %12 = vector.broadcast %11 : vector<1x128xf32> to vector<16x128xf32>
    %13 = arith.addf %10, %12 : vector<16x128xf32>
    %c0_14 = arith.constant 0 : index
    %c0_15 = arith.constant 0 : index
    %14 = vector.load %arg19[%c0_14, %c0_15] : memref<16x128xf32, #tpu.memory_space<vmem>>, vector<16x128xf32>
    tpu.vector_store %arg19[%c0_14, %c0_15], %13 {strides = array<i32>} : memref<16x128xf32, #tpu.memory_space<vmem>>, vector<16x128xf32>,
    %c0_16 = arith.constant 0 : index
    %c0_17 = arith.constant 0 : index
    %15 = vector.load %arg3[%c0_16, %c0_17] : memref<32x128xf32, #tpu.memory_space<vmem>>, vector<32x128xf32>
    %c0_18 = arith.constant 0 : index
    %c0_19 = arith.constant 0 : index
    %16 = vector.load %arg4[%c0_18, %c0_19] : memref<32x128xf32, #tpu.memory_space<vmem>>, vector<32x128xf32>
    %c0_i32 = arith.constant 0 : i32
    %c7_i32 = arith.constant 7 : i32
    %17 = arith.subi %c7_i32, %c0_i32 : i32
    %c2_i32 = arith.constant 2 : i32
    %18 = arith.muli %c0_i32, %c2_i32 : i32
    %19 = arith.index_cast %18 : i32 to index
    %c0_20 = arith.constant 0 : index
    %20 = vector.load %arg18[%19, %c0_20] : memref<16x128xf32, #tpu.memory_space<vmem>>, vector<2x128xf32>
    %cst_21 = arith.constant dense<0.000000e+00> : vector<2x128xf32>
    %21 = tpu.matmul %0, %15, %cst_21 {dimension_numbers = #tpu.dot_dimension_numbers<[1], [0], [0], [1], [0, 0, 1, 1], [], []>} : vector<2x32xf32>, vector<32x128xf32>, vector<2x128xf32> -> vector<2x128xf32>
    %22 = arith.addf %20, %21 : vector<2x128xf32>
    %23 = vector.extract_strided_slice %22 {offsets = [0, 0], sizes = [2, 96], strides = [1, 1]} : vector<2x128xf32> to vector<2x96xf32>
    %24 = arith.negf %23 : vector<2x96xf32>
    %25 = math.exp %24 : vector<2x96xf32>
    %cst_22 = arith.constant 1.000000e+00 : f32
    %26 = vector.broadcast %cst_22 : f32 to vector<2x96xf32>
    %27 = arith.addf %26, %25 : vector<2x96xf32>
    %28 = arith.divf %26, %27 : vector<2x96xf32>
    %29 = vector.extract_strided_slice %22 {offsets = [0, 96], sizes = [2, 32], strides = [1, 1]} : vector<2x128xf32> to vector<2x32xf32>
    %30 = math.tanh %29 : vector<2x32xf32>
    %31 = vector.extract_strided_slice %28 {offsets = [0, 32], sizes = [2, 32], strides = [1, 1]} : vector<2x96xf32> to vector<2x32xf32>
    %32 = arith.mulf %31, %0 : vector<2x32xf32>
    %33 = vector.extract_strided_slice %28 {offsets = [0, 0], sizes = [2, 32], strides = [1, 1]} : vector<2x96xf32> to vector<2x32xf32>
    %34 = arith.mulf %33, %30 : vector<2x32xf32>
    %35 = arith.addf %32, %34 : vector<2x32xf32>
    %36 = vector.extract_strided_slice %28 {offsets = [0, 64], sizes = [2, 32], strides = [1, 1]} : vector<2x96xf32> to vector<2x32xf32>
    %37 = math.tanh %35 : vector<2x32xf32>
    %38 = arith.mulf %36, %37 : vector<2x32xf32>
    %c2_i32_23 = arith.constant 2 : i32
    %39 = arith.muli %17, %c2_i32_23 : i32
    %40 = arith.index_cast %39 : i32 to index
    %c0_24 = arith.constant 0 : index
    %41 = vector.load %arg19[%40, %c0_24] : memref<16x128xf32, #tpu.memory_space<vmem>>, vector<2x128xf32>
    %cst_25 = arith.constant dense<0.000000e+00> : vector<2x128xf32>
    %42 = tpu.matmul %0, %16, %cst_25 {dimension_numbers = #tpu.dot_dimension_numbers<[1], [0], [0], [1], [0, 0, 1, 1], [], []>} : vector<2x32xf32>, vector<32x128xf32>, vector<2x128xf32> -> vector<2x128xf32>
    %43 = arith.addf %41, %42 : vector<2x128xf32>
    %44 = vector.extract_strided_slice %43 {offsets = [0, 0], sizes = [2, 96], strides = [1, 1]} : vector<2x128xf32> to vector<2x96xf32>
    %45 = arith.negf %44 : vector<2x96xf32>
    %46 = math.exp %45 : vector<2x96xf32>
    %cst_26 = arith.constant 1.000000e+00 : f32
    %47 = vector.broadcast %cst_26 : f32 to vector<2x96xf32>
    %48 = arith.addf %47, %46 : vector<2x96xf32>
    %49 = arith.divf %47, %48 : vector<2x96xf32>
    %50 = vector.extract_strided_slice %43 {offsets = [0, 96], sizes = [2, 32], strides = [1, 1]} : vector<2x128xf32> to vector<2x32xf32>
    %51 = math.tanh %50 : vector<2x32xf32>
    %52 = vector.extract_strided_slice %49 {offsets = [0, 32], sizes = [2, 32], strides = [1, 1]} : vector<2x96xf32> to vector<2x32xf32>
    %53 = arith.mulf %52, %0 : vector<2x32xf32>
    %54 = vector.extract_strided_slice %49 {offsets = [0, 0], sizes = [2, 32], strides = [1, 1]} : vector<2x96xf32> to vector<2x32xf32>
    %55 = arith.mulf %54, %51 : vector<2x32xf32>
    %56 = arith.addf %53, %55 : vector<2x32xf32>
    %57 = vector.extract_strided_slice %49 {offsets = [0, 64], sizes = [2, 32], strides = [1, 1]} : vector<2x96xf32> to vector<2x32xf32>
    %58 = math.tanh %56 : vector<2x32xf32>
    %59 = arith.mulf %57, %58 : vector<2x32xf32>
    %c2_i32_27 = arith.constant 2 : i32
    %60 = arith.muli %c0_i32, %c2_i32_27 : i32
    %61 = arith.index_cast %60 : i32 to index
    %c0_28 = arith.constant 0 : index
    %62 = vector.load %arg20[%61, %c0_28] : memref<16x32xf32, #tpu.memory_space<vmem>>, vector<2x32xf32>
    tpu.vector_store %arg20[%61, %c0_28], %38 {strides = array<i32>} : memref<16x32xf32, #tpu.memory_space<vmem>>, vector<2x32xf32>,
    %c2_i32_29 = arith.constant 2 : i32
    %63 = arith.muli %17, %c2_i32_29 : i32
    %64 = arith.index_cast %63 : i32 to index
    %c0_30 = arith.constant 0 : index
    %65 = vector.load %arg21[%64, %c0_30] : memref<16x32xf32, #tpu.memory_space<vmem>>, vector<2x32xf32>
    tpu.vector_store %arg21[%64, %c0_30], %59 {strides = array<i32>} : memref<16x32xf32, #tpu.memory_space<vmem>>, vector<2x32xf32>,
    %c1_i32 = arith.constant 1 : i32
    %c7_i32_31 = arith.constant 7 : i32
    %66 = arith.subi %c7_i32_31, %c1_i32 : i32
    %c2_i32_32 = arith.constant 2 : i32
    %67 = arith.muli %c1_i32, %c2_i32_32 : i32
    %68 = arith.index_cast %67 : i32 to index
    %c0_33 = arith.constant 0 : index
    %69 = vector.load %arg18[%68, %c0_33] : memref<16x128xf32, #tpu.memory_space<vmem>>, vector<2x128xf32>
    %cst_34 = arith.constant dense<0.000000e+00> : vector<2x128xf32>
    %70 = tpu.matmul %38, %15, %cst_34 {dimension_numbers = #tpu.dot_dimension_numbers<[1], [0], [0], [1], [0, 0, 1, 1], [], []>} : vector<2x32xf32>, vector<32x128xf32>, vector<2x128xf32> -> vector<2x128xf32>
    %71 = arith.addf %69, %70 : vector<2x128xf32>
    %72 = vector.extract_strided_slice %71 {offsets = [0, 0], sizes = [2, 96], strides = [1, 1]} : vector<2x128xf32> to vector<2x96xf32>
    %73 = arith.negf %72 : vector<2x96xf32>
    %74 = math.exp %73 : vector<2x96xf32>
    %cst_35 = arith.constant 1.000000e+00 : f32
    %75 = vector.broadcast %cst_35 : f32 to vector<2x96xf32>
    %76 = arith.addf %75, %74 : vector<2x96xf32>
    %77 = arith.divf %75, %76 : vector<2x96xf32>
    %78 = vector.extract_strided_slice %71 {offsets = [0, 96], sizes = [2, 32], strides = [1, 1]} : vector<2x128xf32> to vector<2x32xf32>
    %79 = math.tanh %78 : vector<2x32xf32>
    %80 = vector.extract_strided_slice %77 {offsets = [0, 32], sizes = [2, 32], strides = [1, 1]} : vector<2x96xf32> to vector<2x32xf32>
    %81 = arith.mulf %80, %35 : vector<2x32xf32>
    %82 = vector.extract_strided_slice %77 {offsets = [0, 0], sizes = [2, 32], strides = [1, 1]} : vector<2x96xf32> to vector<2x32xf32>
    %83 = arith.mulf %82, %79 : vector<2x32xf32>
    %84 = arith.addf %81, %83 : vector<2x32xf32>
    %85 = vector.extract_strided_slice %77 {offsets = [0, 64], sizes = [2, 32], strides = [1, 1]} : vector<2x96xf32> to vector<2x32xf32>
    %86 = math.tanh %84 : vector<2x32xf32>
    %87 = arith.mulf %85, %86 : vector<2x32xf32>
    %c2_i32_36 = arith.constant 2 : i32
    %88 = arith.muli %66, %c2_i32_36 : i32
    %89 = arith.index_cast %88 : i32 to index
    %c0_37 = arith.constant 0 : index
    %90 = vector.load %arg19[%89, %c0_37] : memref<16x128xf32, #tpu.memory_space<vmem>>, vector<2x128xf32>
    %cst_38 = arith.constant dense<0.000000e+00> : vector<2x128xf32>
    %91 = tpu.matmul %59, %16, %cst_38 {dimension_numbers = #tpu.dot_dimension_numbers<[1], [0], [0], [1], [0, 0, 1, 1], [], []>} : vector<2x32xf32>, vector<32x128xf32>, vector<2x128xf32> -> vector<2x128xf32>
    %92 = arith.addf %90, %91 : vector<2x128xf32>
    %93 = vector.extract_strided_slice %92 {offsets = [0, 0], sizes = [2, 96], strides = [1, 1]} : vector<2x128xf32> to vector<2x96xf32>
    %94 = arith.negf %93 : vector<2x96xf32>
    %95 = math.exp %94 : vector<2x96xf32>
    %cst_39 = arith.constant 1.000000e+00 : f32
    %96 = vector.broadcast %cst_39 : f32 to vector<2x96xf32>
    %97 = arith.addf %96, %95 : vector<2x96xf32>
    %98 = arith.divf %96, %97 : vector<2x96xf32>
    %99 = vector.extract_strided_slice %92 {offsets = [0, 96], sizes = [2, 32], strides = [1, 1]} : vector<2x128xf32> to vector<2x32xf32>
    %100 = math.tanh %99 : vector<2x32xf32>
    %101 = vector.extract_strided_slice %98 {offsets = [0, 32], sizes = [2, 32], strides = [1, 1]} : vector<2x96xf32> to vector<2x32xf32>
    %102 = arith.mulf %101, %56 : vector<2x32xf32>
    %103 = vector.extract_strided_slice %98 {offsets = [0, 0], sizes = [2, 32], strides = [1, 1]} : vector<2x96xf32> to vector<2x32xf32>
    %104 = arith.mulf %103, %100 : vector<2x32xf32>
    %105 = arith.addf %102, %104 : vector<2x32xf32>
    %106 = vector.extract_strided_slice %98 {offsets = [0, 64], sizes = [2, 32], strides = [1, 1]} : vector<2x96xf32> to vector<2x32xf32>
    %107 = math.tanh %105 : vector<2x32xf32>
    %108 = arith.mulf %106, %107 : vector<2x32xf32>
    %c2_i32_40 = arith.constant 2 : i32
    %109 = arith.muli %c1_i32, %c2_i32_40 : i32
    %110 = arith.index_cast %109 : i32 to index
    %c0_41 = arith.constant 0 : index
    %111 = vector.load %arg20[%110, %c0_41] : memref<16x32xf32, #tpu.memory_space<vmem>>, vector<2x32xf32>
    tpu.vector_store %arg20[%110, %c0_41], %87 {strides = array<i32>} : memref<16x32xf32, #tpu.memory_space<vmem>>, vector<2x32xf32>,
    %c2_i32_42 = arith.constant 2 : i32
    %112 = arith.muli %66, %c2_i32_42 : i32
    %113 = arith.index_cast %112 : i32 to index
    %c0_43 = arith.constant 0 : index
    %114 = vector.load %arg21[%113, %c0_43] : memref<16x32xf32, #tpu.memory_space<vmem>>, vector<2x32xf32>
    tpu.vector_store %arg21[%113, %c0_43], %108 {strides = array<i32>} : memref<16x32xf32, #tpu.memory_space<vmem>>, vector<2x32xf32>,
    %c2_i32_44 = arith.constant 2 : i32
    %c7_i32_45 = arith.constant 7 : i32
    %115 = arith.subi %c7_i32_45, %c2_i32_44 : i32
    %c2_i32_46 = arith.constant 2 : i32
    %116 = arith.muli %c2_i32_44, %c2_i32_46 : i32
    %117 = arith.index_cast %116 : i32 to index
    %c0_47 = arith.constant 0 : index
    %118 = vector.load %arg18[%117, %c0_47] : memref<16x128xf32, #tpu.memory_space<vmem>>, vector<2x128xf32>
    %cst_48 = arith.constant dense<0.000000e+00> : vector<2x128xf32>
    %119 = tpu.matmul %87, %15, %cst_48 {dimension_numbers = #tpu.dot_dimension_numbers<[1], [0], [0], [1], [0, 0, 1, 1], [], []>} : vector<2x32xf32>, vector<32x128xf32>, vector<2x128xf32> -> vector<2x128xf32>
    %120 = arith.addf %118, %119 : vector<2x128xf32>
    %121 = vector.extract_strided_slice %120 {offsets = [0, 0], sizes = [2, 96], strides = [1, 1]} : vector<2x128xf32> to vector<2x96xf32>
    %122 = arith.negf %121 : vector<2x96xf32>
    %123 = math.exp %122 : vector<2x96xf32>
    %cst_49 = arith.constant 1.000000e+00 : f32
    %124 = vector.broadcast %cst_49 : f32 to vector<2x96xf32>
    %125 = arith.addf %124, %123 : vector<2x96xf32>
    %126 = arith.divf %124, %125 : vector<2x96xf32>
    %127 = vector.extract_strided_slice %120 {offsets = [0, 96], sizes = [2, 32], strides = [1, 1]} : vector<2x128xf32> to vector<2x32xf32>
    %128 = math.tanh %127 : vector<2x32xf32>
    %129 = vector.extract_strided_slice %126 {offsets = [0, 32], sizes = [2, 32], strides = [1, 1]} : vector<2x96xf32> to vector<2x32xf32>
    %130 = arith.mulf %129, %84 : vector<2x32xf32>
    %131 = vector.extract_strided_slice %126 {offsets = [0, 0], sizes = [2, 32], strides = [1, 1]} : vector<2x96xf32> to vector<2x32xf32>
    %132 = arith.mulf %131, %128 : vector<2x32xf32>
    %133 = arith.addf %130, %132 : vector<2x32xf32>
    %134 = vector.extract_strided_slice %126 {offsets = [0, 64], sizes = [2, 32], strides = [1, 1]} : vector<2x96xf32> to vector<2x32xf32>
    %135 = math.tanh %133 : vector<2x32xf32>
    %136 = arith.mulf %134, %135 : vector<2x32xf32>
    %c2_i32_50 = arith.constant 2 : i32
    %137 = arith.muli %115, %c2_i32_50 : i32
    %138 = arith.index_cast %137 : i32 to index
    %c0_51 = arith.constant 0 : index
    %139 = vector.load %arg19[%138, %c0_51] : memref<16x128xf32, #tpu.memory_space<vmem>>, vector<2x128xf32>
    %cst_52 = arith.constant dense<0.000000e+00> : vector<2x128xf32>
    %140 = tpu.matmul %108, %16, %cst_52 {dimension_numbers = #tpu.dot_dimension_numbers<[1], [0], [0], [1], [0, 0, 1, 1], [], []>} : vector<2x32xf32>, vector<32x128xf32>, vector<2x128xf32> -> vector<2x128xf32>
    %141 = arith.addf %139, %140 : vector<2x128xf32>
    %142 = vector.extract_strided_slice %141 {offsets = [0, 0], sizes = [2, 96], strides = [1, 1]} : vector<2x128xf32> to vector<2x96xf32>
    %143 = arith.negf %142 : vector<2x96xf32>
    %144 = math.exp %143 : vector<2x96xf32>
    %cst_53 = arith.constant 1.000000e+00 : f32
    %145 = vector.broadcast %cst_53 : f32 to vector<2x96xf32>
    %146 = arith.addf %145, %144 : vector<2x96xf32>
    %147 = arith.divf %145, %146 : vector<2x96xf32>
    %148 = vector.extract_strided_slice %141 {offsets = [0, 96], sizes = [2, 32], strides = [1, 1]} : vector<2x128xf32> to vector<2x32xf32>
    %149 = math.tanh %148 : vector<2x32xf32>
    %150 = vector.extract_strided_slice %147 {offsets = [0, 32], sizes = [2, 32], strides = [1, 1]} : vector<2x96xf32> to vector<2x32xf32>
    %151 = arith.mulf %150, %105 : vector<2x32xf32>
    %152 = vector.extract_strided_slice %147 {offsets = [0, 0], sizes = [2, 32], strides = [1, 1]} : vector<2x96xf32> to vector<2x32xf32>
    %153 = arith.mulf %152, %149 : vector<2x32xf32>
    %154 = arith.addf %151, %153 : vector<2x32xf32>
    %155 = vector.extract_strided_slice %147 {offsets = [0, 64], sizes = [2, 32], strides = [1, 1]} : vector<2x96xf32> to vector<2x32xf32>
    %156 = math.tanh %154 : vector<2x32xf32>
    %157 = arith.mulf %155, %156 : vector<2x32xf32>
    %c2_i32_54 = arith.constant 2 : i32
    %158 = arith.muli %c2_i32_44, %c2_i32_54 : i32
    %159 = arith.index_cast %158 : i32 to index
    %c0_55 = arith.constant 0 : index
    %160 = vector.load %arg20[%159, %c0_55] : memref<16x32xf32, #tpu.memory_space<vmem>>, vector<2x32xf32>
    tpu.vector_store %arg20[%159, %c0_55], %136 {strides = array<i32>} : memref<16x32xf32, #tpu.memory_space<vmem>>, vector<2x32xf32>,
    %c2_i32_56 = arith.constant 2 : i32
    %161 = arith.muli %115, %c2_i32_56 : i32
    %162 = arith.index_cast %161 : i32 to index
    %c0_57 = arith.constant 0 : index
    %163 = vector.load %arg21[%162, %c0_57] : memref<16x32xf32, #tpu.memory_space<vmem>>, vector<2x32xf32>
    tpu.vector_store %arg21[%162, %c0_57], %157 {strides = array<i32>} : memref<16x32xf32, #tpu.memory_space<vmem>>, vector<2x32xf32>,
    %c3_i32 = arith.constant 3 : i32
    %c7_i32_58 = arith.constant 7 : i32
    %164 = arith.subi %c7_i32_58, %c3_i32 : i32
    %c2_i32_59 = arith.constant 2 : i32
    %165 = arith.muli %c3_i32, %c2_i32_59 : i32
    %166 = arith.index_cast %165 : i32 to index
    %c0_60 = arith.constant 0 : index
    %167 = vector.load %arg18[%166, %c0_60] : memref<16x128xf32, #tpu.memory_space<vmem>>, vector<2x128xf32>
    %cst_61 = arith.constant dense<0.000000e+00> : vector<2x128xf32>
    %168 = tpu.matmul %136, %15, %cst_61 {dimension_numbers = #tpu.dot_dimension_numbers<[1], [0], [0], [1], [0, 0, 1, 1], [], []>} : vector<2x32xf32>, vector<32x128xf32>, vector<2x128xf32> -> vector<2x128xf32>
    %169 = arith.addf %167, %168 : vector<2x128xf32>
    %170 = vector.extract_strided_slice %169 {offsets = [0, 0], sizes = [2, 96], strides = [1, 1]} : vector<2x128xf32> to vector<2x96xf32>
    %171 = arith.negf %170 : vector<2x96xf32>
    %172 = math.exp %171 : vector<2x96xf32>
    %cst_62 = arith.constant 1.000000e+00 : f32
    %173 = vector.broadcast %cst_62 : f32 to vector<2x96xf32>
    %174 = arith.addf %173, %172 : vector<2x96xf32>
    %175 = arith.divf %173, %174 : vector<2x96xf32>
    %176 = vector.extract_strided_slice %169 {offsets = [0, 96], sizes = [2, 32], strides = [1, 1]} : vector<2x128xf32> to vector<2x32xf32>
    %177 = math.tanh %176 : vector<2x32xf32>
    %178 = vector.extract_strided_slice %175 {offsets = [0, 32], sizes = [2, 32], strides = [1, 1]} : vector<2x96xf32> to vector<2x32xf32>
    %179 = arith.mulf %178, %133 : vector<2x32xf32>
    %180 = vector.extract_strided_slice %175 {offsets = [0, 0], sizes = [2, 32], strides = [1, 1]} : vector<2x96xf32> to vector<2x32xf32>
    %181 = arith.mulf %180, %177 : vector<2x32xf32>
    %182 = arith.addf %179, %181 : vector<2x32xf32>
    %183 = vector.extract_strided_slice %175 {offsets = [0, 64], sizes = [2, 32], strides = [1, 1]} : vector<2x96xf32> to vector<2x32xf32>
    %184 = math.tanh %182 : vector<2x32xf32>
    %185 = arith.mulf %183, %184 : vector<2x32xf32>
    %c2_i32_63 = arith.constant 2 : i32
    %186 = arith.muli %164, %c2_i32_63 : i32
    %187 = arith.index_cast %186 : i32 to index
    %c0_64 = arith.constant 0 : index
    %188 = vector.load %arg19[%187, %c0_64] : memref<16x128xf32, #tpu.memory_space<vmem>>, vector<2x128xf32>
    %cst_65 = arith.constant dense<0.000000e+00> : vector<2x128xf32>
    %189 = tpu.matmul %157, %16, %cst_65 {dimension_numbers = #tpu.dot_dimension_numbers<[1], [0], [0], [1], [0, 0, 1, 1], [], []>} : vector<2x32xf32>, vector<32x128xf32>, vector<2x128xf32> -> vector<2x128xf32>
    %190 = arith.addf %188, %189 : vector<2x128xf32>
    %191 = vector.extract_strided_slice %190 {offsets = [0, 0], sizes = [2, 96], strides = [1, 1]} : vector<2x128xf32> to vector<2x96xf32>
    %192 = arith.negf %191 : vector<2x96xf32>
    %193 = math.exp %192 : vector<2x96xf32>
    %cst_66 = arith.constant 1.000000e+00 : f32
    %194 = vector.broadcast %cst_66 : f32 to vector<2x96xf32>
    %195 = arith.addf %194, %193 : vector<2x96xf32>
    %196 = arith.divf %194, %195 : vector<2x96xf32>
    %197 = vector.extract_strided_slice %190 {offsets = [0, 96], sizes = [2, 32], strides = [1, 1]} : vector<2x128xf32> to vector<2x32xf32>
    %198 = math.tanh %197 : vector<2x32xf32>
    %199 = vector.extract_strided_slice %196 {offsets = [0, 32], sizes = [2, 32], strides = [1, 1]} : vector<2x96xf32> to vector<2x32xf32>
    %200 = arith.mulf %199, %154 : vector<2x32xf32>
    %201 = vector.extract_strided_slice %196 {offsets = [0, 0], sizes = [2, 32], strides = [1, 1]} : vector<2x96xf32> to vector<2x32xf32>
    %202 = arith.mulf %201, %198 : vector<2x32xf32>
    %203 = arith.addf %200, %202 : vector<2x32xf32>
    %204 = vector.extract_strided_slice %196 {offsets = [0, 64], sizes = [2, 32], strides = [1, 1]} : vector<2x96xf32> to vector<2x32xf32>
    %205 = math.tanh %203 : vector<2x32xf32>
    %206 = arith.mulf %204, %205 : vector<2x32xf32>
    %c2_i32_67 = arith.constant 2 : i32
    %207 = arith.muli %c3_i32, %c2_i32_67 : i32
    %208 = arith.index_cast %207 : i32 to index
    %c0_68 = arith.constant 0 : index
    %209 = vector.load %arg20[%208, %c0_68] : memref<16x32xf32, #tpu.memory_space<vmem>>, vector<2x32xf32>
    tpu.vector_store %arg20[%208, %c0_68], %185 {strides = array<i32>} : memref<16x32xf32, #tpu.memory_space<vmem>>, vector<2x32xf32>,
    %c2_i32_69 = arith.constant 2 : i32
    %210 = arith.muli %164, %c2_i32_69 : i32
    %211 = arith.index_cast %210 : i32 to index
    %c0_70 = arith.constant 0 : index
    %212 = vector.load %arg21[%211, %c0_70] : memref<16x32xf32, #tpu.memory_space<vmem>>, vector<2x32xf32>
    tpu.vector_store %arg21[%211, %c0_70], %206 {strides = array<i32>} : memref<16x32xf32, #tpu.memory_space<vmem>>, vector<2x32xf32>,
    %c4_i32 = arith.constant 4 : i32
    %c7_i32_71 = arith.constant 7 : i32
    %213 = arith.subi %c7_i32_71, %c4_i32 : i32
    %c2_i32_72 = arith.constant 2 : i32
    %214 = arith.muli %c4_i32, %c2_i32_72 : i32
    %215 = arith.index_cast %214 : i32 to index
    %c0_73 = arith.constant 0 : index
    %216 = vector.load %arg18[%215, %c0_73] : memref<16x128xf32, #tpu.memory_space<vmem>>, vector<2x128xf32>
    %cst_74 = arith.constant dense<0.000000e+00> : vector<2x128xf32>
    %217 = tpu.matmul %185, %15, %cst_74 {dimension_numbers = #tpu.dot_dimension_numbers<[1], [0], [0], [1], [0, 0, 1, 1], [], []>} : vector<2x32xf32>, vector<32x128xf32>, vector<2x128xf32> -> vector<2x128xf32>
    %218 = arith.addf %216, %217 : vector<2x128xf32>
    %219 = vector.extract_strided_slice %218 {offsets = [0, 0], sizes = [2, 96], strides = [1, 1]} : vector<2x128xf32> to vector<2x96xf32>
    %220 = arith.negf %219 : vector<2x96xf32>
    %221 = math.exp %220 : vector<2x96xf32>
    %cst_75 = arith.constant 1.000000e+00 : f32
    %222 = vector.broadcast %cst_75 : f32 to vector<2x96xf32>
    %223 = arith.addf %222, %221 : vector<2x96xf32>
    %224 = arith.divf %222, %223 : vector<2x96xf32>
    %225 = vector.extract_strided_slice %218 {offsets = [0, 96], sizes = [2, 32], strides = [1, 1]} : vector<2x128xf32> to vector<2x32xf32>
    %226 = math.tanh %225 : vector<2x32xf32>
    %227 = vector.extract_strided_slice %224 {offsets = [0, 32], sizes = [2, 32], strides = [1, 1]} : vector<2x96xf32> to vector<2x32xf32>
    %228 = arith.mulf %227, %182 : vector<2x32xf32>
    %229 = vector.extract_strided_slice %224 {offsets = [0, 0], sizes = [2, 32], strides = [1, 1]} : vector<2x96xf32> to vector<2x32xf32>
    %230 = arith.mulf %229, %226 : vector<2x32xf32>
    %231 = arith.addf %228, %230 : vector<2x32xf32>
    %232 = vector.extract_strided_slice %224 {offsets = [0, 64], sizes = [2, 32], strides = [1, 1]} : vector<2x96xf32> to vector<2x32xf32>
    %233 = math.tanh %231 : vector<2x32xf32>
    %234 = arith.mulf %232, %233 : vector<2x32xf32>
    %c2_i32_76 = arith.constant 2 : i32
    %235 = arith.muli %213, %c2_i32_76 : i32
    %236 = arith.index_cast %235 : i32 to index
    %c0_77 = arith.constant 0 : index
    %237 = vector.load %arg19[%236, %c0_77] : memref<16x128xf32, #tpu.memory_space<vmem>>, vector<2x128xf32>
    %cst_78 = arith.constant dense<0.000000e+00> : vector<2x128xf32>
    %238 = tpu.matmul %206, %16, %cst_78 {dimension_numbers = #tpu.dot_dimension_numbers<[1], [0], [0], [1], [0, 0, 1, 1], [], []>} : vector<2x32xf32>, vector<32x128xf32>, vector<2x128xf32> -> vector<2x128xf32>
    %239 = arith.addf %237, %238 : vector<2x128xf32>
    %240 = vector.extract_strided_slice %239 {offsets = [0, 0], sizes = [2, 96], strides = [1, 1]} : vector<2x128xf32> to vector<2x96xf32>
    %241 = arith.negf %240 : vector<2x96xf32>
    %242 = math.exp %241 : vector<2x96xf32>
    %cst_79 = arith.constant 1.000000e+00 : f32
    %243 = vector.broadcast %cst_79 : f32 to vector<2x96xf32>
    %244 = arith.addf %243, %242 : vector<2x96xf32>
    %245 = arith.divf %243, %244 : vector<2x96xf32>
    %246 = vector.extract_strided_slice %239 {offsets = [0, 96], sizes = [2, 32], strides = [1, 1]} : vector<2x128xf32> to vector<2x32xf32>
    %247 = math.tanh %246 : vector<2x32xf32>
    %248 = vector.extract_strided_slice %245 {offsets = [0, 32], sizes = [2, 32], strides = [1, 1]} : vector<2x96xf32> to vector<2x32xf32>
    %249 = arith.mulf %248, %203 : vector<2x32xf32>
    %250 = vector.extract_strided_slice %245 {offsets = [0, 0], sizes = [2, 32], strides = [1, 1]} : vector<2x96xf32> to vector<2x32xf32>
    %251 = arith.mulf %250, %247 : vector<2x32xf32>
    %252 = arith.addf %249, %251 : vector<2x32xf32>
    %253 = vector.extract_strided_slice %245 {offsets = [0, 64], sizes = [2, 32], strides = [1, 1]} : vector<2x96xf32> to vector<2x32xf32>
    %254 = math.tanh %252 : vector<2x32xf32>
    %255 = arith.mulf %253, %254 : vector<2x32xf32>
    %c2_i32_80 = arith.constant 2 : i32
    %256 = arith.muli %c4_i32, %c2_i32_80 : i32
    %257 = arith.index_cast %256 : i32 to index
    %c0_81 = arith.constant 0 : index
    %258 = vector.load %arg20[%257, %c0_81] : memref<16x32xf32, #tpu.memory_space<vmem>>, vector<2x32xf32>
    tpu.vector_store %arg20[%257, %c0_81], %234 {strides = array<i32>} : memref<16x32xf32, #tpu.memory_space<vmem>>, vector<2x32xf32>,
    %c2_i32_82 = arith.constant 2 : i32
    %259 = arith.muli %213, %c2_i32_82 : i32
    %260 = arith.index_cast %259 : i32 to index
    %c0_83 = arith.constant 0 : index
    %261 = vector.load %arg21[%260, %c0_83] : memref<16x32xf32, #tpu.memory_space<vmem>>, vector<2x32xf32>
    tpu.vector_store %arg21[%260, %c0_83], %255 {strides = array<i32>} : memref<16x32xf32, #tpu.memory_space<vmem>>, vector<2x32xf32>,
    %c5_i32 = arith.constant 5 : i32
    %c7_i32_84 = arith.constant 7 : i32
    %262 = arith.subi %c7_i32_84, %c5_i32 : i32
    %c2_i32_85 = arith.constant 2 : i32
    %263 = arith.muli %c5_i32, %c2_i32_85 : i32
    %264 = arith.index_cast %263 : i32 to index
    %c0_86 = arith.constant 0 : index
    %265 = vector.load %arg18[%264, %c0_86] : memref<16x128xf32, #tpu.memory_space<vmem>>, vector<2x128xf32>
    %cst_87 = arith.constant dense<0.000000e+00> : vector<2x128xf32>
    %266 = tpu.matmul %234, %15, %cst_87 {dimension_numbers = #tpu.dot_dimension_numbers<[1], [0], [0], [1], [0, 0, 1, 1], [], []>} : vector<2x32xf32>, vector<32x128xf32>, vector<2x128xf32> -> vector<2x128xf32>
    %267 = arith.addf %265, %266 : vector<2x128xf32>
    %268 = vector.extract_strided_slice %267 {offsets = [0, 0], sizes = [2, 96], strides = [1, 1]} : vector<2x128xf32> to vector<2x96xf32>
    %269 = arith.negf %268 : vector<2x96xf32>
    %270 = math.exp %269 : vector<2x96xf32>
    %cst_88 = arith.constant 1.000000e+00 : f32
    %271 = vector.broadcast %cst_88 : f32 to vector<2x96xf32>
    %272 = arith.addf %271, %270 : vector<2x96xf32>
    %273 = arith.divf %271, %272 : vector<2x96xf32>
    %274 = vector.extract_strided_slice %267 {offsets = [0, 96], sizes = [2, 32], strides = [1, 1]} : vector<2x128xf32> to vector<2x32xf32>
    %275 = math.tanh %274 : vector<2x32xf32>
    %276 = vector.extract_strided_slice %273 {offsets = [0, 32], sizes = [2, 32], strides = [1, 1]} : vector<2x96xf32> to vector<2x32xf32>
    %277 = arith.mulf %276, %231 : vector<2x32xf32>
    %278 = vector.extract_strided_slice %273 {offsets = [0, 0], sizes = [2, 32], strides = [1, 1]} : vector<2x96xf32> to vector<2x32xf32>
    %279 = arith.mulf %278, %275 : vector<2x32xf32>
    %280 = arith.addf %277, %279 : vector<2x32xf32>
    %281 = vector.extract_strided_slice %273 {offsets = [0, 64], sizes = [2, 32], strides = [1, 1]} : vector<2x96xf32> to vector<2x32xf32>
    %282 = math.tanh %280 : vector<2x32xf32>
    %283 = arith.mulf %281, %282 : vector<2x32xf32>
    %c2_i32_89 = arith.constant 2 : i32
    %284 = arith.muli %262, %c2_i32_89 : i32
    %285 = arith.index_cast %284 : i32 to index
    %c0_90 = arith.constant 0 : index
    %286 = vector.load %arg19[%285, %c0_90] : memref<16x128xf32, #tpu.memory_space<vmem>>, vector<2x128xf32>
    %cst_91 = arith.constant dense<0.000000e+00> : vector<2x128xf32>
    %287 = tpu.matmul %255, %16, %cst_91 {dimension_numbers = #tpu.dot_dimension_numbers<[1], [0], [0], [1], [0, 0, 1, 1], [], []>} : vector<2x32xf32>, vector<32x128xf32>, vector<2x128xf32> -> vector<2x128xf32>
    %288 = arith.addf %286, %287 : vector<2x128xf32>
    %289 = vector.extract_strided_slice %288 {offsets = [0, 0], sizes = [2, 96], strides = [1, 1]} : vector<2x128xf32> to vector<2x96xf32>
    %290 = arith.negf %289 : vector<2x96xf32>
    %291 = math.exp %290 : vector<2x96xf32>
    %cst_92 = arith.constant 1.000000e+00 : f32
    %292 = vector.broadcast %cst_92 : f32 to vector<2x96xf32>
    %293 = arith.addf %292, %291 : vector<2x96xf32>
    %294 = arith.divf %292, %293 : vector<2x96xf32>
    %295 = vector.extract_strided_slice %288 {offsets = [0, 96], sizes = [2, 32], strides = [1, 1]} : vector<2x128xf32> to vector<2x32xf32>
    %296 = math.tanh %295 : vector<2x32xf32>
    %297 = vector.extract_strided_slice %294 {offsets = [0, 32], sizes = [2, 32], strides = [1, 1]} : vector<2x96xf32> to vector<2x32xf32>
    %298 = arith.mulf %297, %252 : vector<2x32xf32>
    %299 = vector.extract_strided_slice %294 {offsets = [0, 0], sizes = [2, 32], strides = [1, 1]} : vector<2x96xf32> to vector<2x32xf32>
    %300 = arith.mulf %299, %296 : vector<2x32xf32>
    %301 = arith.addf %298, %300 : vector<2x32xf32>
    %302 = vector.extract_strided_slice %294 {offsets = [0, 64], sizes = [2, 32], strides = [1, 1]} : vector<2x96xf32> to vector<2x32xf32>
    %303 = math.tanh %301 : vector<2x32xf32>
    %304 = arith.mulf %302, %303 : vector<2x32xf32>
    %c2_i32_93 = arith.constant 2 : i32
    %305 = arith.muli %c5_i32, %c2_i32_93 : i32
    %306 = arith.index_cast %305 : i32 to index
    %c0_94 = arith.constant 0 : index
    %307 = vector.load %arg20[%306, %c0_94] : memref<16x32xf32, #tpu.memory_space<vmem>>, vector<2x32xf32>
    tpu.vector_store %arg20[%306, %c0_94], %283 {strides = array<i32>} : memref<16x32xf32, #tpu.memory_space<vmem>>, vector<2x32xf32>,
    %c2_i32_95 = arith.constant 2 : i32
    %308 = arith.muli %262, %c2_i32_95 : i32
    %309 = arith.index_cast %308 : i32 to index
    %c0_96 = arith.constant 0 : index
    %310 = vector.load %arg21[%309, %c0_96] : memref<16x32xf32, #tpu.memory_space<vmem>>, vector<2x32xf32>
    tpu.vector_store %arg21[%309, %c0_96], %304 {strides = array<i32>} : memref<16x32xf32, #tpu.memory_space<vmem>>, vector<2x32xf32>,
    %c6_i32 = arith.constant 6 : i32
    %c7_i32_97 = arith.constant 7 : i32
    %311 = arith.subi %c7_i32_97, %c6_i32 : i32
    %c2_i32_98 = arith.constant 2 : i32
    %312 = arith.muli %c6_i32, %c2_i32_98 : i32
    %313 = arith.index_cast %312 : i32 to index
    %c0_99 = arith.constant 0 : index
    %314 = vector.load %arg18[%313, %c0_99] : memref<16x128xf32, #tpu.memory_space<vmem>>, vector<2x128xf32>
    %cst_100 = arith.constant dense<0.000000e+00> : vector<2x128xf32>
    %315 = tpu.matmul %283, %15, %cst_100 {dimension_numbers = #tpu.dot_dimension_numbers<[1], [0], [0], [1], [0, 0, 1, 1], [], []>} : vector<2x32xf32>, vector<32x128xf32>, vector<2x128xf32> -> vector<2x128xf32>
    %316 = arith.addf %314, %315 : vector<2x128xf32>
    %317 = vector.extract_strided_slice %316 {offsets = [0, 0], sizes = [2, 96], strides = [1, 1]} : vector<2x128xf32> to vector<2x96xf32>
    %318 = arith.negf %317 : vector<2x96xf32>
    %319 = math.exp %318 : vector<2x96xf32>
    %cst_101 = arith.constant 1.000000e+00 : f32
    %320 = vector.broadcast %cst_101 : f32 to vector<2x96xf32>
    %321 = arith.addf %320, %319 : vector<2x96xf32>
    %322 = arith.divf %320, %321 : vector<2x96xf32>
    %323 = vector.extract_strided_slice %316 {offsets = [0, 96], sizes = [2, 32], strides = [1, 1]} : vector<2x128xf32> to vector<2x32xf32>
    %324 = math.tanh %323 : vector<2x32xf32>
    %325 = vector.extract_strided_slice %322 {offsets = [0, 32], sizes = [2, 32], strides = [1, 1]} : vector<2x96xf32> to vector<2x32xf32>
    %326 = arith.mulf %325, %280 : vector<2x32xf32>
    %327 = vector.extract_strided_slice %322 {offsets = [0, 0], sizes = [2, 32], strides = [1, 1]} : vector<2x96xf32> to vector<2x32xf32>
    %328 = arith.mulf %327, %324 : vector<2x32xf32>
    %329 = arith.addf %326, %328 : vector<2x32xf32>
    %330 = vector.extract_strided_slice %322 {offsets = [0, 64], sizes = [2, 32], strides = [1, 1]} : vector<2x96xf32> to vector<2x32xf32>
    %331 = math.tanh %329 : vector<2x32xf32>
    %332 = arith.mulf %330, %331 : vector<2x32xf32>
    %c2_i32_102 = arith.constant 2 : i32
    %333 = arith.muli %311, %c2_i32_102 : i32
    %334 = arith.index_cast %333 : i32 to index
    %c0_103 = arith.constant 0 : index
    %335 = vector.load %arg19[%334, %c0_103] : memref<16x128xf32, #tpu.memory_space<vmem>>, vector<2x128xf32>
    %cst_104 = arith.constant dense<0.000000e+00> : vector<2x128xf32>
    %336 = tpu.matmul %304, %16, %cst_104 {dimension_numbers = #tpu.dot_dimension_numbers<[1], [0], [0], [1], [0, 0, 1, 1], [], []>} : vector<2x32xf32>, vector<32x128xf32>, vector<2x128xf32> -> vector<2x128xf32>
    %337 = arith.addf %335, %336 : vector<2x128xf32>
    %338 = vector.extract_strided_slice %337 {offsets = [0, 0], sizes = [2, 96], strides = [1, 1]} : vector<2x128xf32> to vector<2x96xf32>
    %339 = arith.negf %338 : vector<2x96xf32>
    %340 = math.exp %339 : vector<2x96xf32>
    %cst_105 = arith.constant 1.000000e+00 : f32
    %341 = vector.broadcast %cst_105 : f32 to vector<2x96xf32>
    %342 = arith.addf %341, %340 : vector<2x96xf32>
    %343 = arith.divf %341, %342 : vector<2x96xf32>
    %344 = vector.extract_strided_slice %337 {offsets = [0, 96], sizes = [2, 32], strides = [1, 1]} : vector<2x128xf32> to vector<2x32xf32>
    %345 = math.tanh %344 : vector<2x32xf32>
    %346 = vector.extract_strided_slice %343 {offsets = [0, 32], sizes = [2, 32], strides = [1, 1]} : vector<2x96xf32> to vector<2x32xf32>
    %347 = arith.mulf %346, %301 : vector<2x32xf32>
    %348 = vector.extract_strided_slice %343 {offsets = [0, 0], sizes = [2, 32], strides = [1, 1]} : vector<2x96xf32> to vector<2x32xf32>
    %349 = arith.mulf %348, %345 : vector<2x32xf32>
    %350 = arith.addf %347, %349 : vector<2x32xf32>
    %351 = vector.extract_strided_slice %343 {offsets = [0, 64], sizes = [2, 32], strides = [1, 1]} : vector<2x96xf32> to vector<2x32xf32>
    %352 = math.tanh %350 : vector<2x32xf32>
    %353 = arith.mulf %351, %352 : vector<2x32xf32>
    %c2_i32_106 = arith.constant 2 : i32
    %354 = arith.muli %c6_i32, %c2_i32_106 : i32
    %355 = arith.index_cast %354 : i32 to index
    %c0_107 = arith.constant 0 : index
    %356 = vector.load %arg20[%355, %c0_107] : memref<16x32xf32, #tpu.memory_space<vmem>>, vector<2x32xf32>
    tpu.vector_store %arg20[%355, %c0_107], %332 {strides = array<i32>} : memref<16x32xf32, #tpu.memory_space<vmem>>, vector<2x32xf32>,
    %c2_i32_108 = arith.constant 2 : i32
    %357 = arith.muli %311, %c2_i32_108 : i32
    %358 = arith.index_cast %357 : i32 to index
    %c0_109 = arith.constant 0 : index
    %359 = vector.load %arg21[%358, %c0_109] : memref<16x32xf32, #tpu.memory_space<vmem>>, vector<2x32xf32>
    tpu.vector_store %arg21[%358, %c0_109], %353 {strides = array<i32>} : memref<16x32xf32, #tpu.memory_space<vmem>>, vector<2x32xf32>,
    %c7_i32_110 = arith.constant 7 : i32
    %c7_i32_111 = arith.constant 7 : i32
    %360 = arith.subi %c7_i32_111, %c7_i32_110 : i32
    %c2_i32_112 = arith.constant 2 : i32
    %361 = arith.muli %c7_i32_110, %c2_i32_112 : i32
    %362 = arith.index_cast %361 : i32 to index
    %c0_113 = arith.constant 0 : index
    %363 = vector.load %arg18[%362, %c0_113] : memref<16x128xf32, #tpu.memory_space<vmem>>, vector<2x128xf32>
    %cst_114 = arith.constant dense<0.000000e+00> : vector<2x128xf32>
    %364 = tpu.matmul %332, %15, %cst_114 {dimension_numbers = #tpu.dot_dimension_numbers<[1], [0], [0], [1], [0, 0, 1, 1], [], []>} : vector<2x32xf32>, vector<32x128xf32>, vector<2x128xf32> -> vector<2x128xf32>
    %365 = arith.addf %363, %364 : vector<2x128xf32>
    %366 = vector.extract_strided_slice %365 {offsets = [0, 0], sizes = [2, 96], strides = [1, 1]} : vector<2x128xf32> to vector<2x96xf32>
    %367 = arith.negf %366 : vector<2x96xf32>
    %368 = math.exp %367 : vector<2x96xf32>
    %cst_115 = arith.constant 1.000000e+00 : f32
    %369 = vector.broadcast %cst_115 : f32 to vector<2x96xf32>
    %370 = arith.addf %369, %368 : vector<2x96xf32>
    %371 = arith.divf %369, %370 : vector<2x96xf32>
    %372 = vector.extract_strided_slice %365 {offsets = [0, 96], sizes = [2, 32], strides = [1, 1]} : vector<2x128xf32> to vector<2x32xf32>
    %373 = math.tanh %372 : vector<2x32xf32>
    %374 = vector.extract_strided_slice %371 {offsets = [0, 32], sizes = [2, 32], strides = [1, 1]} : vector<2x96xf32> to vector<2x32xf32>
    %375 = arith.mulf %374, %329 : vector<2x32xf32>
    %376 = vector.extract_strided_slice %371 {offsets = [0, 0], sizes = [2, 32], strides = [1, 1]} : vector<2x96xf32> to vector<2x32xf32>
    %377 = arith.mulf %376, %373 : vector<2x32xf32>
    %378 = arith.addf %375, %377 : vector<2x32xf32>
    %379 = vector.extract_strided_slice %371 {offsets = [0, 64], sizes = [2, 32], strides = [1, 1]} : vector<2x96xf32> to vector<2x32xf32>
    %380 = math.tanh %378 : vector<2x32xf32>
    %381 = arith.mulf %379, %380 : vector<2x32xf32>
    %c2_i32_116 = arith.constant 2 : i32
    %382 = arith.muli %360, %c2_i32_116 : i32
    %383 = arith.index_cast %382 : i32 to index
    %c0_117 = arith.constant 0 : index
    %384 = vector.load %arg19[%383, %c0_117] : memref<16x128xf32, #tpu.memory_space<vmem>>, vector<2x128xf32>
    %cst_118 = arith.constant dense<0.000000e+00> : vector<2x128xf32>
    %385 = tpu.matmul %353, %16, %cst_118 {dimension_numbers = #tpu.dot_dimension_numbers<[1], [0], [0], [1], [0, 0, 1, 1], [], []>} : vector<2x32xf32>, vector<32x128xf32>, vector<2x128xf32> -> vector<2x128xf32>
    %386 = arith.addf %384, %385 : vector<2x128xf32>
    %387 = vector.extract_strided_slice %386 {offsets = [0, 0], sizes = [2, 96], strides = [1, 1]} : vector<2x128xf32> to vector<2x96xf32>
    %388 = arith.negf %387 : vector<2x96xf32>
    %389 = math.exp %388 : vector<2x96xf32>
    %cst_119 = arith.constant 1.000000e+00 : f32
    %390 = vector.broadcast %cst_119 : f32 to vector<2x96xf32>
    %391 = arith.addf %390, %389 : vector<2x96xf32>
    %392 = arith.divf %390, %391 : vector<2x96xf32>
    %393 = vector.extract_strided_slice %386 {offsets = [0, 96], sizes = [2, 32], strides = [1, 1]} : vector<2x128xf32> to vector<2x32xf32>
    %394 = math.tanh %393 : vector<2x32xf32>
    %395 = vector.extract_strided_slice %392 {offsets = [0, 32], sizes = [2, 32], strides = [1, 1]} : vector<2x96xf32> to vector<2x32xf32>
    %396 = arith.mulf %395, %350 : vector<2x32xf32>
    %397 = vector.extract_strided_slice %392 {offsets = [0, 0], sizes = [2, 32], strides = [1, 1]} : vector<2x96xf32> to vector<2x32xf32>
    %398 = arith.mulf %397, %394 : vector<2x32xf32>
    %399 = arith.addf %396, %398 : vector<2x32xf32>
    %400 = vector.extract_strided_slice %392 {offsets = [0, 64], sizes = [2, 32], strides = [1, 1]} : vector<2x96xf32> to vector<2x32xf32>
    %401 = math.tanh %399 : vector<2x32xf32>
    %402 = arith.mulf %400, %401 : vector<2x32xf32>
    %c2_i32_120 = arith.constant 2 : i32
    %403 = arith.muli %c7_i32_110, %c2_i32_120 : i32
    %404 = arith.index_cast %403 : i32 to index
    %c0_121 = arith.constant 0 : index
    %405 = vector.load %arg20[%404, %c0_121] : memref<16x32xf32, #tpu.memory_space<vmem>>, vector<2x32xf32>
    tpu.vector_store %arg20[%404, %c0_121], %381 {strides = array<i32>} : memref<16x32xf32, #tpu.memory_space<vmem>>, vector<2x32xf32>,
    %c2_i32_122 = arith.constant 2 : i32
    %406 = arith.muli %360, %c2_i32_122 : i32
    %407 = arith.index_cast %406 : i32 to index
    %c0_123 = arith.constant 0 : index
    %408 = vector.load %arg21[%407, %c0_123] : memref<16x32xf32, #tpu.memory_space<vmem>>, vector<2x32xf32>
    tpu.vector_store %arg21[%407, %c0_123], %402 {strides = array<i32>} : memref<16x32xf32, #tpu.memory_space<vmem>>, vector<2x32xf32>,
    %c8_i32 = arith.constant 8 : i32
    %c0_124 = arith.constant 0 : index
    %c0_125 = arith.constant 0 : index
    %409 = vector.load %arg20[%c0_124, %c0_125] : memref<16x32xf32, #tpu.memory_space<vmem>>, vector<16x32xf32>
    %c0_126 = arith.constant 0 : index
    %c0_127 = arith.constant 0 : index
    %410 = vector.load %arg21[%c0_126, %c0_127] : memref<16x32xf32, #tpu.memory_space<vmem>>, vector<16x32xf32>
    %c0_128 = arith.constant 0 : index
    %c0_129 = arith.constant 0 : index
    %411 = vector.load %arg7[%c0_128, %c0_129] : memref<64x128xf32, #tpu.memory_space<vmem>>, vector<32x128xf32>
    %cst_130 = arith.constant dense<0.000000e+00> : vector<16x128xf32>
    %412 = tpu.matmul %409, %411, %cst_130 {dimension_numbers = #tpu.dot_dimension_numbers<[1], [0], [0], [1], [0, 0, 1, 1], [], []>} : vector<16x32xf32>, vector<32x128xf32>, vector<16x128xf32> -> vector<16x128xf32>
    %c32 = arith.constant 32 : index
    %c0_131 = arith.constant 0 : index
    %413 = vector.load %arg7[%c32, %c0_131] : memref<64x128xf32, #tpu.memory_space<vmem>>, vector<32x128xf32>
    %cst_132 = arith.constant dense<0.000000e+00> : vector<16x128xf32>
    %414 = tpu.matmul %410, %413, %cst_132 {dimension_numbers = #tpu.dot_dimension_numbers<[1], [0], [0], [1], [0, 0, 1, 1], [], []>} : vector<16x32xf32>, vector<32x128xf32>, vector<16x128xf32> -> vector<16x128xf32>
    %415 = arith.addf %412, %414 : vector<16x128xf32>
    %c0_133 = arith.constant 0 : index
    %c0_134 = arith.constant 0 : index
    %416 = vector.load %arg11[%c0_133, %c0_134] : memref<1x128xf32, #tpu.memory_space<vmem>>, vector<1x128xf32>
    %417 = vector.broadcast %416 : vector<1x128xf32> to vector<16x128xf32>
    %418 = arith.addf %415, %417 : vector<16x128xf32>
    %c0_135 = arith.constant 0 : index
    %c0_136 = arith.constant 0 : index
    %419 = vector.load %arg18[%c0_135, %c0_136] : memref<16x128xf32, #tpu.memory_space<vmem>>, vector<16x128xf32>
    tpu.vector_store %arg18[%c0_135, %c0_136], %418 {strides = array<i32>} : memref<16x128xf32, #tpu.memory_space<vmem>>, vector<16x128xf32>,
    %c0_137 = arith.constant 0 : index
    %c0_138 = arith.constant 0 : index
    %420 = vector.load %arg8[%c0_137, %c0_138] : memref<64x128xf32, #tpu.memory_space<vmem>>, vector<32x128xf32>
    %cst_139 = arith.constant dense<0.000000e+00> : vector<16x128xf32>
    %421 = tpu.matmul %409, %420, %cst_139 {dimension_numbers = #tpu.dot_dimension_numbers<[1], [0], [0], [1], [0, 0, 1, 1], [], []>} : vector<16x32xf32>, vector<32x128xf32>, vector<16x128xf32> -> vector<16x128xf32>
    %c32_140 = arith.constant 32 : index
    %c0_141 = arith.constant 0 : index
    %422 = vector.load %arg8[%c32_140, %c0_141] : memref<64x128xf32, #tpu.memory_space<vmem>>, vector<32x128xf32>
    %cst_142 = arith.constant dense<0.000000e+00> : vector<16x128xf32>
    %423 = tpu.matmul %410, %422, %cst_142 {dimension_numbers = #tpu.dot_dimension_numbers<[1], [0], [0], [1], [0, 0, 1, 1], [], []>} : vector<16x32xf32>, vector<32x128xf32>, vector<16x128xf32> -> vector<16x128xf32>
    %424 = arith.addf %421, %423 : vector<16x128xf32>
    %c0_143 = arith.constant 0 : index
    %c0_144 = arith.constant 0 : index
    %425 = vector.load %arg12[%c0_143, %c0_144] : memref<1x128xf32, #tpu.memory_space<vmem>>, vector<1x128xf32>
    %426 = vector.broadcast %425 : vector<1x128xf32> to vector<16x128xf32>
    %427 = arith.addf %424, %426 : vector<16x128xf32>
    %c0_145 = arith.constant 0 : index
    %c0_146 = arith.constant 0 : index
    %428 = vector.load %arg19[%c0_145, %c0_146] : memref<16x128xf32, #tpu.memory_space<vmem>>, vector<16x128xf32>
    tpu.vector_store %arg19[%c0_145, %c0_146], %427 {strides = array<i32>} : memref<16x128xf32, #tpu.memory_space<vmem>>, vector<16x128xf32>,
    %c0_147 = arith.constant 0 : index
    %c0_148 = arith.constant 0 : index
    %429 = vector.load %arg9[%c0_147, %c0_148] : memref<32x128xf32, #tpu.memory_space<vmem>>, vector<32x128xf32>
    %c0_149 = arith.constant 0 : index
    %c0_150 = arith.constant 0 : index
    %430 = vector.load %arg10[%c0_149, %c0_150] : memref<32x128xf32, #tpu.memory_space<vmem>>, vector<32x128xf32>
    %c0_i32_151 = arith.constant 0 : i32
    %c7_i32_152 = arith.constant 7 : i32
    %431 = arith.subi %c7_i32_152, %c0_i32_151 : i32
    %c2_i32_153 = arith.constant 2 : i32
    %432 = arith.muli %c0_i32_151, %c2_i32_153 : i32
    %433 = arith.index_cast %432 : i32 to index
    %c0_154 = arith.constant 0 : index
    %434 = vector.load %arg18[%433, %c0_154] : memref<16x128xf32, #tpu.memory_space<vmem>>, vector<2x128xf32>
    %cst_155 = arith.constant dense<0.000000e+00> : vector<2x128xf32>
    %435 = tpu.matmul %0, %429, %cst_155 {dimension_numbers = #tpu.dot_dimension_numbers<[1], [0], [0], [1], [0, 0, 1, 1], [], []>} : vector<2x32xf32>, vector<32x128xf32>, vector<2x128xf32> -> vector<2x128xf32>
    %436 = arith.addf %434, %435 : vector<2x128xf32>
    %437 = vector.extract_strided_slice %436 {offsets = [0, 0], sizes = [2, 96], strides = [1, 1]} : vector<2x128xf32> to vector<2x96xf32>
    %438 = arith.negf %437 : vector<2x96xf32>
    %439 = math.exp %438 : vector<2x96xf32>
    %cst_156 = arith.constant 1.000000e+00 : f32
    %440 = vector.broadcast %cst_156 : f32 to vector<2x96xf32>
    %441 = arith.addf %440, %439 : vector<2x96xf32>
    %442 = arith.divf %440, %441 : vector<2x96xf32>
    %443 = vector.extract_strided_slice %436 {offsets = [0, 96], sizes = [2, 32], strides = [1, 1]} : vector<2x128xf32> to vector<2x32xf32>
    %444 = math.tanh %443 : vector<2x32xf32>
    %445 = vector.extract_strided_slice %442 {offsets = [0, 32], sizes = [2, 32], strides = [1, 1]} : vector<2x96xf32> to vector<2x32xf32>
    %446 = arith.mulf %445, %0 : vector<2x32xf32>
    %447 = vector.extract_strided_slice %442 {offsets = [0, 0], sizes = [2, 32], strides = [1, 1]} : vector<2x96xf32> to vector<2x32xf32>
    %448 = arith.mulf %447, %444 : vector<2x32xf32>
    %449 = arith.addf %446, %448 : vector<2x32xf32>
    %450 = vector.extract_strided_slice %442 {offsets = [0, 64], sizes = [2, 32], strides = [1, 1]} : vector<2x96xf32> to vector<2x32xf32>
    %451 = math.tanh %449 : vector<2x32xf32>
    %452 = arith.mulf %450, %451 : vector<2x32xf32>
    %c2_i32_157 = arith.constant 2 : i32
    %453 = arith.muli %431, %c2_i32_157 : i32
    %454 = arith.index_cast %453 : i32 to index
    %c0_158 = arith.constant 0 : index
    %455 = vector.load %arg19[%454, %c0_158] : memref<16x128xf32, #tpu.memory_space<vmem>>, vector<2x128xf32>
    %cst_159 = arith.constant dense<0.000000e+00> : vector<2x128xf32>
    %456 = tpu.matmul %0, %430, %cst_159 {dimension_numbers = #tpu.dot_dimension_numbers<[1], [0], [0], [1], [0, 0, 1, 1], [], []>} : vector<2x32xf32>, vector<32x128xf32>, vector<2x128xf32> -> vector<2x128xf32>
    %457 = arith.addf %455, %456 : vector<2x128xf32>
    %458 = vector.extract_strided_slice %457 {offsets = [0, 0], sizes = [2, 96], strides = [1, 1]} : vector<2x128xf32> to vector<2x96xf32>
    %459 = arith.negf %458 : vector<2x96xf32>
    %460 = math.exp %459 : vector<2x96xf32>
    %cst_160 = arith.constant 1.000000e+00 : f32
    %461 = vector.broadcast %cst_160 : f32 to vector<2x96xf32>
    %462 = arith.addf %461, %460 : vector<2x96xf32>
    %463 = arith.divf %461, %462 : vector<2x96xf32>
    %464 = vector.extract_strided_slice %457 {offsets = [0, 96], sizes = [2, 32], strides = [1, 1]} : vector<2x128xf32> to vector<2x32xf32>
    %465 = math.tanh %464 : vector<2x32xf32>
    %466 = vector.extract_strided_slice %463 {offsets = [0, 32], sizes = [2, 32], strides = [1, 1]} : vector<2x96xf32> to vector<2x32xf32>
    %467 = arith.mulf %466, %0 : vector<2x32xf32>
    %468 = vector.extract_strided_slice %463 {offsets = [0, 0], sizes = [2, 32], strides = [1, 1]} : vector<2x96xf32> to vector<2x32xf32>
    %469 = arith.mulf %468, %465 : vector<2x32xf32>
    %470 = arith.addf %467, %469 : vector<2x32xf32>
    %471 = vector.extract_strided_slice %463 {offsets = [0, 64], sizes = [2, 32], strides = [1, 1]} : vector<2x96xf32> to vector<2x32xf32>
    %472 = math.tanh %470 : vector<2x32xf32>
    %473 = arith.mulf %471, %472 : vector<2x32xf32>
    %474 = arith.maximumf %1, %452 : vector<2x32xf32>
    %475 = arith.addf %0, %452 : vector<2x32xf32>
    %476 = arith.maximumf %1, %473 : vector<2x32xf32>
    %477 = arith.addf %0, %473 : vector<2x32xf32>
    %c1_i32_161 = arith.constant 1 : i32
    %c7_i32_162 = arith.constant 7 : i32
    %478 = arith.subi %c7_i32_162, %c1_i32_161 : i32
    %c2_i32_163 = arith.constant 2 : i32
    %479 = arith.muli %c1_i32_161, %c2_i32_163 : i32
    %480 = arith.index_cast %479 : i32 to index
    %c0_164 = arith.constant 0 : index
    %481 = vector.load %arg18[%480, %c0_164] : memref<16x128xf32, #tpu.memory_space<vmem>>, vector<2x128xf32>
    %cst_165 = arith.constant dense<0.000000e+00> : vector<2x128xf32>
    %482 = tpu.matmul %452, %429, %cst_165 {dimension_numbers = #tpu.dot_dimension_numbers<[1], [0], [0], [1], [0, 0, 1, 1], [], []>} : vector<2x32xf32>, vector<32x128xf32>, vector<2x128xf32> -> vector<2x128xf32>
    %483 = arith.addf %481, %482 : vector<2x128xf32>
    %484 = vector.extract_strided_slice %483 {offsets = [0, 0], sizes = [2, 96], strides = [1, 1]} : vector<2x128xf32> to vector<2x96xf32>
    %485 = arith.negf %484 : vector<2x96xf32>
    %486 = math.exp %485 : vector<2x96xf32>
    %cst_166 = arith.constant 1.000000e+00 : f32
    %487 = vector.broadcast %cst_166 : f32 to vector<2x96xf32>
    %488 = arith.addf %487, %486 : vector<2x96xf32>
    %489 = arith.divf %487, %488 : vector<2x96xf32>
    %490 = vector.extract_strided_slice %483 {offsets = [0, 96], sizes = [2, 32], strides = [1, 1]} : vector<2x128xf32> to vector<2x32xf32>
    %491 = math.tanh %490 : vector<2x32xf32>
    %492 = vector.extract_strided_slice %489 {offsets = [0, 32], sizes = [2, 32], strides = [1, 1]} : vector<2x96xf32> to vector<2x32xf32>
    %493 = arith.mulf %492, %449 : vector<2x32xf32>
    %494 = vector.extract_strided_slice %489 {offsets = [0, 0], sizes = [2, 32], strides = [1, 1]} : vector<2x96xf32> to vector<2x32xf32>
    %495 = arith.mulf %494, %491 : vector<2x32xf32>
    %496 = arith.addf %493, %495 : vector<2x32xf32>
    %497 = vector.extract_strided_slice %489 {offsets = [0, 64], sizes = [2, 32], strides = [1, 1]} : vector<2x96xf32> to vector<2x32xf32>
    %498 = math.tanh %496 : vector<2x32xf32>
    %499 = arith.mulf %497, %498 : vector<2x32xf32>
    %c2_i32_167 = arith.constant 2 : i32
    %500 = arith.muli %478, %c2_i32_167 : i32
    %501 = arith.index_cast %500 : i32 to index
    %c0_168 = arith.constant 0 : index
    %502 = vector.load %arg19[%501, %c0_168] : memref<16x128xf32, #tpu.memory_space<vmem>>, vector<2x128xf32>
    %cst_169 = arith.constant dense<0.000000e+00> : vector<2x128xf32>
    %503 = tpu.matmul %473, %430, %cst_169 {dimension_numbers = #tpu.dot_dimension_numbers<[1], [0], [0], [1], [0, 0, 1, 1], [], []>} : vector<2x32xf32>, vector<32x128xf32>, vector<2x128xf32> -> vector<2x128xf32>
    %504 = arith.addf %502, %503 : vector<2x128xf32>
    %505 = vector.extract_strided_slice %504 {offsets = [0, 0], sizes = [2, 96], strides = [1, 1]} : vector<2x128xf32> to vector<2x96xf32>
    %506 = arith.negf %505 : vector<2x96xf32>
    %507 = math.exp %506 : vector<2x96xf32>
    %cst_170 = arith.constant 1.000000e+00 : f32
    %508 = vector.broadcast %cst_170 : f32 to vector<2x96xf32>
    %509 = arith.addf %508, %507 : vector<2x96xf32>
    %510 = arith.divf %508, %509 : vector<2x96xf32>
    %511 = vector.extract_strided_slice %504 {offsets = [0, 96], sizes = [2, 32], strides = [1, 1]} : vector<2x128xf32> to vector<2x32xf32>
    %512 = math.tanh %511 : vector<2x32xf32>
    %513 = vector.extract_strided_slice %510 {offsets = [0, 32], sizes = [2, 32], strides = [1, 1]} : vector<2x96xf32> to vector<2x32xf32>
    %514 = arith.mulf %513, %470 : vector<2x32xf32>
    %515 = vector.extract_strided_slice %510 {offsets = [0, 0], sizes = [2, 32], strides = [1, 1]} : vector<2x96xf32> to vector<2x32xf32>
    %516 = arith.mulf %515, %512 : vector<2x32xf32>
    %517 = arith.addf %514, %516 : vector<2x32xf32>
    %518 = vector.extract_strided_slice %510 {offsets = [0, 64], sizes = [2, 32], strides = [1, 1]} : vector<2x96xf32> to vector<2x32xf32>
    %519 = math.tanh %517 : vector<2x32xf32>
    %520 = arith.mulf %518, %519 : vector<2x32xf32>
    %521 = arith.maximumf %474, %499 : vector<2x32xf32>
    %522 = arith.addf %475, %499 : vector<2x32xf32>
    %523 = arith.maximumf %476, %520 : vector<2x32xf32>
    %524 = arith.addf %477, %520 : vector<2x32xf32>
    %c2_i32_171 = arith.constant 2 : i32
    %c7_i32_172 = arith.constant 7 : i32
    %525 = arith.subi %c7_i32_172, %c2_i32_171 : i32
    %c2_i32_173 = arith.constant 2 : i32
    %526 = arith.muli %c2_i32_171, %c2_i32_173 : i32
    %527 = arith.index_cast %526 : i32 to index
    %c0_174 = arith.constant 0 : index
    %528 = vector.load %arg18[%527, %c0_174] : memref<16x128xf32, #tpu.memory_space<vmem>>, vector<2x128xf32>
    %cst_175 = arith.constant dense<0.000000e+00> : vector<2x128xf32>
    %529 = tpu.matmul %499, %429, %cst_175 {dimension_numbers = #tpu.dot_dimension_numbers<[1], [0], [0], [1], [0, 0, 1, 1], [], []>} : vector<2x32xf32>, vector<32x128xf32>, vector<2x128xf32> -> vector<2x128xf32>
    %530 = arith.addf %528, %529 : vector<2x128xf32>
    %531 = vector.extract_strided_slice %530 {offsets = [0, 0], sizes = [2, 96], strides = [1, 1]} : vector<2x128xf32> to vector<2x96xf32>
    %532 = arith.negf %531 : vector<2x96xf32>
    %533 = math.exp %532 : vector<2x96xf32>
    %cst_176 = arith.constant 1.000000e+00 : f32
    %534 = vector.broadcast %cst_176 : f32 to vector<2x96xf32>
    %535 = arith.addf %534, %533 : vector<2x96xf32>
    %536 = arith.divf %534, %535 : vector<2x96xf32>
    %537 = vector.extract_strided_slice %530 {offsets = [0, 96], sizes = [2, 32], strides = [1, 1]} : vector<2x128xf32> to vector<2x32xf32>
    %538 = math.tanh %537 : vector<2x32xf32>
    %539 = vector.extract_strided_slice %536 {offsets = [0, 32], sizes = [2, 32], strides = [1, 1]} : vector<2x96xf32> to vector<2x32xf32>
    %540 = arith.mulf %539, %496 : vector<2x32xf32>
    %541 = vector.extract_strided_slice %536 {offsets = [0, 0], sizes = [2, 32], strides = [1, 1]} : vector<2x96xf32> to vector<2x32xf32>
    %542 = arith.mulf %541, %538 : vector<2x32xf32>
    %543 = arith.addf %540, %542 : vector<2x32xf32>
    %544 = vector.extract_strided_slice %536 {offsets = [0, 64], sizes = [2, 32], strides = [1, 1]} : vector<2x96xf32> to vector<2x32xf32>
    %545 = math.tanh %543 : vector<2x32xf32>
    %546 = arith.mulf %544, %545 : vector<2x32xf32>
    %c2_i32_177 = arith.constant 2 : i32
    %547 = arith.muli %525, %c2_i32_177 : i32
    %548 = arith.index_cast %547 : i32 to index
    %c0_178 = arith.constant 0 : index
    %549 = vector.load %arg19[%548, %c0_178] : memref<16x128xf32, #tpu.memory_space<vmem>>, vector<2x128xf32>
    %cst_179 = arith.constant dense<0.000000e+00> : vector<2x128xf32>
    %550 = tpu.matmul %520, %430, %cst_179 {dimension_numbers = #tpu.dot_dimension_numbers<[1], [0], [0], [1], [0, 0, 1, 1], [], []>} : vector<2x32xf32>, vector<32x128xf32>, vector<2x128xf32> -> vector<2x128xf32>
    %551 = arith.addf %549, %550 : vector<2x128xf32>
    %552 = vector.extract_strided_slice %551 {offsets = [0, 0], sizes = [2, 96], strides = [1, 1]} : vector<2x128xf32> to vector<2x96xf32>
    %553 = arith.negf %552 : vector<2x96xf32>
    %554 = math.exp %553 : vector<2x96xf32>
    %cst_180 = arith.constant 1.000000e+00 : f32
    %555 = vector.broadcast %cst_180 : f32 to vector<2x96xf32>
    %556 = arith.addf %555, %554 : vector<2x96xf32>
    %557 = arith.divf %555, %556 : vector<2x96xf32>
    %558 = vector.extract_strided_slice %551 {offsets = [0, 96], sizes = [2, 32], strides = [1, 1]} : vector<2x128xf32> to vector<2x32xf32>
    %559 = math.tanh %558 : vector<2x32xf32>
    %560 = vector.extract_strided_slice %557 {offsets = [0, 32], sizes = [2, 32], strides = [1, 1]} : vector<2x96xf32> to vector<2x32xf32>
    %561 = arith.mulf %560, %517 : vector<2x32xf32>
    %562 = vector.extract_strided_slice %557 {offsets = [0, 0], sizes = [2, 32], strides = [1, 1]} : vector<2x96xf32> to vector<2x32xf32>
    %563 = arith.mulf %562, %559 : vector<2x32xf32>
    %564 = arith.addf %561, %563 : vector<2x32xf32>
    %565 = vector.extract_strided_slice %557 {offsets = [0, 64], sizes = [2, 32], strides = [1, 1]} : vector<2x96xf32> to vector<2x32xf32>
    %566 = math.tanh %564 : vector<2x32xf32>
    %567 = arith.mulf %565, %566 : vector<2x32xf32>
    %568 = arith.maximumf %521, %546 : vector<2x32xf32>
    %569 = arith.addf %522, %546 : vector<2x32xf32>
    %570 = arith.maximumf %523, %567 : vector<2x32xf32>
    %571 = arith.addf %524, %567 : vector<2x32xf32>
    %c3_i32_181 = arith.constant 3 : i32
    %c7_i32_182 = arith.constant 7 : i32
    %572 = arith.subi %c7_i32_182, %c3_i32_181 : i32
    %c2_i32_183 = arith.constant 2 : i32
    %573 = arith.muli %c3_i32_181, %c2_i32_183 : i32
    %574 = arith.index_cast %573 : i32 to index
    %c0_184 = arith.constant 0 : index
    %575 = vector.load %arg18[%574, %c0_184] : memref<16x128xf32, #tpu.memory_space<vmem>>, vector<2x128xf32>
    %cst_185 = arith.constant dense<0.000000e+00> : vector<2x128xf32>
    %576 = tpu.matmul %546, %429, %cst_185 {dimension_numbers = #tpu.dot_dimension_numbers<[1], [0], [0], [1], [0, 0, 1, 1], [], []>} : vector<2x32xf32>, vector<32x128xf32>, vector<2x128xf32> -> vector<2x128xf32>
    %577 = arith.addf %575, %576 : vector<2x128xf32>
    %578 = vector.extract_strided_slice %577 {offsets = [0, 0], sizes = [2, 96], strides = [1, 1]} : vector<2x128xf32> to vector<2x96xf32>
    %579 = arith.negf %578 : vector<2x96xf32>
    %580 = math.exp %579 : vector<2x96xf32>
    %cst_186 = arith.constant 1.000000e+00 : f32
    %581 = vector.broadcast %cst_186 : f32 to vector<2x96xf32>
    %582 = arith.addf %581, %580 : vector<2x96xf32>
    %583 = arith.divf %581, %582 : vector<2x96xf32>
    %584 = vector.extract_strided_slice %577 {offsets = [0, 96], sizes = [2, 32], strides = [1, 1]} : vector<2x128xf32> to vector<2x32xf32>
    %585 = math.tanh %584 : vector<2x32xf32>
    %586 = vector.extract_strided_slice %583 {offsets = [0, 32], sizes = [2, 32], strides = [1, 1]} : vector<2x96xf32> to vector<2x32xf32>
    %587 = arith.mulf %586, %543 : vector<2x32xf32>
    %588 = vector.extract_strided_slice %583 {offsets = [0, 0], sizes = [2, 32], strides = [1, 1]} : vector<2x96xf32> to vector<2x32xf32>
    %589 = arith.mulf %588, %585 : vector<2x32xf32>
    %590 = arith.addf %587, %589 : vector<2x32xf32>
    %591 = vector.extract_strided_slice %583 {offsets = [0, 64], sizes = [2, 32], strides = [1, 1]} : vector<2x96xf32> to vector<2x32xf32>
    %592 = math.tanh %590 : vector<2x32xf32>
    %593 = arith.mulf %591, %592 : vector<2x32xf32>
    %c2_i32_187 = arith.constant 2 : i32
    %594 = arith.muli %572, %c2_i32_187 : i32
    %595 = arith.index_cast %594 : i32 to index
    %c0_188 = arith.constant 0 : index
    %596 = vector.load %arg19[%595, %c0_188] : memref<16x128xf32, #tpu.memory_space<vmem>>, vector<2x128xf32>
    %cst_189 = arith.constant dense<0.000000e+00> : vector<2x128xf32>
    %597 = tpu.matmul %567, %430, %cst_189 {dimension_numbers = #tpu.dot_dimension_numbers<[1], [0], [0], [1], [0, 0, 1, 1], [], []>} : vector<2x32xf32>, vector<32x128xf32>, vector<2x128xf32> -> vector<2x128xf32>
    %598 = arith.addf %596, %597 : vector<2x128xf32>
    %599 = vector.extract_strided_slice %598 {offsets = [0, 0], sizes = [2, 96], strides = [1, 1]} : vector<2x128xf32> to vector<2x96xf32>
    %600 = arith.negf %599 : vector<2x96xf32>
    %601 = math.exp %600 : vector<2x96xf32>
    %cst_190 = arith.constant 1.000000e+00 : f32
    %602 = vector.broadcast %cst_190 : f32 to vector<2x96xf32>
    %603 = arith.addf %602, %601 : vector<2x96xf32>
    %604 = arith.divf %602, %603 : vector<2x96xf32>
    %605 = vector.extract_strided_slice %598 {offsets = [0, 96], sizes = [2, 32], strides = [1, 1]} : vector<2x128xf32> to vector<2x32xf32>
    %606 = math.tanh %605 : vector<2x32xf32>
    %607 = vector.extract_strided_slice %604 {offsets = [0, 32], sizes = [2, 32], strides = [1, 1]} : vector<2x96xf32> to vector<2x32xf32>
    %608 = arith.mulf %607, %564 : vector<2x32xf32>
    %609 = vector.extract_strided_slice %604 {offsets = [0, 0], sizes = [2, 32], strides = [1, 1]} : vector<2x96xf32> to vector<2x32xf32>
    %610 = arith.mulf %609, %606 : vector<2x32xf32>
    %611 = arith.addf %608, %610 : vector<2x32xf32>
    %612 = vector.extract_strided_slice %604 {offsets = [0, 64], sizes = [2, 32], strides = [1, 1]} : vector<2x96xf32> to vector<2x32xf32>
    %613 = math.tanh %611 : vector<2x32xf32>
    %614 = arith.mulf %612, %613 : vector<2x32xf32>
    %615 = arith.maximumf %568, %593 : vector<2x32xf32>
    %616 = arith.addf %569, %593 : vector<2x32xf32>
    %617 = arith.maximumf %570, %614 : vector<2x32xf32>
    %618 = arith.addf %571, %614 : vector<2x32xf32>
    %c4_i32_191 = arith.constant 4 : i32
    %c7_i32_192 = arith.constant 7 : i32
    %619 = arith.subi %c7_i32_192, %c4_i32_191 : i32
    %c2_i32_193 = arith.constant 2 : i32
    %620 = arith.muli %c4_i32_191, %c2_i32_193 : i32
    %621 = arith.index_cast %620 : i32 to index
    %c0_194 = arith.constant 0 : index
    %622 = vector.load %arg18[%621, %c0_194] : memref<16x128xf32, #tpu.memory_space<vmem>>, vector<2x128xf32>
    %cst_195 = arith.constant dense<0.000000e+00> : vector<2x128xf32>
    %623 = tpu.matmul %593, %429, %cst_195 {dimension_numbers = #tpu.dot_dimension_numbers<[1], [0], [0], [1], [0, 0, 1, 1], [], []>} : vector<2x32xf32>, vector<32x128xf32>, vector<2x128xf32> -> vector<2x128xf32>
    %624 = arith.addf %622, %623 : vector<2x128xf32>
    %625 = vector.extract_strided_slice %624 {offsets = [0, 0], sizes = [2, 96], strides = [1, 1]} : vector<2x128xf32> to vector<2x96xf32>
    %626 = arith.negf %625 : vector<2x96xf32>
    %627 = math.exp %626 : vector<2x96xf32>
    %cst_196 = arith.constant 1.000000e+00 : f32
    %628 = vector.broadcast %cst_196 : f32 to vector<2x96xf32>
    %629 = arith.addf %628, %627 : vector<2x96xf32>
    %630 = arith.divf %628, %629 : vector<2x96xf32>
    %631 = vector.extract_strided_slice %624 {offsets = [0, 96], sizes = [2, 32], strides = [1, 1]} : vector<2x128xf32> to vector<2x32xf32>
    %632 = math.tanh %631 : vector<2x32xf32>
    %633 = vector.extract_strided_slice %630 {offsets = [0, 32], sizes = [2, 32], strides = [1, 1]} : vector<2x96xf32> to vector<2x32xf32>
    %634 = arith.mulf %633, %590 : vector<2x32xf32>
    %635 = vector.extract_strided_slice %630 {offsets = [0, 0], sizes = [2, 32], strides = [1, 1]} : vector<2x96xf32> to vector<2x32xf32>
    %636 = arith.mulf %635, %632 : vector<2x32xf32>
    %637 = arith.addf %634, %636 : vector<2x32xf32>
    %638 = vector.extract_strided_slice %630 {offsets = [0, 64], sizes = [2, 32], strides = [1, 1]} : vector<2x96xf32> to vector<2x32xf32>
    %639 = math.tanh %637 : vector<2x32xf32>
    %640 = arith.mulf %638, %639 : vector<2x32xf32>
    %c2_i32_197 = arith.constant 2 : i32
    %641 = arith.muli %619, %c2_i32_197 : i32
    %642 = arith.index_cast %641 : i32 to index
    %c0_198 = arith.constant 0 : index
    %643 = vector.load %arg19[%642, %c0_198] : memref<16x128xf32, #tpu.memory_space<vmem>>, vector<2x128xf32>
    %cst_199 = arith.constant dense<0.000000e+00> : vector<2x128xf32>
    %644 = tpu.matmul %614, %430, %cst_199 {dimension_numbers = #tpu.dot_dimension_numbers<[1], [0], [0], [1], [0, 0, 1, 1], [], []>} : vector<2x32xf32>, vector<32x128xf32>, vector<2x128xf32> -> vector<2x128xf32>
    %645 = arith.addf %643, %644 : vector<2x128xf32>
    %646 = vector.extract_strided_slice %645 {offsets = [0, 0], sizes = [2, 96], strides = [1, 1]} : vector<2x128xf32> to vector<2x96xf32>
    %647 = arith.negf %646 : vector<2x96xf32>
    %648 = math.exp %647 : vector<2x96xf32>
    %cst_200 = arith.constant 1.000000e+00 : f32
    %649 = vector.broadcast %cst_200 : f32 to vector<2x96xf32>
    %650 = arith.addf %649, %648 : vector<2x96xf32>
    %651 = arith.divf %649, %650 : vector<2x96xf32>
    %652 = vector.extract_strided_slice %645 {offsets = [0, 96], sizes = [2, 32], strides = [1, 1]} : vector<2x128xf32> to vector<2x32xf32>
    %653 = math.tanh %652 : vector<2x32xf32>
    %654 = vector.extract_strided_slice %651 {offsets = [0, 32], sizes = [2, 32], strides = [1, 1]} : vector<2x96xf32> to vector<2x32xf32>
    %655 = arith.mulf %654, %611 : vector<2x32xf32>
    %656 = vector.extract_strided_slice %651 {offsets = [0, 0], sizes = [2, 32], strides = [1, 1]} : vector<2x96xf32> to vector<2x32xf32>
    %657 = arith.mulf %656, %653 : vector<2x32xf32>
    %658 = arith.addf %655, %657 : vector<2x32xf32>
    %659 = vector.extract_strided_slice %651 {offsets = [0, 64], sizes = [2, 32], strides = [1, 1]} : vector<2x96xf32> to vector<2x32xf32>
    %660 = math.tanh %658 : vector<2x32xf32>
    %661 = arith.mulf %659, %660 : vector<2x32xf32>
    %662 = arith.maximumf %615, %640 : vector<2x32xf32>
    %663 = arith.addf %616, %640 : vector<2x32xf32>
    %664 = arith.maximumf %617, %661 : vector<2x32xf32>
    %665 = arith.addf %618, %661 : vector<2x32xf32>
    %c5_i32_201 = arith.constant 5 : i32
    %c7_i32_202 = arith.constant 7 : i32
    %666 = arith.subi %c7_i32_202, %c5_i32_201 : i32
    %c2_i32_203 = arith.constant 2 : i32
    %667 = arith.muli %c5_i32_201, %c2_i32_203 : i32
    %668 = arith.index_cast %667 : i32 to index
    %c0_204 = arith.constant 0 : index
    %669 = vector.load %arg18[%668, %c0_204] : memref<16x128xf32, #tpu.memory_space<vmem>>, vector<2x128xf32>
    %cst_205 = arith.constant dense<0.000000e+00> : vector<2x128xf32>
    %670 = tpu.matmul %640, %429, %cst_205 {dimension_numbers = #tpu.dot_dimension_numbers<[1], [0], [0], [1], [0, 0, 1, 1], [], []>} : vector<2x32xf32>, vector<32x128xf32>, vector<2x128xf32> -> vector<2x128xf32>
    %671 = arith.addf %669, %670 : vector<2x128xf32>
    %672 = vector.extract_strided_slice %671 {offsets = [0, 0], sizes = [2, 96], strides = [1, 1]} : vector<2x128xf32> to vector<2x96xf32>
    %673 = arith.negf %672 : vector<2x96xf32>
    %674 = math.exp %673 : vector<2x96xf32>
    %cst_206 = arith.constant 1.000000e+00 : f32
    %675 = vector.broadcast %cst_206 : f32 to vector<2x96xf32>
    %676 = arith.addf %675, %674 : vector<2x96xf32>
    %677 = arith.divf %675, %676 : vector<2x96xf32>
    %678 = vector.extract_strided_slice %671 {offsets = [0, 96], sizes = [2, 32], strides = [1, 1]} : vector<2x128xf32> to vector<2x32xf32>
    %679 = math.tanh %678 : vector<2x32xf32>
    %680 = vector.extract_strided_slice %677 {offsets = [0, 32], sizes = [2, 32], strides = [1, 1]} : vector<2x96xf32> to vector<2x32xf32>
    %681 = arith.mulf %680, %637 : vector<2x32xf32>
    %682 = vector.extract_strided_slice %677 {offsets = [0, 0], sizes = [2, 32], strides = [1, 1]} : vector<2x96xf32> to vector<2x32xf32>
    %683 = arith.mulf %682, %679 : vector<2x32xf32>
    %684 = arith.addf %681, %683 : vector<2x32xf32>
    %685 = vector.extract_strided_slice %677 {offsets = [0, 64], sizes = [2, 32], strides = [1, 1]} : vector<2x96xf32> to vector<2x32xf32>
    %686 = math.tanh %684 : vector<2x32xf32>
    %687 = arith.mulf %685, %686 : vector<2x32xf32>
    %c2_i32_207 = arith.constant 2 : i32
    %688 = arith.muli %666, %c2_i32_207 : i32
    %689 = arith.index_cast %688 : i32 to index
    %c0_208 = arith.constant 0 : index
    %690 = vector.load %arg19[%689, %c0_208] : memref<16x128xf32, #tpu.memory_space<vmem>>, vector<2x128xf32>
    %cst_209 = arith.constant dense<0.000000e+00> : vector<2x128xf32>
    %691 = tpu.matmul %661, %430, %cst_209 {dimension_numbers = #tpu.dot_dimension_numbers<[1], [0], [0], [1], [0, 0, 1, 1], [], []>} : vector<2x32xf32>, vector<32x128xf32>, vector<2x128xf32> -> vector<2x128xf32>
    %692 = arith.addf %690, %691 : vector<2x128xf32>
    %693 = vector.extract_strided_slice %692 {offsets = [0, 0], sizes = [2, 96], strides = [1, 1]} : vector<2x128xf32> to vector<2x96xf32>
    %694 = arith.negf %693 : vector<2x96xf32>
    %695 = math.exp %694 : vector<2x96xf32>
    %cst_210 = arith.constant 1.000000e+00 : f32
    %696 = vector.broadcast %cst_210 : f32 to vector<2x96xf32>
    %697 = arith.addf %696, %695 : vector<2x96xf32>
    %698 = arith.divf %696, %697 : vector<2x96xf32>
    %699 = vector.extract_strided_slice %692 {offsets = [0, 96], sizes = [2, 32], strides = [1, 1]} : vector<2x128xf32> to vector<2x32xf32>
    %700 = math.tanh %699 : vector<2x32xf32>
    %701 = vector.extract_strided_slice %698 {offsets = [0, 32], sizes = [2, 32], strides = [1, 1]} : vector<2x96xf32> to vector<2x32xf32>
    %702 = arith.mulf %701, %658 : vector<2x32xf32>
    %703 = vector.extract_strided_slice %698 {offsets = [0, 0], sizes = [2, 32], strides = [1, 1]} : vector<2x96xf32> to vector<2x32xf32>
    %704 = arith.mulf %703, %700 : vector<2x32xf32>
    %705 = arith.addf %702, %704 : vector<2x32xf32>
    %706 = vector.extract_strided_slice %698 {offsets = [0, 64], sizes = [2, 32], strides = [1, 1]} : vector<2x96xf32> to vector<2x32xf32>
    %707 = math.tanh %705 : vector<2x32xf32>
    %708 = arith.mulf %706, %707 : vector<2x32xf32>
    %709 = arith.maximumf %662, %687 : vector<2x32xf32>
    %710 = arith.addf %663, %687 : vector<2x32xf32>
    %711 = arith.maximumf %664, %708 : vector<2x32xf32>
    %712 = arith.addf %665, %708 : vector<2x32xf32>
    %c6_i32_211 = arith.constant 6 : i32
    %c7_i32_212 = arith.constant 7 : i32
    %713 = arith.subi %c7_i32_212, %c6_i32_211 : i32
    %c2_i32_213 = arith.constant 2 : i32
    %714 = arith.muli %c6_i32_211, %c2_i32_213 : i32
    %715 = arith.index_cast %714 : i32 to index
    %c0_214 = arith.constant 0 : index
    %716 = vector.load %arg18[%715, %c0_214] : memref<16x128xf32, #tpu.memory_space<vmem>>, vector<2x128xf32>
    %cst_215 = arith.constant dense<0.000000e+00> : vector<2x128xf32>
    %717 = tpu.matmul %687, %429, %cst_215 {dimension_numbers = #tpu.dot_dimension_numbers<[1], [0], [0], [1], [0, 0, 1, 1], [], []>} : vector<2x32xf32>, vector<32x128xf32>, vector<2x128xf32> -> vector<2x128xf32>
    %718 = arith.addf %716, %717 : vector<2x128xf32>
    %719 = vector.extract_strided_slice %718 {offsets = [0, 0], sizes = [2, 96], strides = [1, 1]} : vector<2x128xf32> to vector<2x96xf32>
    %720 = arith.negf %719 : vector<2x96xf32>
    %721 = math.exp %720 : vector<2x96xf32>
    %cst_216 = arith.constant 1.000000e+00 : f32
    %722 = vector.broadcast %cst_216 : f32 to vector<2x96xf32>
    %723 = arith.addf %722, %721 : vector<2x96xf32>
    %724 = arith.divf %722, %723 : vector<2x96xf32>
    %725 = vector.extract_strided_slice %718 {offsets = [0, 96], sizes = [2, 32], strides = [1, 1]} : vector<2x128xf32> to vector<2x32xf32>
    %726 = math.tanh %725 : vector<2x32xf32>
    %727 = vector.extract_strided_slice %724 {offsets = [0, 32], sizes = [2, 32], strides = [1, 1]} : vector<2x96xf32> to vector<2x32xf32>
    %728 = arith.mulf %727, %684 : vector<2x32xf32>
    %729 = vector.extract_strided_slice %724 {offsets = [0, 0], sizes = [2, 32], strides = [1, 1]} : vector<2x96xf32> to vector<2x32xf32>
    %730 = arith.mulf %729, %726 : vector<2x32xf32>
    %731 = arith.addf %728, %730 : vector<2x32xf32>
    %732 = vector.extract_strided_slice %724 {offsets = [0, 64], sizes = [2, 32], strides = [1, 1]} : vector<2x96xf32> to vector<2x32xf32>
    %733 = math.tanh %731 : vector<2x32xf32>
    %734 = arith.mulf %732, %733 : vector<2x32xf32>
    %c2_i32_217 = arith.constant 2 : i32
    %735 = arith.muli %713, %c2_i32_217 : i32
    %736 = arith.index_cast %735 : i32 to index
    %c0_218 = arith.constant 0 : index
    %737 = vector.load %arg19[%736, %c0_218] : memref<16x128xf32, #tpu.memory_space<vmem>>, vector<2x128xf32>
    %cst_219 = arith.constant dense<0.000000e+00> : vector<2x128xf32>
    %738 = tpu.matmul %708, %430, %cst_219 {dimension_numbers = #tpu.dot_dimension_numbers<[1], [0], [0], [1], [0, 0, 1, 1], [], []>} : vector<2x32xf32>, vector<32x128xf32>, vector<2x128xf32> -> vector<2x128xf32>
    %739 = arith.addf %737, %738 : vector<2x128xf32>
    %740 = vector.extract_strided_slice %739 {offsets = [0, 0], sizes = [2, 96], strides = [1, 1]} : vector<2x128xf32> to vector<2x96xf32>
    %741 = arith.negf %740 : vector<2x96xf32>
    %742 = math.exp %741 : vector<2x96xf32>
    %cst_220 = arith.constant 1.000000e+00 : f32
    %743 = vector.broadcast %cst_220 : f32 to vector<2x96xf32>
    %744 = arith.addf %743, %742 : vector<2x96xf32>
    %745 = arith.divf %743, %744 : vector<2x96xf32>
    %746 = vector.extract_strided_slice %739 {offsets = [0, 96], sizes = [2, 32], strides = [1, 1]} : vector<2x128xf32> to vector<2x32xf32>
    %747 = math.tanh %746 : vector<2x32xf32>
    %748 = vector.extract_strided_slice %745 {offsets = [0, 32], sizes = [2, 32], strides = [1, 1]} : vector<2x96xf32> to vector<2x32xf32>
    %749 = arith.mulf %748, %705 : vector<2x32xf32>
    %750 = vector.extract_strided_slice %745 {offsets = [0, 0], sizes = [2, 32], strides = [1, 1]} : vector<2x96xf32> to vector<2x32xf32>
    %751 = arith.mulf %750, %747 : vector<2x32xf32>
    %752 = arith.addf %749, %751 : vector<2x32xf32>
    %753 = vector.extract_strided_slice %745 {offsets = [0, 64], sizes = [2, 32], strides = [1, 1]} : vector<2x96xf32> to vector<2x32xf32>
    %754 = math.tanh %752 : vector<2x32xf32>
    %755 = arith.mulf %753, %754 : vector<2x32xf32>
    %756 = arith.maximumf %709, %734 : vector<2x32xf32>
    %757 = arith.addf %710, %734 : vector<2x32xf32>
    %758 = arith.maximumf %711, %755 : vector<2x32xf32>
    %759 = arith.addf %712, %755 : vector<2x32xf32>
    %c7_i32_221 = arith.constant 7 : i32
    %c7_i32_222 = arith.constant 7 : i32
    %760 = arith.subi %c7_i32_222, %c7_i32_221 : i32
    %c2_i32_223 = arith.constant 2 : i32
    %761 = arith.muli %c7_i32_221, %c2_i32_223 : i32
    %762 = arith.index_cast %761 : i32 to index
    %c0_224 = arith.constant 0 : index
    %763 = vector.load %arg18[%762, %c0_224] : memref<16x128xf32, #tpu.memory_space<vmem>>, vector<2x128xf32>
    %cst_225 = arith.constant dense<0.000000e+00> : vector<2x128xf32>
    %764 = tpu.matmul %734, %429, %cst_225 {dimension_numbers = #tpu.dot_dimension_numbers<[1], [0], [0], [1], [0, 0, 1, 1], [], []>} : vector<2x32xf32>, vector<32x128xf32>, vector<2x128xf32> -> vector<2x128xf32>
    %765 = arith.addf %763, %764 : vector<2x128xf32>
    %766 = vector.extract_strided_slice %765 {offsets = [0, 0], sizes = [2, 96], strides = [1, 1]} : vector<2x128xf32> to vector<2x96xf32>
    %767 = arith.negf %766 : vector<2x96xf32>
    %768 = math.exp %767 : vector<2x96xf32>
    %cst_226 = arith.constant 1.000000e+00 : f32
    %769 = vector.broadcast %cst_226 : f32 to vector<2x96xf32>
    %770 = arith.addf %769, %768 : vector<2x96xf32>
    %771 = arith.divf %769, %770 : vector<2x96xf32>
    %772 = vector.extract_strided_slice %765 {offsets = [0, 96], sizes = [2, 32], strides = [1, 1]} : vector<2x128xf32> to vector<2x32xf32>
    %773 = math.tanh %772 : vector<2x32xf32>
    %774 = vector.extract_strided_slice %771 {offsets = [0, 32], sizes = [2, 32], strides = [1, 1]} : vector<2x96xf32> to vector<2x32xf32>
    %775 = arith.mulf %774, %731 : vector<2x32xf32>
    %776 = vector.extract_strided_slice %771 {offsets = [0, 0], sizes = [2, 32], strides = [1, 1]} : vector<2x96xf32> to vector<2x32xf32>
    %777 = arith.mulf %776, %773 : vector<2x32xf32>
    %778 = arith.addf %775, %777 : vector<2x32xf32>
    %779 = vector.extract_strided_slice %771 {offsets = [0, 64], sizes = [2, 32], strides = [1, 1]} : vector<2x96xf32> to vector<2x32xf32>
    %780 = math.tanh %778 : vector<2x32xf32>
    %781 = arith.mulf %779, %780 : vector<2x32xf32>
    %c2_i32_227 = arith.constant 2 : i32
    %782 = arith.muli %760, %c2_i32_227 : i32
    %783 = arith.index_cast %782 : i32 to index
    %c0_228 = arith.constant 0 : index
    %784 = vector.load %arg19[%783, %c0_228] : memref<16x128xf32, #tpu.memory_space<vmem>>, vector<2x128xf32>
    %cst_229 = arith.constant dense<0.000000e+00> : vector<2x128xf32>
    %785 = tpu.matmul %755, %430, %cst_229 {dimension_numbers = #tpu.dot_dimension_numbers<[1], [0], [0], [1], [0, 0, 1, 1], [], []>} : vector<2x32xf32>, vector<32x128xf32>, vector<2x128xf32> -> vector<2x128xf32>
    %786 = arith.addf %784, %785 : vector<2x128xf32>
    %787 = vector.extract_strided_slice %786 {offsets = [0, 0], sizes = [2, 96], strides = [1, 1]} : vector<2x128xf32> to vector<2x96xf32>
    %788 = arith.negf %787 : vector<2x96xf32>
    %789 = math.exp %788 : vector<2x96xf32>
    %cst_230 = arith.constant 1.000000e+00 : f32
    %790 = vector.broadcast %cst_230 : f32 to vector<2x96xf32>
    %791 = arith.addf %790, %789 : vector<2x96xf32>
    %792 = arith.divf %790, %791 : vector<2x96xf32>
    %793 = vector.extract_strided_slice %786 {offsets = [0, 96], sizes = [2, 32], strides = [1, 1]} : vector<2x128xf32> to vector<2x32xf32>
    %794 = math.tanh %793 : vector<2x32xf32>
    %795 = vector.extract_strided_slice %792 {offsets = [0, 32], sizes = [2, 32], strides = [1, 1]} : vector<2x96xf32> to vector<2x32xf32>
    %796 = arith.mulf %795, %752 : vector<2x32xf32>
    %797 = vector.extract_strided_slice %792 {offsets = [0, 0], sizes = [2, 32], strides = [1, 1]} : vector<2x96xf32> to vector<2x32xf32>
    %798 = arith.mulf %797, %794 : vector<2x32xf32>
    %799 = arith.addf %796, %798 : vector<2x32xf32>
    %800 = vector.extract_strided_slice %792 {offsets = [0, 64], sizes = [2, 32], strides = [1, 1]} : vector<2x96xf32> to vector<2x32xf32>
    %801 = math.tanh %799 : vector<2x32xf32>
    %802 = arith.mulf %800, %801 : vector<2x32xf32>
    %803 = arith.maximumf %756, %781 : vector<2x32xf32>
    %804 = arith.addf %757, %781 : vector<2x32xf32>
    %805 = arith.maximumf %758, %802 : vector<2x32xf32>
    %806 = arith.addf %759, %802 : vector<2x32xf32>
    %c8_i32_231 = arith.constant 8 : i32
    %cst_232 = arith.constant 1.250000e-01 : f32
    %807 = vector.broadcast %cst_232 : f32 to vector<2x32xf32>
    %808 = arith.mulf %804, %807 : vector<2x32xf32>
    %cst_233 = arith.constant 1.250000e-01 : f32
    %809 = vector.broadcast %cst_233 : f32 to vector<2x32xf32>
    %810 = arith.mulf %806, %809 : vector<2x32xf32>
    %811 = tpu.concatenate %803, %805, %808, %810 in 1 : vector<2x32xf32>, vector<2x32xf32>, vector<2x32xf32>, vector<2x32xf32> -> vector<2x128xf32>
    %c0_234 = arith.constant 0 : index
    %c0_235 = arith.constant 0 : index
    %812 = vector.load %arg13[%c0_234, %c0_235] : memref<128x128xf32, #tpu.memory_space<vmem>>, vector<128x128xf32>
    %cst_236 = arith.constant dense<0.000000e+00> : vector<2x128xf32>
    %813 = tpu.matmul %811, %812, %cst_236 {dimension_numbers = #tpu.dot_dimension_numbers<[1], [0], [0], [1], [0, 0, 1, 1], [], []>} : vector<2x128xf32>, vector<128x128xf32>, vector<2x128xf32> -> vector<2x128xf32>
    %c0_237 = arith.constant 0 : index
    %c0_238 = arith.constant 0 : index
    %814 = vector.load %arg14[%c0_237, %c0_238] : memref<1x128xf32, #tpu.memory_space<vmem>>, vector<1x128xf32>
    %815 = vector.broadcast %814 : vector<1x128xf32> to vector<2x128xf32>
    %816 = arith.addf %813, %815 : vector<2x128xf32>
    %cst_239 = arith.constant 0.000000e+00 : f32
    %817 = vector.broadcast %cst_239 : f32 to vector<2x128xf32>
    %818 = arith.maximumf %816, %817 : vector<2x128xf32>
    %819 = arith.addf %811, %818 : vector<2x128xf32>
    %c0_240 = arith.constant 0 : index
    %c0_241 = arith.constant 0 : index
    %820 = vector.load %arg15[%c0_240, %c0_241] : memref<128x1xf32, #tpu.memory_space<vmem>>, vector<128x1xf32>
    %cst_242 = arith.constant dense<0.000000e+00> : vector<2x1xf32>
    %821 = tpu.matmul %819, %820, %cst_242 {dimension_numbers = #tpu.dot_dimension_numbers<[1], [0], [0], [1], [0, 0, 1, 1], [], []>} : vector<2x128xf32>, vector<128x1xf32>, vector<2x1xf32> -> vector<2x1xf32>
    %c0_243 = arith.constant 0 : index
    %c0_244 = arith.constant 0 : index
    %822 = vector.load %arg16[%c0_243, %c0_244] : memref<1x1xf32, #tpu.memory_space<vmem>>, vector<1x1xf32>
    %823 = vector.broadcast %822 : vector<1x1xf32> to vector<2x1xf32>
    %824 = arith.addf %821, %823 : vector<2x1xf32>
    %c0_245 = arith.constant 0 : index
    %c0_246 = arith.constant 0 : index
    %825 = vector.load %arg17[%c0_245, %c0_246] : memref<2x1xf32, #tpu.memory_space<vmem>>, vector<2x1xf32>
    tpu.vector_store %arg17[%c0_245, %c0_246], %824 {strides = array<i32>} : memref<2x1xf32, #tpu.memory_space<vmem>>, vector<2x1xf32>,
    return
  }
}

</mosaic_0001>

<llo_original>
// kernel: neural_net_forward.1
$region0: #{neural_net_forward.1}
  #allocation0 [shape = 'u32[]', space=smem, size = 0x4, offset = 0x4, fixed_abs, tag = 'smem constant byte address 0x4 - core index']
  #allocation1 [shape = 'u32[72,128]{1,0:T(1,128)}', space=vmem, size = 0x9000, scoped, tag = 'internal scratch']
  #allocation2 [shape = 'f32[16,128]{1,0:T(8,128)}', space=vmem, size = 0x2000, scoped, tag = 'scratch operand']
  #allocation3 [shape = 'f32[16,128]{1,0:T(8,128)}', space=vmem, size = 0x2000, scoped, tag = 'scratch operand']
  #allocation4 [shape = 'f32[16,32]{1,0:T(8,128)}', space=vmem, size = 0x2000, scoped, tag = 'scratch operand']
  #allocation5 [shape = 'f32[16,32]{1,0:T(8,128)}', space=vmem, size = 0x2000, scoped, tag = 'scratch operand']
  #allocation6 [shape = 'f32[1,1]{1,0:T(1,128)S(1)}', space=vmem, size = 0x200, scoped, tag = 'scoped memory for neural_net_forward.1']
  %s0 = inlined_call_operand.vmem [shape: f32[16,32], index: 0, kind: input, shape index: {}]
  %s1 = inlined_call_operand.vmem [shape: f32[32,128], index: 1, kind: input, shape index: {}]
  %s2 = inlined_call_operand.vmem [shape: f32[32,128], index: 2, kind: input, shape index: {}]
  %s3 = inlined_call_operand.vmem [shape: f32[32,128], index: 3, kind: input, shape index: {}]
  %s4 = inlined_call_operand.vmem [shape: f32[32,128], index: 4, kind: input, shape index: {}]
  %s5 = inlined_call_operand.vmem [shape: f32[1,128], index: 5, kind: input, shape index: {}]
  %s6 = inlined_call_operand.vmem [shape: f32[1,128], index: 6, kind: input, shape index: {}]
  %s7 = inlined_call_operand.vmem [shape: f32[64,128], index: 7, kind: input, shape index: {}]
  %s8 = inlined_call_operand.vmem [shape: f32[64,128], index: 8, kind: input, shape index: {}]
  %s9 = inlined_call_operand.vmem [shape: f32[32,128], index: 9, kind: input, shape index: {}]
  %s10 = inlined_call_operand.hbm [shape: f32[32,128], index: 10, kind: input, shape index: {}]
  %s11 = inlined_call_operand.vmem [shape: f32[1,128], index: 11, kind: input, shape index: {}]
  %s12 = inlined_call_operand.hbm [shape: f32[1,128], index: 12, kind: input, shape index: {}]
  %s13 = inlined_call_operand.vmem [shape: f32[128,128], index: 13, kind: input, shape index: {}]
  %s14 = inlined_call_operand.vmem [shape: f32[1,128], index: 14, kind: input, shape index: {}]
  %s15 = inlined_call_operand.vmem [shape: f32[128,1], index: 15, kind: input, shape index: {}]
  %s16 = inlined_call_operand.<no memory space> [shape: f32[1,1], index: 16, kind: input, shape index: {}]
  %s17 = inlined_call_operand.vmem [shape: f32[2,1], index: 17, kind: output, shape index: {}]
  %s18 = sld [smem:[#allocation0]]
  $region86: #{neural_net_forward.1} parent=0
    _
  %s20 = ssub.s32 1, %s18
  %s21 = scalar_select 0, %s20, %s18
  %v22 = vstv %s16
  %23 = vst [vmem:[#allocation6] sm:$0x1] %v22
  $region1: #{neural_net_forward.1} parent=0
    #allocation7 [shape = 'u8[16384]{0}', space=vmem, size = 0x4000, scoped, tag = 'input window, operand 10, single buffered']
    #allocation8 [shape = 's32[1]{0}', space=sflag, size = 0x4, scoped, tag = 'scoped memory for neural_net_forward.1']
    #allocation9 [shape = 'u8[512]{0}', space=vmem, size = 0x400, scoped, tag = 'input window, operand 12, single buffered']
    #allocation10 [shape = 's32[1]{0}', space=sflag, size = 0x4, scoped, tag = 'scoped memory for neural_net_forward.1']
    %24 = vsyncpa [#allocation8], 0
    %25 = vsyncpa [#allocation10], 0
    // Predicated region
    $region2: #{neural_net_forward.1} parent=1 // pred_check
      _
    $region3: #{neural_net_forward.1} parent=1 // pred_check_branch
      %27 = sbr.rel (0) target = $region5
    $region4: #{neural_net_forward.1} parent=1 // pred_region
      _
    $region5: #{neural_net_forward.1} parent=1 // pred_fallthru
      _
    // Predicated region
    $region6: #{neural_net_forward.1} parent=1 // pred_check
      _
    $region7: #{neural_net_forward.1} parent=1 // pred_check_branch
      %29 = sbr.rel (0) target = $region9
    $region8: #{neural_net_forward.1} parent=1 // pred_region
      _
    $region9: #{neural_net_forward.1} parent=1 // pred_fallthru
      _
    // Predicated region
    $region10: #{neural_net_forward.1} parent=1 // pred_check
      _
    $region11: #{neural_net_forward.1} parent=1 // pred_check_branch
      %31 = sbr.rel (0) target = $region13
    $region12: #{neural_net_forward.1} parent=1 // pred_region
      _
    $region13: #{neural_net_forward.1} parent=1 // pred_fallthru
      _
    // Predicated region
    $region14: #{neural_net_forward.1} parent=1 // pred_check
      _
    $region15: #{neural_net_forward.1} parent=1 // pred_check_branch
      %33 = sbr.rel (0) target = $region17
    $region16: #{neural_net_forward.1} parent=1 // pred_region
      _
    $region17: #{neural_net_forward.1} parent=1 // pred_fallthru
      _
    // Predicated region
    $region18: #{neural_net_forward.1} parent=1 // pred_check
      _
    $region19: #{neural_net_forward.1} parent=1 // pred_check_branch
      %35 = sbr.rel (0) target = $region21
    $region20: #{neural_net_forward.1} parent=1 // pred_region
      _
    $region21: #{neural_net_forward.1} parent=1 // pred_fallthru
      _
    // Predicated region
    $region22: #{neural_net_forward.1} parent=1 // pred_check
      _
    $region23: #{neural_net_forward.1} parent=1 // pred_check_branch
      %37 = sbr.rel (0) target = $region25
    $region24: #{neural_net_forward.1} parent=1 // pred_region
      _
    $region25: #{neural_net_forward.1} parent=1 // pred_fallthru
      _
    // Predicated region
    $region26: #{neural_net_forward.1} parent=1 // pred_check
      _
    $region27: #{neural_net_forward.1} parent=1 // pred_check_branch
      %39 = sbr.rel (0) target = $region29
    $region28: #{neural_net_forward.1} parent=1 // pred_region
      _
    $region29: #{neural_net_forward.1} parent=1 // pred_fallthru
      _
    // Predicated region
    $region30: #{neural_net_forward.1} parent=1 // pred_check
      _
    $region31: #{neural_net_forward.1} parent=1 // pred_check_branch
      %41 = sbr.rel (0) target = $region33
    $region32: #{neural_net_forward.1} parent=1 // pred_region
      _
    $region33: #{neural_net_forward.1} parent=1 // pred_fallthru
      _
    // Predicated region
    $region34: #{neural_net_forward.1} parent=1 // pred_check
      _
    $region35: #{neural_net_forward.1} parent=1 // pred_check_branch
      %43 = sbr.rel (0) target = $region37
    $region36: #{neural_net_forward.1} parent=1 // pred_region
      _
    $region37: #{neural_net_forward.1} parent=1 // pred_fallthru
      _
    // Predicated region
    $region38: #{neural_net_forward.1} parent=1 // pred_check
      _
    $region39: #{neural_net_forward.1} parent=1 // pred_check_branch
      %45 = sbr.rel (0) target = $region41
    $region40: #{neural_net_forward.1} parent=1 // pred_region
      _
    $region41: #{neural_net_forward.1} parent=1 // pred_fallthru
      _
    // Predicated region
    $region42: #{neural_net_forward.1} parent=1 // pred_check
      _
    $region43: #{neural_net_forward.1} parent=1 // pred_check_branch
      %47 = sbr.rel (0) target = $region45
    $region44: #{neural_net_forward.1} parent=1 // pred_region
      %49 = vsyncadd [#allocation8], 0
      %s50 = sshll.u32 %s10, 4
      %s51 = int_to_ptr.hbm [resolvable:$true] %s50
      %s52 = sshll.u32 [#allocation7], 4
      %s53 = int_to_ptr.vmem [resolvable:$true] %s52
      %58 = dma.hbm_to_vmem [thread:$0]  %s51, 512, %s53, [#allocation8], 128, 128, 8
    $region45: #{neural_net_forward.1} parent=1 // pred_fallthru
      _
    // Predicated region
    $region46: #{neural_net_forward.1} parent=1 // pred_check
      _
    $region47: #{neural_net_forward.1} parent=1 // pred_check_branch
      %60 = sbr.rel (0) target = $region49
    $region48: #{neural_net_forward.1} parent=1 // pred_region
      _
    $region49: #{neural_net_forward.1} parent=1 // pred_fallthru
      _
    // Predicated region
    $region50: #{neural_net_forward.1} parent=1 // pred_check
      _
    $region51: #{neural_net_forward.1} parent=1 // pred_check_branch
      %62 = sbr.rel (0) target = $region53
    $region52: #{neural_net_forward.1} parent=1 // pred_region
      %64 = vsyncadd [#allocation10], 0
      %s66 = sshll.u32 %s12, 4
      %s67 = int_to_ptr.hbm [resolvable:$true] %s66
      %s68 = sshll.u32 [#allocation9], 4
      %s69 = int_to_ptr.vmem [resolvable:$true] %s68
      %71 = dma.hbm_to_vmem [thread:$0]  %s67, 16, %s69, [#allocation10]
    $region53: #{neural_net_forward.1} parent=1 // pred_fallthru
      _
    // Predicated region
    $region54: #{neural_net_forward.1} parent=1 // pred_check
      _
    $region55: #{neural_net_forward.1} parent=1 // pred_check_branch
      %73 = sbr.rel (0) target = $region57
    $region56: #{neural_net_forward.1} parent=1 // pred_region
      _
    $region57: #{neural_net_forward.1} parent=1 // pred_fallthru
      _
    // Predicated region
    $region58: #{neural_net_forward.1} parent=1 // pred_check
      _
    $region59: #{neural_net_forward.1} parent=1 // pred_check_branch
      %75 = sbr.rel (0) target = $region61
    $region60: #{neural_net_forward.1} parent=1 // pred_region
      _
    $region61: #{neural_net_forward.1} parent=1 // pred_fallthru
      _
    // Predicated region
    $region62: #{neural_net_forward.1} parent=1 // pred_check
      _
    $region63: #{neural_net_forward.1} parent=1 // pred_check_branch
      %77 = sbr.rel (0) target = $region65
    $region64: #{neural_net_forward.1} parent=1 // pred_region
      _
    $region65: #{neural_net_forward.1} parent=1 // pred_fallthru
      _
    // Predicated region
    $region66: #{neural_net_forward.1} parent=1 // pred_check
      _
    $region67: #{neural_net_forward.1} parent=1 // pred_check_branch
      %79 = sbr.rel (0) target = $region69
    $region68: #{neural_net_forward.1} parent=1 // pred_region
      _
    $region69: #{neural_net_forward.1} parent=1 // pred_fallthru
      _
    // Predicated region
    $region70: #{neural_net_forward.1} parent=1 // pred_check
      _
    $region71: #{neural_net_forward.1} parent=1 // pred_check_branch
      %81 = sbr.rel (0) target = $region73
    $region72: #{neural_net_forward.1} parent=1 // pred_region
      %83 = dma.done [#allocation8], 512
    $region73: #{neural_net_forward.1} parent=1 // pred_fallthru
      _
    // Predicated region
    $region74: #{neural_net_forward.1} parent=1 // pred_check
      _
    $region75: #{neural_net_forward.1} parent=1 // pred_check_branch
      %85 = sbr.rel (0) target = $region77
    $region76: #{neural_net_forward.1} parent=1 // pred_region
      %87 = dma.done [#allocation10], 16
    $region77: #{neural_net_forward.1} parent=1 // pred_fallthru
      _
    %v88 = vld [vmem:[%s0] sm:$0xff]
    %v89 = vld [vmem:[%s0 + $0x8] sm:$0xff]
    %v90 = vld [vmem:[%s1] sm:$0xff]
    %v91 = vld [vmem:[%s1 + $0x8] sm:$0xff]
    %v92 = vld [vmem:[%s1 + $0x10] sm:$0xff]
    %v93 = vld [vmem:[%s1 + $0x18] sm:$0xff]
    %v94 = vld [vmem:[%s5] sm:$0x1]
    %v96 = vperm.slane %v94, 0
    %vm98 = vcmask 261120
    %v100 = vsel %vm98, %v88, 0
    %v103 = vsel %vm98, %v89, 0
    %105 = vmatpush.msra.mxu0 0.0
    %106 = vmatpush.msra.mxu0 0.0
    %107 = vmatpush.msra.mxu0 0.0
    %108 = vmatpush.msra.mxu0 0.0
    %109 = vmatpush.msra.mxu0 0.0
    %110 = vmatpush.msra.mxu0 0.0
    %111 = vmatpush.msra.mxu0 0.0
    %112 = vmatpush.msra.mxu0 0.0
    %113 = vmatpush.msra.mxu0 0.0
    %114 = vmatpush.msra.mxu0 0.0
    %115 = vmatpush.msra.mxu0 0.0
    %116 = vmatpush.msra.mxu0 0.0
    %117 = vmatpush.msra.mxu0 %v93
    %118 = vmatpush.msra.mxu0 %v92
    %119 = vmatpush.msra.mxu0 %v91
    %120 = vmatpush.msra.mxu0 %v90
    %121 = vmatmul.f32.gmra.mxu0 %v100
    %v122 = vpop.f32.mrf.mxu0
    %v123 = vadd.f32 %v96, %v122
    %124 = vmatmul.f32.gmra.mxu0 %v103
    %v125 = vpop.f32.mrf.mxu0
    %v126 = vadd.f32 %v96, %v125
    %127 = vdwg.mxu0
    %128 = vst [vmem:[#allocation2] sm:$0xff] %v123
    %129 = vst [vmem:[#allocation2 + $0x8] sm:$0xff] %v126
    %v130 = vld [vmem:[%s2] sm:$0xff]
    %v131 = vld [vmem:[%s2 + $0x8] sm:$0xff]
    %v132 = vld [vmem:[%s2 + $0x10] sm:$0xff]
    %v133 = vld [vmem:[%s2 + $0x18] sm:$0xff]
    %v134 = vld [vmem:[%s6] sm:$0x1]
    %v136 = vperm.slane %v134, 0
    %138 = vmatpush.msra.mxu0 0.0
    %139 = vmatpush.msra.mxu0 0.0
    %140 = vmatpush.msra.mxu0 0.0
    %141 = vmatpush.msra.mxu0 0.0
    %142 = vmatpush.msra.mxu0 0.0
    %143 = vmatpush.msra.mxu0 0.0
    %144 = vmatpush.msra.mxu0 0.0
    %145 = vmatpush.msra.mxu0 0.0
    %146 = vmatpush.msra.mxu0 0.0
    %147 = vmatpush.msra.mxu0 0.0
    %148 = vmatpush.msra.mxu0 0.0
    %149 = vmatpush.msra.mxu0 0.0
    %150 = vmatpush.msra.mxu0 %v133
    %151 = vmatpush.msra.mxu0 %v132
    %152 = vmatpush.msra.mxu0 %v131
    %153 = vmatpush.msra.mxu0 %v130
    %154 = vmatmul.f32.gmra.mxu0 %v100
    %v155 = vpop.f32.mrf.mxu0
    %v156 = vadd.f32 %v136, %v155
    %157 = vmatmul.f32.gmra.mxu0 %v103
    %v158 = vpop.f32.mrf.mxu0
    %v159 = vadd.f32 %v136, %v158
    %160 = vdwg.mxu0
    %161 = vst [vmem:[#allocation3] sm:$0xff] %v156
    %162 = vst [vmem:[#allocation3 + $0x8] sm:$0xff] %v159
    %v163 = vld [vmem:[%s3] sm:$0xff]
    %v164 = vld [vmem:[%s3 + $0x8] sm:$0xff]
    %v165 = vld [vmem:[%s3 + $0x10] sm:$0xff]
    %v166 = vld [vmem:[%s3 + $0x18] sm:$0xff]
    %v167 = vld [vmem:[%s4] sm:$0xff]
    %v168 = vld [vmem:[%s4 + $0x8] sm:$0xff]
    %v169 = vld [vmem:[%s4 + $0x10] sm:$0xff]
    %v170 = vld [vmem:[%s4 + $0x18] sm:$0xff]
    %v171 = vld [vmem:[#allocation2] sm:$0x3]
    %v173 = vsel %vm98, 0.0, 0
    %175 = vmatpush.msra.mxu0 0.0
    %176 = vmatpush.msra.mxu0 0.0
    %177 = vmatpush.msra.mxu0 0.0
    %178 = vmatpush.msra.mxu0 0.0
    %179 = vmatpush.msra.mxu0 0.0
    %180 = vmatpush.msra.mxu0 0.0
    %181 = vmatpush.msra.mxu0 0.0
    %182 = vmatpush.msra.mxu0 0.0
    %183 = vmatpush.msra.mxu0 0.0
    %184 = vmatpush.msra.mxu0 0.0
    %185 = vmatpush.msra.mxu0 0.0
    %186 = vmatpush.msra.mxu0 0.0
    %187 = vmatpush.msra.mxu0 %v166
    %188 = vmatpush.msra.mxu0 %v165
    %189 = vmatpush.msra.mxu0 %v164
    %190 = vmatpush.msra.mxu0 %v163
    %191 = vmatmul.f32.gmra.mxu0 %v173
    %v192 = vpop.f32.mrf.mxu0
    %v193 = vadd.f32 0.0, %v192
    %194 = vdwg.mxu0
    %v195 = vadd.f32 %v171, %v193
    %v196 = vxor.u32 %v195, 2147483648
    %v197 = vmul.f32 %v196, 1.442695
    %v198 = vpow.pop %v197
    %v199 = vadd.f32 %v198, 1.0
    %v200 = vrcp.pop %v199
    %v201 = vmul.f32 %v199, %v200
    %v202 = vsub.f32 1.0, %v201
    %v203 = vmul.f32 %v200, %v202
    %v204 = vadd.f32 %v200, %v203
    %vm205 = vweird.f32 %v199
    %vm206 = vweird.f32 %v200
    %vm207 = vmor %vm205, %vm206
    %v208 = vsel %vm207, %v200, %v204
    %v209 = vand.u32 2147483647, %v199
    %vm210 = vcmp.eq.f32.partialorder %v209, 8.507059e+37
    %v211 = vand.u32 %v199, 2147483648
    %v212 = vor.u32 1.1754944e-38, %v211
    %v213 = vsel %vm210, %v212, %v208
    %v214 = vmul.f32 1.0, %v213
    %v215 = vtanh.pop %v195
    %v216 = vmul.f32 %v214, 0.0
    %218 = vrot.lane.b32.xlu0 %v215, 32
    %v219 = vpop.permute.xlu0 %218
    %v221 = vmul.f32 %v214, %v219
    %223 = vrot.lane.b32.xlu0 %v221, 32
    %v224 = vpop.permute.xlu0 %223
    %v226 = vadd.f32 %v216, %v224
    %v227 = vtanh.pop %v226
    %229 = vrot.lane.b32.xlu0 %v227, 32
    %v230 = vpop.permute.xlu0 %229
    %v232 = vmul.f32 %v214, %v230
    %v233 = vld [vmem:[#allocation3 + $0xe] sm:$0x3]
    %234 = vmatpush.msra.mxu0 0.0
    %235 = vmatpush.msra.mxu0 0.0
    %236 = vmatpush.msra.mxu0 0.0
    %237 = vmatpush.msra.mxu0 0.0
    %238 = vmatpush.msra.mxu0 0.0
    %239 = vmatpush.msra.mxu0 0.0
    %240 = vmatpush.msra.mxu0 0.0
    %241 = vmatpush.msra.mxu0 0.0
    %242 = vmatpush.msra.mxu0 0.0
    %243 = vmatpush.msra.mxu0 0.0
    %244 = vmatpush.msra.mxu0 0.0
    %245 = vmatpush.msra.mxu0 0.0
    %246 = vmatpush.msra.mxu0 %v170
    %247 = vmatpush.msra.mxu0 %v169
    %248 = vmatpush.msra.mxu0 %v168
    %249 = vmatpush.msra.mxu0 %v167
    %250 = vmatmul.f32.gmra.mxu0 %v173
    %v251 = vpop.f32.mrf.mxu0
    %v252 = vadd.f32 0.0, %v251
    %253 = vdwg.mxu0
    %v254 = vadd.f32 %v233, %v252
    %v255 = vxor.u32 %v254, 2147483648
    %v256 = vmul.f32 %v255, 1.442695
    %v257 = vpow.pop %v256
    %v258 = vadd.f32 %v257, 1.0
    %v259 = vrcp.pop %v258
    %v260 = vmul.f32 %v258, %v259
    %v261 = vsub.f32 1.0, %v260
    %v262 = vmul.f32 %v259, %v261
    %v263 = vadd.f32 %v259, %v262
    %vm264 = vweird.f32 %v258
    %vm265 = vweird.f32 %v259
    %vm266 = vmor %vm264, %vm265
    %v267 = vsel %vm266, %v259, %v263
    %v268 = vand.u32 2147483647, %v258
    %vm269 = vcmp.eq.f32.partialorder %v268, 8.507059e+37
    %v270 = vand.u32 %v258, 2147483648
    %v271 = vor.u32 1.1754944e-38, %v270
    %v272 = vsel %vm269, %v271, %v267
    %v273 = vmul.f32 1.0, %v272
    %v274 = vtanh.pop %v254
    %v275 = vmul.f32 %v273, 0.0
    %277 = vrot.lane.b32.xlu0 %v274, 32
    %v278 = vpop.permute.xlu0 %277
    %v280 = vmul.f32 %v273, %v278
    %282 = vrot.lane.b32.xlu0 %v280, 32
    %v283 = vpop.permute.xlu0 %282
    %v285 = vadd.f32 %v275, %v283
    %v286 = vtanh.pop %v285
    %288 = vrot.lane.b32.xlu0 %v286, 32
    %v289 = vpop.permute.xlu0 %288
    %v291 = vmul.f32 %v273, %v289
    %293 = vrot.lane.b32.xlu0 %v232, 64
    %v294 = vpop.permute.xlu0 %293
    %vm296 = vcmask 254976
    %297 = vst.msk [vmem:[#allocation4] sm:$0x3] %vm296, %v294
    %299 = vrot.lane.b32.xlu0 %v291, 64
    %v300 = vpop.permute.xlu0 %299
    %302 = vst.msk [vmem:[#allocation5 + $0xe] sm:$0x3] %vm296, %v300
    %v303 = vld [vmem:[#allocation2 + $0x2] sm:$0x3]
    %v304 = vsel %vm98, %v294, 0
    %306 = vmatpush.msra.mxu0 0.0
    %307 = vmatpush.msra.mxu0 0.0
    %308 = vmatpush.msra.mxu0 0.0
    %309 = vmatpush.msra.mxu0 0.0
    %310 = vmatpush.msra.mxu0 0.0
    %311 = vmatpush.msra.mxu0 0.0
    %312 = vmatpush.msra.mxu0 0.0
    %313 = vmatpush.msra.mxu0 0.0
    %314 = vmatpush.msra.mxu0 0.0
    %315 = vmatpush.msra.mxu0 0.0
    %316 = vmatpush.msra.mxu0 0.0
    %317 = vmatpush.msra.mxu0 0.0
    %318 = vmatpush.msra.mxu0 %v166
    %319 = vmatpush.msra.mxu0 %v165
    %320 = vmatpush.msra.mxu0 %v164
    %321 = vmatpush.msra.mxu0 %v163
    %322 = vmatmul.f32.gmra.mxu0 %v304
    %v323 = vpop.f32.mrf.mxu0
    %v324 = vadd.f32 0.0, %v323
    %325 = vdwg.mxu0
    %v326 = vadd.f32 %v303, %v324
    %v327 = vxor.u32 %v326, 2147483648
    %v328 = vmul.f32 %v327, 1.442695
    %v329 = vpow.pop %v328
    %v330 = vadd.f32 %v329, 1.0
    %v331 = vrcp.pop %v330
    %v332 = vmul.f32 %v330, %v331
    %v333 = vsub.f32 1.0, %v332
    %v334 = vmul.f32 %v331, %v333
    %v335 = vadd.f32 %v331, %v334
    %vm336 = vweird.f32 %v330
    %vm337 = vweird.f32 %v331
    %vm338 = vmor %vm336, %vm337
    %v339 = vsel %vm338, %v331, %v335
    %v340 = vand.u32 2147483647, %v330
    %vm341 = vcmp.eq.f32.partialorder %v340, 8.507059e+37
    %v342 = vand.u32 %v330, 2147483648
    %v343 = vor.u32 1.1754944e-38, %v342
    %v344 = vsel %vm341, %v343, %v339
    %v345 = vmul.f32 1.0, %v344
    %v346 = vtanh.pop %v326
    %v347 = vmul.f32 %v345, %v226
    %349 = vrot.lane.b32.xlu0 %v346, 32
    %v350 = vpop.permute.xlu0 %349
    %v352 = vmul.f32 %v345, %v350
    %354 = vrot.lane.b32.xlu0 %v352, 32
    %v355 = vpop.permute.xlu0 %354
    %v357 = vadd.f32 %v347, %v355
    %v358 = vtanh.pop %v357
    %360 = vrot.lane.b32.xlu0 %v358, 32
    %v361 = vpop.permute.xlu0 %360
    %v363 = vmul.f32 %v345, %v361
    %v364 = vld [vmem:[#allocation3 + $0xc] sm:$0x3]
    %v365 = vsel %vm98, %v300, 0
    %367 = vmatpush.msra.mxu0 0.0
    %368 = vmatpush.msra.mxu0 0.0
    %369 = vmatpush.msra.mxu0 0.0
    %370 = vmatpush.msra.mxu0 0.0
    %371 = vmatpush.msra.mxu0 0.0
    %372 = vmatpush.msra.mxu0 0.0
    %373 = vmatpush.msra.mxu0 0.0
    %374 = vmatpush.msra.mxu0 0.0
    %375 = vmatpush.msra.mxu0 0.0
    %376 = vmatpush.msra.mxu0 0.0
    %377 = vmatpush.msra.mxu0 0.0
    %378 = vmatpush.msra.mxu0 0.0
    %379 = vmatpush.msra.mxu0 %v170
    %380 = vmatpush.msra.mxu0 %v169
    %381 = vmatpush.msra.mxu0 %v168
    %382 = vmatpush.msra.mxu0 %v167
    %383 = vmatmul.f32.gmra.mxu0 %v365
    %v384 = vpop.f32.mrf.mxu0
    %v385 = vadd.f32 0.0, %v384
    %386 = vdwg.mxu0
    %v387 = vadd.f32 %v364, %v385
    %v388 = vxor.u32 %v387, 2147483648
    %v389 = vmul.f32 %v388, 1.442695
    %v390 = vpow.pop %v389
    %v391 = vadd.f32 %v390, 1.0
    %v392 = vrcp.pop %v391
    %v393 = vmul.f32 %v391, %v392
    %v394 = vsub.f32 1.0, %v393
    %v395 = vmul.f32 %v392, %v394
    %v396 = vadd.f32 %v392, %v395
    %vm397 = vweird.f32 %v391
    %vm398 = vweird.f32 %v392
    %vm399 = vmor %vm397, %vm398
    %v400 = vsel %vm399, %v392, %v396
    %v401 = vand.u32 2147483647, %v391
    %vm402 = vcmp.eq.f32.partialorder %v401, 8.507059e+37
    %v403 = vand.u32 %v391, 2147483648
    %v404 = vor.u32 1.1754944e-38, %v403
    %v405 = vsel %vm402, %v404, %v400
    %v406 = vmul.f32 1.0, %v405
    %v407 = vtanh.pop %v387
    %v408 = vmul.f32 %v406, %v285
    %410 = vrot.lane.b32.xlu0 %v407, 32
    %v411 = vpop.permute.xlu0 %410
    %v413 = vmul.f32 %v406, %v411
    %415 = vrot.lane.b32.xlu0 %v413, 32
    %v416 = vpop.permute.xlu0 %415
    %v418 = vadd.f32 %v408, %v416
    %v419 = vtanh.pop %v418
    %421 = vrot.lane.b32.xlu0 %v419, 32
    %v422 = vpop.permute.xlu0 %421
    %v424 = vmul.f32 %v406, %v422
    %426 = vrot.lane.b32.xlu0 %v363, 64
    %v427 = vpop.permute.xlu0 %426
    %429 = vst.msk [vmem:[#allocation4 + $0x2] sm:$0x3] %vm296, %v427
    %431 = vrot.lane.b32.xlu0 %v424, 64
    %v432 = vpop.permute.xlu0 %431
    %434 = vst.msk [vmem:[#allocation5 + $0xc] sm:$0x3] %vm296, %v432
    %v435 = vld [vmem:[#allocation2 + $0x4] sm:$0x3]
    %v436 = vsel %vm98, %v427, 0
    %438 = vmatpush.msra.mxu0 0.0
    %439 = vmatpush.msra.mxu0 0.0
    %440 = vmatpush.msra.mxu0 0.0
    %441 = vmatpush.msra.mxu0 0.0
    %442 = vmatpush.msra.mxu0 0.0
    %443 = vmatpush.msra.mxu0 0.0
    %444 = vmatpush.msra.mxu0 0.0
    %445 = vmatpush.msra.mxu0 0.0
    %446 = vmatpush.msra.mxu0 0.0
    %447 = vmatpush.msra.mxu0 0.0
    %448 = vmatpush.msra.mxu0 0.0
    %449 = vmatpush.msra.mxu0 0.0
    %450 = vmatpush.msra.mxu0 %v166
    %451 = vmatpush.msra.mxu0 %v165
    %452 = vmatpush.msra.mxu0 %v164
    %453 = vmatpush.msra.mxu0 %v163
    %454 = vmatmul.f32.gmra.mxu0 %v436
    %v455 = vpop.f32.mrf.mxu0
    %v456 = vadd.f32 0.0, %v455
    %457 = vdwg.mxu0
    %v458 = vadd.f32 %v435, %v456
    %v459 = vxor.u32 %v458, 2147483648
    %v460 = vmul.f32 %v459, 1.442695
    %v461 = vpow.pop %v460
    %v462 = vadd.f32 %v461, 1.0
    %v463 = vrcp.pop %v462
    %v464 = vmul.f32 %v462, %v463
    %v465 = vsub.f32 1.0, %v464
    %v466 = vmul.f32 %v463, %v465
    %v467 = vadd.f32 %v463, %v466
    %vm468 = vweird.f32 %v462
    %vm469 = vweird.f32 %v463
    %vm470 = vmor %vm468, %vm469
    %v471 = vsel %vm470, %v463, %v467
    %v472 = vand.u32 2147483647, %v462
    %vm473 = vcmp.eq.f32.partialorder %v472, 8.507059e+37
    %v474 = vand.u32 %v462, 2147483648
    %v475 = vor.u32 1.1754944e-38, %v474
    %v476 = vsel %vm473, %v475, %v471
    %v477 = vmul.f32 1.0, %v476
    %v478 = vtanh.pop %v458
    %v479 = vmul.f32 %v477, %v357
    %481 = vrot.lane.b32.xlu0 %v478, 32
    %v482 = vpop.permute.xlu0 %481
    %v484 = vmul.f32 %v477, %v482
    %486 = vrot.lane.b32.xlu0 %v484, 32
    %v487 = vpop.permute.xlu0 %486
    %v489 = vadd.f32 %v479, %v487
    %v490 = vtanh.pop %v489
    %492 = vrot.lane.b32.xlu0 %v490, 32
    %v493 = vpop.permute.xlu0 %492
    %v495 = vmul.f32 %v477, %v493
    %v496 = vld [vmem:[#allocation3 + $0xa] sm:$0x3]
    %v497 = vsel %vm98, %v432, 0
    %499 = vmatpush.msra.mxu0 0.0
    %500 = vmatpush.msra.mxu0 0.0
    %501 = vmatpush.msra.mxu0 0.0
    %502 = vmatpush.msra.mxu0 0.0
    %503 = vmatpush.msra.mxu0 0.0
    %504 = vmatpush.msra.mxu0 0.0
    %505 = vmatpush.msra.mxu0 0.0
    %506 = vmatpush.msra.mxu0 0.0
    %507 = vmatpush.msra.mxu0 0.0
    %508 = vmatpush.msra.mxu0 0.0
    %509 = vmatpush.msra.mxu0 0.0
    %510 = vmatpush.msra.mxu0 0.0
    %511 = vmatpush.msra.mxu0 %v170
    %512 = vmatpush.msra.mxu0 %v169
    %513 = vmatpush.msra.mxu0 %v168
    %514 = vmatpush.msra.mxu0 %v167
    %515 = vmatmul.f32.gmra.mxu0 %v497
    %v516 = vpop.f32.mrf.mxu0
    %v517 = vadd.f32 0.0, %v516
    %518 = vdwg.mxu0
    %v519 = vadd.f32 %v496, %v517
    %v520 = vxor.u32 %v519, 2147483648
    %v521 = vmul.f32 %v520, 1.442695
    %v522 = vpow.pop %v521
    %v523 = vadd.f32 %v522, 1.0
    %v524 = vrcp.pop %v523
    %v525 = vmul.f32 %v523, %v524
    %v526 = vsub.f32 1.0, %v525
    %v527 = vmul.f32 %v524, %v526
    %v528 = vadd.f32 %v524, %v527
    %vm529 = vweird.f32 %v523
    %vm530 = vweird.f32 %v524
    %vm531 = vmor %vm529, %vm530
    %v532 = vsel %vm531, %v524, %v528
    %v533 = vand.u32 2147483647, %v523
    %vm534 = vcmp.eq.f32.partialorder %v533, 8.507059e+37
    %v535 = vand.u32 %v523, 2147483648
    %v536 = vor.u32 1.1754944e-38, %v535
    %v537 = vsel %vm534, %v536, %v532
    %v538 = vmul.f32 1.0, %v537
    %v539 = vtanh.pop %v519
    %v540 = vmul.f32 %v538, %v418
    %542 = vrot.lane.b32.xlu0 %v539, 32
    %v543 = vpop.permute.xlu0 %542
    %v545 = vmul.f32 %v538, %v543
    %547 = vrot.lane.b32.xlu0 %v545, 32
    %v548 = vpop.permute.xlu0 %547
    %v550 = vadd.f32 %v540, %v548
    %v551 = vtanh.pop %v550
    %553 = vrot.lane.b32.xlu0 %v551, 32
    %v554 = vpop.permute.xlu0 %553
    %v556 = vmul.f32 %v538, %v554
    %558 = vrot.lane.b32.xlu0 %v495, 64
    %v559 = vpop.permute.xlu0 %558
    %561 = vst.msk [vmem:[#allocation4 + $0x4] sm:$0x3] %vm296, %v559
    %563 = vrot.lane.b32.xlu0 %v556, 64
    %v564 = vpop.permute.xlu0 %563
    %566 = vst.msk [vmem:[#allocation5 + $0xa] sm:$0x3] %vm296, %v564
    %v567 = vld [vmem:[#allocation2 + $0x6] sm:$0x3]
    %v568 = vsel %vm98, %v559, 0
    %570 = vmatpush.msra.mxu0 0.0
    %571 = vmatpush.msra.mxu0 0.0
    %572 = vmatpush.msra.mxu0 0.0
    %573 = vmatpush.msra.mxu0 0.0
    %574 = vmatpush.msra.mxu0 0.0
    %575 = vmatpush.msra.mxu0 0.0
    %576 = vmatpush.msra.mxu0 0.0
    %577 = vmatpush.msra.mxu0 0.0
    %578 = vmatpush.msra.mxu0 0.0
    %579 = vmatpush.msra.mxu0 0.0
    %580 = vmatpush.msra.mxu0 0.0
    %581 = vmatpush.msra.mxu0 0.0
    %582 = vmatpush.msra.mxu0 %v166
    %583 = vmatpush.msra.mxu0 %v165
    %584 = vmatpush.msra.mxu0 %v164
    %585 = vmatpush.msra.mxu0 %v163
    %586 = vmatmul.f32.gmra.mxu0 %v568
    %v587 = vpop.f32.mrf.mxu0
    %v588 = vadd.f32 0.0, %v587
    %589 = vdwg.mxu0
    %v590 = vadd.f32 %v567, %v588
    %v591 = vxor.u32 %v590, 2147483648
    %v592 = vmul.f32 %v591, 1.442695
    %v593 = vpow.pop %v592
    %v594 = vadd.f32 %v593, 1.0
    %v595 = vrcp.pop %v594
    %v596 = vmul.f32 %v594, %v595
    %v597 = vsub.f32 1.0, %v596
    %v598 = vmul.f32 %v595, %v597
    %v599 = vadd.f32 %v595, %v598
    %vm600 = vweird.f32 %v594
    %vm601 = vweird.f32 %v595
    %vm602 = vmor %vm600, %vm601
    %v603 = vsel %vm602, %v595, %v599
    %v604 = vand.u32 2147483647, %v594
    %vm605 = vcmp.eq.f32.partialorder %v604, 8.507059e+37
    %v606 = vand.u32 %v594, 2147483648
    %v607 = vor.u32 1.1754944e-38, %v606
    %v608 = vsel %vm605, %v607, %v603
    %v609 = vmul.f32 1.0, %v608
    %v610 = vtanh.pop %v590
    %v611 = vmul.f32 %v609, %v489
    %613 = vrot.lane.b32.xlu0 %v610, 32
    %v614 = vpop.permute.xlu0 %613
    %v616 = vmul.f32 %v609, %v614
    %618 = vrot.lane.b32.xlu0 %v616, 32
    %v619 = vpop.permute.xlu0 %618
    %v621 = vadd.f32 %v611, %v619
    %v622 = vtanh.pop %v621
    %624 = vrot.lane.b32.xlu0 %v622, 32
    %v625 = vpop.permute.xlu0 %624
    %v627 = vmul.f32 %v609, %v625
    %v628 = vld [vmem:[#allocation3 + $0x8] sm:$0x3]
    %v629 = vsel %vm98, %v564, 0
    %631 = vmatpush.msra.mxu0 0.0
    %632 = vmatpush.msra.mxu0 0.0
    %633 = vmatpush.msra.mxu0 0.0
    %634 = vmatpush.msra.mxu0 0.0
    %635 = vmatpush.msra.mxu0 0.0
    %636 = vmatpush.msra.mxu0 0.0
    %637 = vmatpush.msra.mxu0 0.0
    %638 = vmatpush.msra.mxu0 0.0
    %639 = vmatpush.msra.mxu0 0.0
    %640 = vmatpush.msra.mxu0 0.0
    %641 = vmatpush.msra.mxu0 0.0
    %642 = vmatpush.msra.mxu0 0.0
    %643 = vmatpush.msra.mxu0 %v170
    %644 = vmatpush.msra.mxu0 %v169
    %645 = vmatpush.msra.mxu0 %v168
    %646 = vmatpush.msra.mxu0 %v167
    %647 = vmatmul.f32.gmra.mxu0 %v629
    %v648 = vpop.f32.mrf.mxu0
    %v649 = vadd.f32 0.0, %v648
    %650 = vdwg.mxu0
    %v651 = vadd.f32 %v628, %v649
    %v652 = vxor.u32 %v651, 2147483648
    %v653 = vmul.f32 %v652, 1.442695
    %v654 = vpow.pop %v653
    %v655 = vadd.f32 %v654, 1.0
    %v656 = vrcp.pop %v655
    %v657 = vmul.f32 %v655, %v656
    %v658 = vsub.f32 1.0, %v657
    %v659 = vmul.f32 %v656, %v658
    %v660 = vadd.f32 %v656, %v659
    %vm661 = vweird.f32 %v655
    %vm662 = vweird.f32 %v656
    %vm663 = vmor %vm661, %vm662
    %v664 = vsel %vm663, %v656, %v660
    %v665 = vand.u32 2147483647, %v655
    %vm666 = vcmp.eq.f32.partialorder %v665, 8.507059e+37
    %v667 = vand.u32 %v655, 2147483648
    %v668 = vor.u32 1.1754944e-38, %v667
    %v669 = vsel %vm666, %v668, %v664
    %v670 = vmul.f32 1.0, %v669
    %v671 = vtanh.pop %v651
    %v672 = vmul.f32 %v670, %v550
    %674 = vrot.lane.b32.xlu0 %v671, 32
    %v675 = vpop.permute.xlu0 %674
    %v677 = vmul.f32 %v670, %v675
    %679 = vrot.lane.b32.xlu0 %v677, 32
    %v680 = vpop.permute.xlu0 %679
    %v682 = vadd.f32 %v672, %v680
    %v683 = vtanh.pop %v682
    %685 = vrot.lane.b32.xlu0 %v683, 32
    %v686 = vpop.permute.xlu0 %685
    %v688 = vmul.f32 %v670, %v686
    %690 = vrot.lane.b32.xlu0 %v627, 64
    %v691 = vpop.permute.xlu0 %690
    %693 = vst.msk [vmem:[#allocation4 + $0x6] sm:$0x3] %vm296, %v691
    %695 = vrot.lane.b32.xlu0 %v688, 64
    %v696 = vpop.permute.xlu0 %695
    %698 = vst.msk [vmem:[#allocation5 + $0x8] sm:$0x3] %vm296, %v696
    %v699 = vld [vmem:[#allocation2 + $0x8] sm:$0x3]
    %v700 = vsel %vm98, %v691, 0
    %702 = vmatpush.msra.mxu0 0.0
    %703 = vmatpush.msra.mxu0 0.0
    %704 = vmatpush.msra.mxu0 0.0
    %705 = vmatpush.msra.mxu0 0.0
    %706 = vmatpush.msra.mxu0 0.0
    %707 = vmatpush.msra.mxu0 0.0
    %708 = vmatpush.msra.mxu0 0.0
    %709 = vmatpush.msra.mxu0 0.0
    %710 = vmatpush.msra.mxu0 0.0
    %711 = vmatpush.msra.mxu0 0.0
    %712 = vmatpush.msra.mxu0 0.0
    %713 = vmatpush.msra.mxu0 0.0
    %714 = vmatpush.msra.mxu0 %v166
    %715 = vmatpush.msra.mxu0 %v165
    %716 = vmatpush.msra.mxu0 %v164
    %717 = vmatpush.msra.mxu0 %v163
    %718 = vmatmul.f32.gmra.mxu0 %v700
    %v719 = vpop.f32.mrf.mxu0
    %v720 = vadd.f32 0.0, %v719
    %721 = vdwg.mxu0
    %v722 = vadd.f32 %v699, %v720
    %v723 = vxor.u32 %v722, 2147483648
    %v724 = vmul.f32 %v723, 1.442695
    %v725 = vpow.pop %v724
    %v726 = vadd.f32 %v725, 1.0
    %v727 = vrcp.pop %v726
    %v728 = vmul.f32 %v726, %v727
    %v729 = vsub.f32 1.0, %v728
    %v730 = vmul.f32 %v727, %v729
    %v731 = vadd.f32 %v727, %v730
    %vm732 = vweird.f32 %v726
    %vm733 = vweird.f32 %v727
    %vm734 = vmor %vm732, %vm733
    %v735 = vsel %vm734, %v727, %v731
    %v736 = vand.u32 2147483647, %v726
    %vm737 = vcmp.eq.f32.partialorder %v736, 8.507059e+37
    %v738 = vand.u32 %v726, 2147483648
    %v739 = vor.u32 1.1754944e-38, %v738
    %v740 = vsel %vm737, %v739, %v735
    %v741 = vmul.f32 1.0, %v740
    %v742 = vtanh.pop %v722
    %v743 = vmul.f32 %v741, %v621
    %745 = vrot.lane.b32.xlu0 %v742, 32
    %v746 = vpop.permute.xlu0 %745
    %v748 = vmul.f32 %v741, %v746
    %750 = vrot.lane.b32.xlu0 %v748, 32
    %v751 = vpop.permute.xlu0 %750
    %v753 = vadd.f32 %v743, %v751
    %v754 = vtanh.pop %v753
    %756 = vrot.lane.b32.xlu0 %v754, 32
    %v757 = vpop.permute.xlu0 %756
    %v759 = vmul.f32 %v741, %v757
    %v760 = vld [vmem:[#allocation3 + $0x6] sm:$0x3]
    %v761 = vsel %vm98, %v696, 0
    %763 = vmatpush.msra.mxu0 0.0
    %764 = vmatpush.msra.mxu0 0.0
    %765 = vmatpush.msra.mxu0 0.0
    %766 = vmatpush.msra.mxu0 0.0
    %767 = vmatpush.msra.mxu0 0.0
    %768 = vmatpush.msra.mxu0 0.0
    %769 = vmatpush.msra.mxu0 0.0
    %770 = vmatpush.msra.mxu0 0.0
    %771 = vmatpush.msra.mxu0 0.0
    %772 = vmatpush.msra.mxu0 0.0
    %773 = vmatpush.msra.mxu0 0.0
    %774 = vmatpush.msra.mxu0 0.0
    %775 = vmatpush.msra.mxu0 %v170
    %776 = vmatpush.msra.mxu0 %v169
    %777 = vmatpush.msra.mxu0 %v168
    %778 = vmatpush.msra.mxu0 %v167
    %779 = vmatmul.f32.gmra.mxu0 %v761
    %v780 = vpop.f32.mrf.mxu0
    %v781 = vadd.f32 0.0, %v780
    %782 = vdwg.mxu0
    %v783 = vadd.f32 %v760, %v781
    %v784 = vxor.u32 %v783, 2147483648
    %v785 = vmul.f32 %v784, 1.442695
    %v786 = vpow.pop %v785
    %v787 = vadd.f32 %v786, 1.0
    %v788 = vrcp.pop %v787
    %v789 = vmul.f32 %v787, %v788
    %v790 = vsub.f32 1.0, %v789
    %v791 = vmul.f32 %v788, %v790
    %v792 = vadd.f32 %v788, %v791
    %vm793 = vweird.f32 %v787
    %vm794 = vweird.f32 %v788
    %vm795 = vmor %vm793, %vm794
    %v796 = vsel %vm795, %v788, %v792
    %v797 = vand.u32 2147483647, %v787
    %vm798 = vcmp.eq.f32.partialorder %v797, 8.507059e+37
    %v799 = vand.u32 %v787, 2147483648
    %v800 = vor.u32 1.1754944e-38, %v799
    %v801 = vsel %vm798, %v800, %v796
    %v802 = vmul.f32 1.0, %v801
    %v803 = vtanh.pop %v783
    %v804 = vmul.f32 %v802, %v682
    %806 = vrot.lane.b32.xlu0 %v803, 32
    %v807 = vpop.permute.xlu0 %806
    %v809 = vmul.f32 %v802, %v807
    %811 = vrot.lane.b32.xlu0 %v809, 32
    %v812 = vpop.permute.xlu0 %811
    %v814 = vadd.f32 %v804, %v812
    %v815 = vtanh.pop %v814
    %817 = vrot.lane.b32.xlu0 %v815, 32
    %v818 = vpop.permute.xlu0 %817
    %v820 = vmul.f32 %v802, %v818
    %822 = vrot.lane.b32.xlu0 %v759, 64
    %v823 = vpop.permute.xlu0 %822
    %825 = vst.msk [vmem:[#allocation4 + $0x8] sm:$0x3] %vm296, %v823
    %827 = vrot.lane.b32.xlu0 %v820, 64
    %v828 = vpop.permute.xlu0 %827
    %830 = vst.msk [vmem:[#allocation5 + $0x6] sm:$0x3] %vm296, %v828
    %v831 = vld [vmem:[#allocation2 + $0xa] sm:$0x3]
    %v832 = vsel %vm98, %v823, 0
    %834 = vmatpush.msra.mxu0 0.0
    %835 = vmatpush.msra.mxu0 0.0
    %836 = vmatpush.msra.mxu0 0.0
    %837 = vmatpush.msra.mxu0 0.0
    %838 = vmatpush.msra.mxu0 0.0
    %839 = vmatpush.msra.mxu0 0.0
    %840 = vmatpush.msra.mxu0 0.0
    %841 = vmatpush.msra.mxu0 0.0
    %842 = vmatpush.msra.mxu0 0.0
    %843 = vmatpush.msra.mxu0 0.0
    %844 = vmatpush.msra.mxu0 0.0
    %845 = vmatpush.msra.mxu0 0.0
    %846 = vmatpush.msra.mxu0 %v166
    %847 = vmatpush.msra.mxu0 %v165
    %848 = vmatpush.msra.mxu0 %v164
    %849 = vmatpush.msra.mxu0 %v163
    %850 = vmatmul.f32.gmra.mxu0 %v832
    %v851 = vpop.f32.mrf.mxu0
    %v852 = vadd.f32 0.0, %v851
    %853 = vdwg.mxu0
    %v854 = vadd.f32 %v831, %v852
    %v855 = vxor.u32 %v854, 2147483648
    %v856 = vmul.f32 %v855, 1.442695
    %v857 = vpow.pop %v856
    %v858 = vadd.f32 %v857, 1.0
    %v859 = vrcp.pop %v858
    %v860 = vmul.f32 %v858, %v859
    %v861 = vsub.f32 1.0, %v860
    %v862 = vmul.f32 %v859, %v861
    %v863 = vadd.f32 %v859, %v862
    %vm864 = vweird.f32 %v858
    %vm865 = vweird.f32 %v859
    %vm866 = vmor %vm864, %vm865
    %v867 = vsel %vm866, %v859, %v863
    %v868 = vand.u32 2147483647, %v858
    %vm869 = vcmp.eq.f32.partialorder %v868, 8.507059e+37
    %v870 = vand.u32 %v858, 2147483648
    %v871 = vor.u32 1.1754944e-38, %v870
    %v872 = vsel %vm869, %v871, %v867
    %v873 = vmul.f32 1.0, %v872
    %v874 = vtanh.pop %v854
    %v875 = vmul.f32 %v873, %v753
    %877 = vrot.lane.b32.xlu0 %v874, 32
    %v878 = vpop.permute.xlu0 %877
    %v880 = vmul.f32 %v873, %v878
    %882 = vrot.lane.b32.xlu0 %v880, 32
    %v883 = vpop.permute.xlu0 %882
    %v885 = vadd.f32 %v875, %v883
    %v886 = vtanh.pop %v885
    %888 = vrot.lane.b32.xlu0 %v886, 32
    %v889 = vpop.permute.xlu0 %888
    %v891 = vmul.f32 %v873, %v889
    %v892 = vld [vmem:[#allocation3 + $0x4] sm:$0x3]
    %v893 = vsel %vm98, %v828, 0
    %895 = vmatpush.msra.mxu0 0.0
    %896 = vmatpush.msra.mxu0 0.0
    %897 = vmatpush.msra.mxu0 0.0
    %898 = vmatpush.msra.mxu0 0.0
    %899 = vmatpush.msra.mxu0 0.0
    %900 = vmatpush.msra.mxu0 0.0
    %901 = vmatpush.msra.mxu0 0.0
    %902 = vmatpush.msra.mxu0 0.0
    %903 = vmatpush.msra.mxu0 0.0
    %904 = vmatpush.msra.mxu0 0.0
    %905 = vmatpush.msra.mxu0 0.0
    %906 = vmatpush.msra.mxu0 0.0
    %907 = vmatpush.msra.mxu0 %v170
    %908 = vmatpush.msra.mxu0 %v169
    %909 = vmatpush.msra.mxu0 %v168
    %910 = vmatpush.msra.mxu0 %v167
    %911 = vmatmul.f32.gmra.mxu0 %v893
    %v912 = vpop.f32.mrf.mxu0
    %v913 = vadd.f32 0.0, %v912
    %914 = vdwg.mxu0
    %v915 = vadd.f32 %v892, %v913
    %v916 = vxor.u32 %v915, 2147483648
    %v917 = vmul.f32 %v916, 1.442695
    %v918 = vpow.pop %v917
    %v919 = vadd.f32 %v918, 1.0
    %v920 = vrcp.pop %v919
    %v921 = vmul.f32 %v919, %v920
    %v922 = vsub.f32 1.0, %v921
    %v923 = vmul.f32 %v920, %v922
    %v924 = vadd.f32 %v920, %v923
    %vm925 = vweird.f32 %v919
    %vm926 = vweird.f32 %v920
    %vm927 = vmor %vm925, %vm926
    %v928 = vsel %vm927, %v920, %v924
    %v929 = vand.u32 2147483647, %v919
    %vm930 = vcmp.eq.f32.partialorder %v929, 8.507059e+37
    %v931 = vand.u32 %v919, 2147483648
    %v932 = vor.u32 1.1754944e-38, %v931
    %v933 = vsel %vm930, %v932, %v928
    %v934 = vmul.f32 1.0, %v933
    %v935 = vtanh.pop %v915
    %v936 = vmul.f32 %v934, %v814
    %938 = vrot.lane.b32.xlu0 %v935, 32
    %v939 = vpop.permute.xlu0 %938
    %v941 = vmul.f32 %v934, %v939
    %943 = vrot.lane.b32.xlu0 %v941, 32
    %v944 = vpop.permute.xlu0 %943
    %v946 = vadd.f32 %v936, %v944
    %v947 = vtanh.pop %v946
    %949 = vrot.lane.b32.xlu0 %v947, 32
    %v950 = vpop.permute.xlu0 %949
    %v952 = vmul.f32 %v934, %v950
    %954 = vrot.lane.b32.xlu0 %v891, 64
    %v955 = vpop.permute.xlu0 %954
    %957 = vst.msk [vmem:[#allocation4 + $0xa] sm:$0x3] %vm296, %v955
    %959 = vrot.lane.b32.xlu0 %v952, 64
    %v960 = vpop.permute.xlu0 %959
    %962 = vst.msk [vmem:[#allocation5 + $0x4] sm:$0x3] %vm296, %v960
    %v963 = vld [vmem:[#allocation2 + $0xc] sm:$0x3]
    %v964 = vsel %vm98, %v955, 0
    %966 = vmatpush.msra.mxu0 0.0
    %967 = vmatpush.msra.mxu0 0.0
    %968 = vmatpush.msra.mxu0 0.0
    %969 = vmatpush.msra.mxu0 0.0
    %970 = vmatpush.msra.mxu0 0.0
    %971 = vmatpush.msra.mxu0 0.0
    %972 = vmatpush.msra.mxu0 0.0
    %973 = vmatpush.msra.mxu0 0.0
    %974 = vmatpush.msra.mxu0 0.0
    %975 = vmatpush.msra.mxu0 0.0
    %976 = vmatpush.msra.mxu0 0.0
    %977 = vmatpush.msra.mxu0 0.0
    %978 = vmatpush.msra.mxu0 %v166
    %979 = vmatpush.msra.mxu0 %v165
    %980 = vmatpush.msra.mxu0 %v164
    %981 = vmatpush.msra.mxu0 %v163
    %982 = vmatmul.f32.gmra.mxu0 %v964
    %v983 = vpop.f32.mrf.mxu0
    %v984 = vadd.f32 0.0, %v983
    %985 = vdwg.mxu0
    %v986 = vadd.f32 %v963, %v984
    %v987 = vxor.u32 %v986, 2147483648
    %v988 = vmul.f32 %v987, 1.442695
    %v989 = vpow.pop %v988
    %v990 = vadd.f32 %v989, 1.0
    %v991 = vrcp.pop %v990
    %v992 = vmul.f32 %v990, %v991
    %v993 = vsub.f32 1.0, %v992
    %v994 = vmul.f32 %v991, %v993
    %v995 = vadd.f32 %v991, %v994
    %vm996 = vweird.f32 %v990
    %vm997 = vweird.f32 %v991
    %vm998 = vmor %vm996, %vm997
    %v999 = vsel %vm998, %v991, %v995
    %v1000 = vand.u32 2147483647, %v990
    %vm1001 = vcmp.eq.f32.partialorder %v1000, 8.507059e+37
    %v1002 = vand.u32 %v990, 2147483648
    %v1003 = vor.u32 1.1754944e-38, %v1002
    %v1004 = vsel %vm1001, %v1003, %v999
    %v1005 = vmul.f32 1.0, %v1004
    %v1006 = vtanh.pop %v986
    %v1007 = vmul.f32 %v1005, %v885
    %1009 = vrot.lane.b32.xlu0 %v1006, 32
    %v1010 = vpop.permute.xlu0 %1009
    %v1012 = vmul.f32 %v1005, %v1010
    %1014 = vrot.lane.b32.xlu0 %v1012, 32
    %v1015 = vpop.permute.xlu0 %1014
    %v1017 = vadd.f32 %v1007, %v1015
    %v1018 = vtanh.pop %v1017
    %1020 = vrot.lane.b32.xlu0 %v1018, 32
    %v1021 = vpop.permute.xlu0 %1020
    %v1023 = vmul.f32 %v1005, %v1021
    %v1024 = vld [vmem:[#allocation3 + $0x2] sm:$0x3]
    %v1025 = vsel %vm98, %v960, 0
    %1027 = vmatpush.msra.mxu0 0.0
    %1028 = vmatpush.msra.mxu0 0.0
    %1029 = vmatpush.msra.mxu0 0.0
    %1030 = vmatpush.msra.mxu0 0.0
    %1031 = vmatpush.msra.mxu0 0.0
    %1032 = vmatpush.msra.mxu0 0.0
    %1033 = vmatpush.msra.mxu0 0.0
    %1034 = vmatpush.msra.mxu0 0.0
    %1035 = vmatpush.msra.mxu0 0.0
    %1036 = vmatpush.msra.mxu0 0.0
    %1037 = vmatpush.msra.mxu0 0.0
    %1038 = vmatpush.msra.mxu0 0.0
    %1039 = vmatpush.msra.mxu0 %v170
    %1040 = vmatpush.msra.mxu0 %v169
    %1041 = vmatpush.msra.mxu0 %v168
    %1042 = vmatpush.msra.mxu0 %v167
    %1043 = vmatmul.f32.gmra.mxu0 %v1025
    %v1044 = vpop.f32.mrf.mxu0
    %v1045 = vadd.f32 0.0, %v1044
    %1046 = vdwg.mxu0
    %v1047 = vadd.f32 %v1024, %v1045
    %v1048 = vxor.u32 %v1047, 2147483648
    %v1049 = vmul.f32 %v1048, 1.442695
    %v1050 = vpow.pop %v1049
    %v1051 = vadd.f32 %v1050, 1.0
    %v1052 = vrcp.pop %v1051
    %v1053 = vmul.f32 %v1051, %v1052
    %v1054 = vsub.f32 1.0, %v1053
    %v1055 = vmul.f32 %v1052, %v1054
    %v1056 = vadd.f32 %v1052, %v1055
    %vm1057 = vweird.f32 %v1051
    %vm1058 = vweird.f32 %v1052
    %vm1059 = vmor %vm1057, %vm1058
    %v1060 = vsel %vm1059, %v1052, %v1056
    %v1061 = vand.u32 2147483647, %v1051
    %vm1062 = vcmp.eq.f32.partialorder %v1061, 8.507059e+37
    %v1063 = vand.u32 %v1051, 2147483648
    %v1064 = vor.u32 1.1754944e-38, %v1063
    %v1065 = vsel %vm1062, %v1064, %v1060
    %v1066 = vmul.f32 1.0, %v1065
    %v1067 = vtanh.pop %v1047
    %v1068 = vmul.f32 %v1066, %v946
    %1070 = vrot.lane.b32.xlu0 %v1067, 32
    %v1071 = vpop.permute.xlu0 %1070
    %v1073 = vmul.f32 %v1066, %v1071
    %1075 = vrot.lane.b32.xlu0 %v1073, 32
    %v1076 = vpop.permute.xlu0 %1075
    %v1078 = vadd.f32 %v1068, %v1076
    %v1079 = vtanh.pop %v1078
    %1081 = vrot.lane.b32.xlu0 %v1079, 32
    %v1082 = vpop.permute.xlu0 %1081
    %v1084 = vmul.f32 %v1066, %v1082
    %1086 = vrot.lane.b32.xlu0 %v1023, 64
    %v1087 = vpop.permute.xlu0 %1086
    %1089 = vst.msk [vmem:[#allocation4 + $0xc] sm:$0x3] %vm296, %v1087
    %1091 = vrot.lane.b32.xlu0 %v1084, 64
    %v1092 = vpop.permute.xlu0 %1091
    %1094 = vst.msk [vmem:[#allocation5 + $0x2] sm:$0x3] %vm296, %v1092
    %v1095 = vld [vmem:[#allocation2 + $0xe] sm:$0x3]
    %v1096 = vsel %vm98, %v1087, 0
    %1098 = vmatpush.msra.mxu0 0.0
    %1099 = vmatpush.msra.mxu0 0.0
    %1100 = vmatpush.msra.mxu0 0.0
    %1101 = vmatpush.msra.mxu0 0.0
    %1102 = vmatpush.msra.mxu0 0.0
    %1103 = vmatpush.msra.mxu0 0.0
    %1104 = vmatpush.msra.mxu0 0.0
    %1105 = vmatpush.msra.mxu0 0.0
    %1106 = vmatpush.msra.mxu0 0.0
    %1107 = vmatpush.msra.mxu0 0.0
    %1108 = vmatpush.msra.mxu0 0.0
    %1109 = vmatpush.msra.mxu0 0.0
    %1110 = vmatpush.msra.mxu0 %v166
    %1111 = vmatpush.msra.mxu0 %v165
    %1112 = vmatpush.msra.mxu0 %v164
    %1113 = vmatpush.msra.mxu0 %v163
    %1114 = vmatmul.f32.gmra.mxu0 %v1096
    %v1115 = vpop.f32.mrf.mxu0
    %v1116 = vadd.f32 0.0, %v1115
    %1117 = vdwg.mxu0
    %v1118 = vadd.f32 %v1095, %v1116
    %v1119 = vxor.u32 %v1118, 2147483648
    %v1120 = vmul.f32 %v1119, 1.442695
    %v1121 = vpow.pop %v1120
    %v1122 = vadd.f32 %v1121, 1.0
    %v1123 = vrcp.pop %v1122
    %v1124 = vmul.f32 %v1122, %v1123
    %v1125 = vsub.f32 1.0, %v1124
    %v1126 = vmul.f32 %v1123, %v1125
    %v1127 = vadd.f32 %v1123, %v1126
    %vm1128 = vweird.f32 %v1122
    %vm1129 = vweird.f32 %v1123
    %vm1130 = vmor %vm1128, %vm1129
    %v1131 = vsel %vm1130, %v1123, %v1127
    %v1132 = vand.u32 2147483647, %v1122
    %vm1133 = vcmp.eq.f32.partialorder %v1132, 8.507059e+37
    %v1134 = vand.u32 %v1122, 2147483648
    %v1135 = vor.u32 1.1754944e-38, %v1134
    %v1136 = vsel %vm1133, %v1135, %v1131
    %v1137 = vmul.f32 1.0, %v1136
    %v1138 = vtanh.pop %v1118
    %v1139 = vmul.f32 %v1137, %v1017
    %1141 = vrot.lane.b32.xlu0 %v1138, 32
    %v1142 = vpop.permute.xlu0 %1141
    %v1144 = vmul.f32 %v1137, %v1142
    %1146 = vrot.lane.b32.xlu0 %v1144, 32
    %v1147 = vpop.permute.xlu0 %1146
    %v1149 = vadd.f32 %v1139, %v1147
    %v1150 = vtanh.pop %v1149
    %1152 = vrot.lane.b32.xlu0 %v1150, 32
    %v1153 = vpop.permute.xlu0 %1152
    %v1155 = vmul.f32 %v1137, %v1153
    %v1156 = vld [vmem:[#allocation3] sm:$0x3]
    %v1157 = vsel %vm98, %v1092, 0
    %1159 = vmatpush.msra.mxu0 0.0
    %1160 = vmatpush.msra.mxu0 0.0
    %1161 = vmatpush.msra.mxu0 0.0
    %1162 = vmatpush.msra.mxu0 0.0
    %1163 = vmatpush.msra.mxu0 0.0
    %1164 = vmatpush.msra.mxu0 0.0
    %1165 = vmatpush.msra.mxu0 0.0
    %1166 = vmatpush.msra.mxu0 0.0
    %1167 = vmatpush.msra.mxu0 0.0
    %1168 = vmatpush.msra.mxu0 0.0
    %1169 = vmatpush.msra.mxu0 0.0
    %1170 = vmatpush.msra.mxu0 0.0
    %1171 = vmatpush.msra.mxu0 %v170
    %1172 = vmatpush.msra.mxu0 %v169
    %1173 = vmatpush.msra.mxu0 %v168
    %1174 = vmatpush.msra.mxu0 %v167
    %1175 = vmatmul.f32.gmra.mxu0 %v1157
    %v1176 = vpop.f32.mrf.mxu0
    %v1177 = vadd.f32 0.0, %v1176
    %1178 = vdwg.mxu0
    %v1179 = vadd.f32 %v1156, %v1177
    %v1180 = vxor.u32 %v1179, 2147483648
    %v1181 = vmul.f32 %v1180, 1.442695
    %v1182 = vpow.pop %v1181
    %v1183 = vadd.f32 %v1182, 1.0
    %v1184 = vrcp.pop %v1183
    %v1185 = vmul.f32 %v1183, %v1184
    %v1186 = vsub.f32 1.0, %v1185
    %v1187 = vmul.f32 %v1184, %v1186
    %v1188 = vadd.f32 %v1184, %v1187
    %vm1189 = vweird.f32 %v1183
    %vm1190 = vweird.f32 %v1184
    %vm1191 = vmor %vm1189, %vm1190
    %v1192 = vsel %vm1191, %v1184, %v1188
    %v1193 = vand.u32 2147483647, %v1183
    %vm1194 = vcmp.eq.f32.partialorder %v1193, 8.507059e+37
    %v1195 = vand.u32 %v1183, 2147483648
    %v1196 = vor.u32 1.1754944e-38, %v1195
    %v1197 = vsel %vm1194, %v1196, %v1192
    %v1198 = vmul.f32 1.0, %v1197
    %v1199 = vtanh.pop %v1179
    %v1200 = vmul.f32 %v1198, %v1078
    %1202 = vrot.lane.b32.xlu0 %v1199, 32
    %v1203 = vpop.permute.xlu0 %1202
    %v1205 = vmul.f32 %v1198, %v1203
    %1207 = vrot.lane.b32.xlu0 %v1205, 32
    %v1208 = vpop.permute.xlu0 %1207
    %v1210 = vadd.f32 %v1200, %v1208
    %v1211 = vtanh.pop %v1210
    %1213 = vrot.lane.b32.xlu0 %v1211, 32
    %v1214 = vpop.permute.xlu0 %1213
    %v1216 = vmul.f32 %v1198, %v1214
    %1218 = vrot.lane.b32.xlu0 %v1155, 64
    %v1219 = vpop.permute.xlu0 %1218
    %1221 = vst.msk [vmem:[#allocation4 + $0xe] sm:$0x3] %vm296, %v1219
    %1223 = vrot.lane.b32.xlu0 %v1216, 64
    %v1224 = vpop.permute.xlu0 %1223
    %1226 = vst.msk [vmem:[#allocation5] sm:$0x3] %vm296, %v1224
    %v1227 = vld [vmem:[#allocation4] sm:$0xff]
    %v1228 = vld [vmem:[#allocation4 + $0x8] sm:$0xff]
    %v1229 = vld [vmem:[#allocation5] sm:$0xff]
    %v1230 = vld [vmem:[#allocation5 + $0x8] sm:$0xff]
    %v1231 = vld [vmem:[%s7] sm:$0xff]
    %v1232 = vld [vmem:[%s7 + $0x8] sm:$0xff]
    %v1233 = vld [vmem:[%s7 + $0x10] sm:$0xff]
    %v1234 = vld [vmem:[%s7 + $0x18] sm:$0xff]
    %v1235 = vld [vmem:[%s7 + $0x20] sm:$0xff]
    %v1236 = vld [vmem:[%s7 + $0x28] sm:$0xff]
    %v1237 = vld [vmem:[%s7 + $0x30] sm:$0xff]
    %v1238 = vld [vmem:[%s7 + $0x38] sm:$0xff]
    %v1240 = vsel %vm98, %v1229, 0
    %v1243 = vsel %vm98, %v1230, 0
    %1245 = vmatpush.msra.mxu0 0.0
    %1246 = vmatpush.msra.mxu0 0.0
    %1247 = vmatpush.msra.mxu0 0.0
    %1248 = vmatpush.msra.mxu0 0.0
    %1249 = vmatpush.msra.mxu0 0.0
    %1250 = vmatpush.msra.mxu0 0.0
    %1251 = vmatpush.msra.mxu0 0.0
    %1252 = vmatpush.msra.mxu0 0.0
    %1253 = vmatpush.msra.mxu0 0.0
    %1254 = vmatpush.msra.mxu0 0.0
    %1255 = vmatpush.msra.mxu0 0.0
    %1256 = vmatpush.msra.mxu0 0.0
    %1257 = vmatpush.msra.mxu0 %v1238
    %1258 = vmatpush.msra.mxu0 %v1237
    %1259 = vmatpush.msra.mxu0 %v1236
    %1260 = vmatpush.msra.mxu0 %v1235
    %1261 = vmatmul.f32.gmra.mxu0 %v1240
    %v1262 = vpop.f32.mrf.mxu0
    %v1263 = vadd.f32 0.0, %v1262
    %1264 = vmatmul.f32.gmra.mxu0 %v1243
    %v1265 = vpop.f32.mrf.mxu0
    %v1266 = vadd.f32 0.0, %v1265
    %1267 = vdwg.mxu0
    %v1269 = vsel %vm98, %v1227, 0
    %v1272 = vsel %vm98, %v1228, 0
    %1274 = vmatpush.msra.mxu0 0.0
    %1275 = vmatpush.msra.mxu0 0.0
    %1276 = vmatpush.msra.mxu0 0.0
    %1277 = vmatpush.msra.mxu0 0.0
    %1278 = vmatpush.msra.mxu0 0.0
    %1279 = vmatpush.msra.mxu0 0.0
    %1280 = vmatpush.msra.mxu0 0.0
    %1281 = vmatpush.msra.mxu0 0.0
    %1282 = vmatpush.msra.mxu0 0.0
    %1283 = vmatpush.msra.mxu0 0.0
    %1284 = vmatpush.msra.mxu0 0.0
    %1285 = vmatpush.msra.mxu0 0.0
    %1286 = vmatpush.msra.mxu0 %v1234
    %1287 = vmatpush.msra.mxu0 %v1233
    %1288 = vmatpush.msra.mxu0 %v1232
    %1289 = vmatpush.msra.mxu0 %v1231
    %1290 = vmatmul.f32.gmra.mxu0 %v1269
    %v1291 = vpop.f32.mrf.mxu0
    %v1292 = vadd.f32 %v1263, %v1291
    %1293 = vmatmul.f32.gmra.mxu0 %v1272
    %v1294 = vpop.f32.mrf.mxu0
    %v1295 = vadd.f32 %v1266, %v1294
    %1296 = vdwg.mxu0
    %v1297 = vld [vmem:[%s11] sm:$0x1]
    %v1299 = vperm.slane %v1297, 0
    %v1301 = vadd.f32 %v1292, %v1299
    %v1302 = vadd.f32 %v1295, %v1299
    %1303 = vst [vmem:[#allocation2] sm:$0xff] %v1301
    %1304 = vst [vmem:[#allocation2 + $0x8] sm:$0xff] %v1302
    %v1305 = vld [vmem:[%s8] sm:$0xff]
    %v1306 = vld [vmem:[%s8 + $0x8] sm:$0xff]
    %v1307 = vld [vmem:[%s8 + $0x10] sm:$0xff]
    %v1308 = vld [vmem:[%s8 + $0x18] sm:$0xff]
    %v1309 = vld [vmem:[%s8 + $0x20] sm:$0xff]
    %v1310 = vld [vmem:[%s8 + $0x28] sm:$0xff]
    %v1311 = vld [vmem:[%s8 + $0x30] sm:$0xff]
    %v1312 = vld [vmem:[%s8 + $0x38] sm:$0xff]
    %1313 = vmatpush.msra.mxu0 0.0
    %1314 = vmatpush.msra.mxu0 0.0
    %1315 = vmatpush.msra.mxu0 0.0
    %1316 = vmatpush.msra.mxu0 0.0
    %1317 = vmatpush.msra.mxu0 0.0
    %1318 = vmatpush.msra.mxu0 0.0
    %1319 = vmatpush.msra.mxu0 0.0
    %1320 = vmatpush.msra.mxu0 0.0
    %1321 = vmatpush.msra.mxu0 0.0
    %1322 = vmatpush.msra.mxu0 0.0
    %1323 = vmatpush.msra.mxu0 0.0
    %1324 = vmatpush.msra.mxu0 0.0
    %1325 = vmatpush.msra.mxu0 %v1312
    %1326 = vmatpush.msra.mxu0 %v1311
    %1327 = vmatpush.msra.mxu0 %v1310
    %1328 = vmatpush.msra.mxu0 %v1309
    %1329 = vmatmul.f32.gmra.mxu0 %v1240
    %v1330 = vpop.f32.mrf.mxu0
    %v1331 = vadd.f32 0.0, %v1330
    %1332 = vmatmul.f32.gmra.mxu0 %v1243
    %v1333 = vpop.f32.mrf.mxu0
    %v1334 = vadd.f32 0.0, %v1333
    %1335 = vdwg.mxu0
    %1336 = vmatpush.msra.mxu0 0.0
    %1337 = vmatpush.msra.mxu0 0.0
    %1338 = vmatpush.msra.mxu0 0.0
    %1339 = vmatpush.msra.mxu0 0.0
    %1340 = vmatpush.msra.mxu0 0.0
    %1341 = vmatpush.msra.mxu0 0.0
    %1342 = vmatpush.msra.mxu0 0.0
    %1343 = vmatpush.msra.mxu0 0.0
    %1344 = vmatpush.msra.mxu0 0.0
    %1345 = vmatpush.msra.mxu0 0.0
    %1346 = vmatpush.msra.mxu0 0.0
    %1347 = vmatpush.msra.mxu0 0.0
    %1348 = vmatpush.msra.mxu0 %v1308
    %1349 = vmatpush.msra.mxu0 %v1307
    %1350 = vmatpush.msra.mxu0 %v1306
    %1351 = vmatpush.msra.mxu0 %v1305
    %1352 = vmatmul.f32.gmra.mxu0 %v1269
    %v1353 = vpop.f32.mrf.mxu0
    %v1354 = vadd.f32 %v1331, %v1353
    %1355 = vmatmul.f32.gmra.mxu0 %v1272
    %v1356 = vpop.f32.mrf.mxu0
    %v1357 = vadd.f32 %v1334, %v1356
    %1358 = vdwg.mxu0
    %v1359 = vld [vmem:[#allocation9] sm:$0x1]
    %v1361 = vperm.slane %v1359, 0
    %v1363 = vadd.f32 %v1354, %v1361
    %v1364 = vadd.f32 %v1357, %v1361
    %1365 = vst [vmem:[#allocation3] sm:$0xff] %v1363
    %1366 = vst [vmem:[#allocation3 + $0x8] sm:$0xff] %v1364
    %v1367 = vld [vmem:[%s9] sm:$0xff]
    %v1368 = vld [vmem:[%s9 + $0x8] sm:$0xff]
    %v1369 = vld [vmem:[%s9 + $0x10] sm:$0xff]
    %v1370 = vld [vmem:[%s9 + $0x18] sm:$0xff]
    %v1371 = vld [vmem:[#allocation7] sm:$0xff]
    %v1372 = vld [vmem:[#allocation7 + $0x8] sm:$0xff]
    %v1373 = vld [vmem:[#allocation7 + $0x10] sm:$0xff]
    %v1374 = vld [vmem:[#allocation7 + $0x18] sm:$0xff]
    %v1375 = vld [vmem:[#allocation2] sm:$0x3]
    %1376 = vmatpush.msra.mxu0 0.0
    %1377 = vmatpush.msra.mxu0 0.0
    %1378 = vmatpush.msra.mxu0 0.0
    %1379 = vmatpush.msra.mxu0 0.0
    %1380 = vmatpush.msra.mxu0 0.0
    %1381 = vmatpush.msra.mxu0 0.0
    %1382 = vmatpush.msra.mxu0 0.0
    %1383 = vmatpush.msra.mxu0 0.0
    %1384 = vmatpush.msra.mxu0 0.0
    %1385 = vmatpush.msra.mxu0 0.0
    %1386 = vmatpush.msra.mxu0 0.0
    %1387 = vmatpush.msra.mxu0 0.0
    %1388 = vmatpush.msra.mxu0 %v1370
    %1389 = vmatpush.msra.mxu0 %v1369
    %1390 = vmatpush.msra.mxu0 %v1368
    %1391 = vmatpush.msra.mxu0 %v1367
    %1392 = vmatmul.f32.gmra.mxu0 %v173
    %v1393 = vpop.f32.mrf.mxu0
    %v1394 = vadd.f32 0.0, %v1393
    %1395 = vdwg.mxu0
    %v1396 = vadd.f32 %v1375, %v1394
    %v1397 = vxor.u32 %v1396, 2147483648
    %v1398 = vmul.f32 %v1397, 1.442695
    %v1399 = vpow.pop %v1398
    %v1400 = vadd.f32 %v1399, 1.0
    %v1401 = vrcp.pop %v1400
    %v1402 = vmul.f32 %v1400, %v1401
    %v1403 = vsub.f32 1.0, %v1402
    %v1404 = vmul.f32 %v1401, %v1403
    %v1405 = vadd.f32 %v1401, %v1404
    %vm1406 = vweird.f32 %v1400
    %vm1407 = vweird.f32 %v1401
    %vm1408 = vmor %vm1406, %vm1407
    %v1409 = vsel %vm1408, %v1401, %v1405
    %v1410 = vand.u32 2147483647, %v1400
    %vm1411 = vcmp.eq.f32.partialorder %v1410, 8.507059e+37
    %v1412 = vand.u32 %v1400, 2147483648
    %v1413 = vor.u32 1.1754944e-38, %v1412
    %v1414 = vsel %vm1411, %v1413, %v1409
    %v1415 = vmul.f32 1.0, %v1414
    %v1416 = vtanh.pop %v1396
    %v1417 = vmul.f32 %v1415, 0.0
    %1419 = vrot.lane.b32.xlu0 %v1416, 32
    %v1420 = vpop.permute.xlu0 %1419
    %v1422 = vmul.f32 %v1415, %v1420
    %1424 = vrot.lane.b32.xlu0 %v1422, 32
    %v1425 = vpop.permute.xlu0 %1424
    %v1427 = vadd.f32 %v1417, %v1425
    %v1428 = vtanh.pop %v1427
    %1430 = vrot.lane.b32.xlu0 %v1428, 32
    %v1431 = vpop.permute.xlu0 %1430
    %v1433 = vmul.f32 %v1415, %v1431
    %v1434 = vld [vmem:[#allocation3 + $0xe] sm:$0x3]
    %1435 = vmatpush.msra.mxu0 0.0
    %1436 = vmatpush.msra.mxu0 0.0
    %1437 = vmatpush.msra.mxu0 0.0
    %1438 = vmatpush.msra.mxu0 0.0
    %1439 = vmatpush.msra.mxu0 0.0
    %1440 = vmatpush.msra.mxu0 0.0
    %1441 = vmatpush.msra.mxu0 0.0
    %1442 = vmatpush.msra.mxu0 0.0
    %1443 = vmatpush.msra.mxu0 0.0
    %1444 = vmatpush.msra.mxu0 0.0
    %1445 = vmatpush.msra.mxu0 0.0
    %1446 = vmatpush.msra.mxu0 0.0
    %1447 = vmatpush.msra.mxu0 %v1374
    %1448 = vmatpush.msra.mxu0 %v1373
    %1449 = vmatpush.msra.mxu0 %v1372
    %1450 = vmatpush.msra.mxu0 %v1371
    %1451 = vmatmul.f32.gmra.mxu0 %v173
    %v1452 = vpop.f32.mrf.mxu0
    %v1453 = vadd.f32 0.0, %v1452
    %1454 = vdwg.mxu0
    %v1455 = vadd.f32 %v1434, %v1453
    %v1456 = vxor.u32 %v1455, 2147483648
    %v1457 = vmul.f32 %v1456, 1.442695
    %v1458 = vpow.pop %v1457
    %v1459 = vadd.f32 %v1458, 1.0
    %v1460 = vrcp.pop %v1459
    %v1461 = vmul.f32 %v1459, %v1460
    %v1462 = vsub.f32 1.0, %v1461
    %v1463 = vmul.f32 %v1460, %v1462
    %v1464 = vadd.f32 %v1460, %v1463
    %vm1465 = vweird.f32 %v1459
    %vm1466 = vweird.f32 %v1460
    %vm1467 = vmor %vm1465, %vm1466
    %v1468 = vsel %vm1467, %v1460, %v1464
    %v1469 = vand.u32 2147483647, %v1459
    %vm1470 = vcmp.eq.f32.partialorder %v1469, 8.507059e+37
    %v1471 = vand.u32 %v1459, 2147483648
    %v1472 = vor.u32 1.1754944e-38, %v1471
    %v1473 = vsel %vm1470, %v1472, %v1468
    %v1474 = vmul.f32 1.0, %v1473
    %v1475 = vtanh.pop %v1455
    %v1476 = vmul.f32 %v1474, 0.0
    %1478 = vrot.lane.b32.xlu0 %v1475, 32
    %v1479 = vpop.permute.xlu0 %1478
    %v1481 = vmul.f32 %v1474, %v1479
    %1483 = vrot.lane.b32.xlu0 %v1481, 32
    %v1484 = vpop.permute.xlu0 %1483
    %v1486 = vadd.f32 %v1476, %v1484
    %v1487 = vtanh.pop %v1486
    %1489 = vrot.lane.b32.xlu0 %v1487, 32
    %v1490 = vpop.permute.xlu0 %1489
    %v1492 = vmul.f32 %v1474, %v1490
    %v1493 = vadd.f32 %v1433, 0.0
    %v1494 = vadd.f32 %v1492, 0.0
    %v1495 = vld [vmem:[#allocation2 + $0x2] sm:$0x3]
    %1497 = vrot.lane.b32.xlu0 %v1433, 64
    %v1498 = vpop.permute.xlu0 %1497
    %v1499 = vsel %vm98, %v1498, 0
    %1501 = vmatpush.msra.mxu0 0.0
    %1502 = vmatpush.msra.mxu0 0.0
    %1503 = vmatpush.msra.mxu0 0.0
    %1504 = vmatpush.msra.mxu0 0.0
    %1505 = vmatpush.msra.mxu0 0.0
    %1506 = vmatpush.msra.mxu0 0.0
    %1507 = vmatpush.msra.mxu0 0.0
    %1508 = vmatpush.msra.mxu0 0.0
    %1509 = vmatpush.msra.mxu0 0.0
    %1510 = vmatpush.msra.mxu0 0.0
    %1511 = vmatpush.msra.mxu0 0.0
    %1512 = vmatpush.msra.mxu0 0.0
    %1513 = vmatpush.msra.mxu0 %v1370
    %1514 = vmatpush.msra.mxu0 %v1369
    %1515 = vmatpush.msra.mxu0 %v1368
    %1516 = vmatpush.msra.mxu0 %v1367
    %1517 = vmatmul.f32.gmra.mxu0 %v1499
    %v1518 = vpop.f32.mrf.mxu0
    %v1519 = vadd.f32 0.0, %v1518
    %1520 = vdwg.mxu0
    %v1521 = vadd.f32 %v1495, %v1519
    %v1522 = vxor.u32 %v1521, 2147483648
    %v1523 = vmul.f32 %v1522, 1.442695
    %v1524 = vpow.pop %v1523
    %v1525 = vadd.f32 %v1524, 1.0
    %v1526 = vrcp.pop %v1525
    %v1527 = vmul.f32 %v1525, %v1526
    %v1528 = vsub.f32 1.0, %v1527
    %v1529 = vmul.f32 %v1526, %v1528
    %v1530 = vadd.f32 %v1526, %v1529
    %vm1531 = vweird.f32 %v1525
    %vm1532 = vweird.f32 %v1526
    %vm1533 = vmor %vm1531, %vm1532
    %v1534 = vsel %vm1533, %v1526, %v1530
    %v1535 = vand.u32 2147483647, %v1525
    %vm1536 = vcmp.eq.f32.partialorder %v1535, 8.507059e+37
    %v1537 = vand.u32 %v1525, 2147483648
    %v1538 = vor.u32 1.1754944e-38, %v1537
    %v1539 = vsel %vm1536, %v1538, %v1534
    %v1540 = vmul.f32 1.0, %v1539
    %v1541 = vtanh.pop %v1521
    %v1542 = vmul.f32 %v1540, %v1427
    %1544 = vrot.lane.b32.xlu0 %v1541, 32
    %v1545 = vpop.permute.xlu0 %1544
    %v1547 = vmul.f32 %v1540, %v1545
    %1549 = vrot.lane.b32.xlu0 %v1547, 32
    %v1550 = vpop.permute.xlu0 %1549
    %v1552 = vadd.f32 %v1542, %v1550
    %v1553 = vtanh.pop %v1552
    %1555 = vrot.lane.b32.xlu0 %v1553, 32
    %v1556 = vpop.permute.xlu0 %1555
    %v1558 = vmul.f32 %v1540, %v1556
    %v1559 = vld [vmem:[#allocation3 + $0xc] sm:$0x3]
    %1561 = vrot.lane.b32.xlu0 %v1492, 64
    %v1562 = vpop.permute.xlu0 %1561
    %v1563 = vsel %vm98, %v1562, 0
    %1565 = vmatpush.msra.mxu0 0.0
    %1566 = vmatpush.msra.mxu0 0.0
    %1567 = vmatpush.msra.mxu0 0.0
    %1568 = vmatpush.msra.mxu0 0.0
    %1569 = vmatpush.msra.mxu0 0.0
    %1570 = vmatpush.msra.mxu0 0.0
    %1571 = vmatpush.msra.mxu0 0.0
    %1572 = vmatpush.msra.mxu0 0.0
    %1573 = vmatpush.msra.mxu0 0.0
    %1574 = vmatpush.msra.mxu0 0.0
    %1575 = vmatpush.msra.mxu0 0.0
    %1576 = vmatpush.msra.mxu0 0.0
    %1577 = vmatpush.msra.mxu0 %v1374
    %1578 = vmatpush.msra.mxu0 %v1373
    %1579 = vmatpush.msra.mxu0 %v1372
    %1580 = vmatpush.msra.mxu0 %v1371
    %1581 = vmatmul.f32.gmra.mxu0 %v1563
    %v1582 = vpop.f32.mrf.mxu0
    %v1583 = vadd.f32 0.0, %v1582
    %1584 = vdwg.mxu0
    %v1585 = vadd.f32 %v1559, %v1583
    %v1586 = vxor.u32 %v1585, 2147483648
    %v1587 = vmul.f32 %v1586, 1.442695
    %v1588 = vpow.pop %v1587
    %v1589 = vadd.f32 %v1588, 1.0
    %v1590 = vrcp.pop %v1589
    %v1591 = vmul.f32 %v1589, %v1590
    %v1592 = vsub.f32 1.0, %v1591
    %v1593 = vmul.f32 %v1590, %v1592
    %v1594 = vadd.f32 %v1590, %v1593
    %vm1595 = vweird.f32 %v1589
    %vm1596 = vweird.f32 %v1590
    %vm1597 = vmor %vm1595, %vm1596
    %v1598 = vsel %vm1597, %v1590, %v1594
    %v1599 = vand.u32 2147483647, %v1589
    %vm1600 = vcmp.eq.f32.partialorder %v1599, 8.507059e+37
    %v1601 = vand.u32 %v1589, 2147483648
    %v1602 = vor.u32 1.1754944e-38, %v1601
    %v1603 = vsel %vm1600, %v1602, %v1598
    %v1604 = vmul.f32 1.0, %v1603
    %v1605 = vtanh.pop %v1585
    %v1606 = vmul.f32 %v1604, %v1486
    %1608 = vrot.lane.b32.xlu0 %v1605, 32
    %v1609 = vpop.permute.xlu0 %1608
    %v1611 = vmul.f32 %v1604, %v1609
    %1613 = vrot.lane.b32.xlu0 %v1611, 32
    %v1614 = vpop.permute.xlu0 %1613
    %v1616 = vadd.f32 %v1606, %v1614
    %v1617 = vtanh.pop %v1616
    %1619 = vrot.lane.b32.xlu0 %v1617, 32
    %v1620 = vpop.permute.xlu0 %1619
    %v1622 = vmul.f32 %v1604, %v1620
    %v1623 = vmax.f32 %v1433, %v1558
    %v1624 = vadd.f32 %v1493, %v1558
    %v1625 = vmax.f32 %v1492, %v1622
    %v1626 = vadd.f32 %v1494, %v1622
    %v1627 = vld [vmem:[#allocation2 + $0x4] sm:$0x3]
    %1629 = vrot.lane.b32.xlu0 %v1558, 64
    %v1630 = vpop.permute.xlu0 %1629
    %v1631 = vsel %vm98, %v1630, 0
    %1633 = vmatpush.msra.mxu0 0.0
    %1634 = vmatpush.msra.mxu0 0.0
    %1635 = vmatpush.msra.mxu0 0.0
    %1636 = vmatpush.msra.mxu0 0.0
    %1637 = vmatpush.msra.mxu0 0.0
    %1638 = vmatpush.msra.mxu0 0.0
    %1639 = vmatpush.msra.mxu0 0.0
    %1640 = vmatpush.msra.mxu0 0.0
    %1641 = vmatpush.msra.mxu0 0.0
    %1642 = vmatpush.msra.mxu0 0.0
    %1643 = vmatpush.msra.mxu0 0.0
    %1644 = vmatpush.msra.mxu0 0.0
    %1645 = vmatpush.msra.mxu0 %v1370
    %1646 = vmatpush.msra.mxu0 %v1369
    %1647 = vmatpush.msra.mxu0 %v1368
    %1648 = vmatpush.msra.mxu0 %v1367
    %1649 = vmatmul.f32.gmra.mxu0 %v1631
    %v1650 = vpop.f32.mrf.mxu0
    %v1651 = vadd.f32 0.0, %v1650
    %1652 = vdwg.mxu0
    %v1653 = vadd.f32 %v1627, %v1651
    %v1654 = vxor.u32 %v1653, 2147483648
    %v1655 = vmul.f32 %v1654, 1.442695
    %v1656 = vpow.pop %v1655
    %v1657 = vadd.f32 %v1656, 1.0
    %v1658 = vrcp.pop %v1657
    %v1659 = vmul.f32 %v1657, %v1658
    %v1660 = vsub.f32 1.0, %v1659
    %v1661 = vmul.f32 %v1658, %v1660
    %v1662 = vadd.f32 %v1658, %v1661
    %vm1663 = vweird.f32 %v1657
    %vm1664 = vweird.f32 %v1658
    %vm1665 = vmor %vm1663, %vm1664
    %v1666 = vsel %vm1665, %v1658, %v1662
    %v1667 = vand.u32 2147483647, %v1657
    %vm1668 = vcmp.eq.f32.partialorder %v1667, 8.507059e+37
    %v1669 = vand.u32 %v1657, 2147483648
    %v1670 = vor.u32 1.1754944e-38, %v1669
    %v1671 = vsel %vm1668, %v1670, %v1666
    %v1672 = vmul.f32 1.0, %v1671
    %v1673 = vtanh.pop %v1653
    %v1674 = vmul.f32 %v1672, %v1552
    %1676 = vrot.lane.b32.xlu0 %v1673, 32
    %v1677 = vpop.permute.xlu0 %1676
    %v1679 = vmul.f32 %v1672, %v1677
    %1681 = vrot.lane.b32.xlu0 %v1679, 32
    %v1682 = vpop.permute.xlu0 %1681
    %v1684 = vadd.f32 %v1674, %v1682
    %v1685 = vtanh.pop %v1684
    %1687 = vrot.lane.b32.xlu0 %v1685, 32
    %v1688 = vpop.permute.xlu0 %1687
    %v1690 = vmul.f32 %v1672, %v1688
    %v1691 = vld [vmem:[#allocation3 + $0xa] sm:$0x3]
    %1693 = vrot.lane.b32.xlu0 %v1622, 64
    %v1694 = vpop.permute.xlu0 %1693
    %v1695 = vsel %vm98, %v1694, 0
    %1697 = vmatpush.msra.mxu0 0.0
    %1698 = vmatpush.msra.mxu0 0.0
    %1699 = vmatpush.msra.mxu0 0.0
    %1700 = vmatpush.msra.mxu0 0.0
    %1701 = vmatpush.msra.mxu0 0.0
    %1702 = vmatpush.msra.mxu0 0.0
    %1703 = vmatpush.msra.mxu0 0.0
    %1704 = vmatpush.msra.mxu0 0.0
    %1705 = vmatpush.msra.mxu0 0.0
    %1706 = vmatpush.msra.mxu0 0.0
    %1707 = vmatpush.msra.mxu0 0.0
    %1708 = vmatpush.msra.mxu0 0.0
    %1709 = vmatpush.msra.mxu0 %v1374
    %1710 = vmatpush.msra.mxu0 %v1373
    %1711 = vmatpush.msra.mxu0 %v1372
    %1712 = vmatpush.msra.mxu0 %v1371
    %1713 = vmatmul.f32.gmra.mxu0 %v1695
    %v1714 = vpop.f32.mrf.mxu0
    %v1715 = vadd.f32 0.0, %v1714
    %1716 = vdwg.mxu0
    %v1717 = vadd.f32 %v1691, %v1715
    %v1718 = vxor.u32 %v1717, 2147483648
    %v1719 = vmul.f32 %v1718, 1.442695
    %v1720 = vpow.pop %v1719
    %v1721 = vadd.f32 %v1720, 1.0
    %v1722 = vrcp.pop %v1721
    %v1723 = vmul.f32 %v1721, %v1722
    %v1724 = vsub.f32 1.0, %v1723
    %v1725 = vmul.f32 %v1722, %v1724
    %v1726 = vadd.f32 %v1722, %v1725
    %vm1727 = vweird.f32 %v1721
    %vm1728 = vweird.f32 %v1722
    %vm1729 = vmor %vm1727, %vm1728
    %v1730 = vsel %vm1729, %v1722, %v1726
    %v1731 = vand.u32 2147483647, %v1721
    %vm1732 = vcmp.eq.f32.partialorder %v1731, 8.507059e+37
    %v1733 = vand.u32 %v1721, 2147483648
    %v1734 = vor.u32 1.1754944e-38, %v1733
    %v1735 = vsel %vm1732, %v1734, %v1730
    %v1736 = vmul.f32 1.0, %v1735
    %v1737 = vtanh.pop %v1717
    %v1738 = vmul.f32 %v1736, %v1616
    %1740 = vrot.lane.b32.xlu0 %v1737, 32
    %v1741 = vpop.permute.xlu0 %1740
    %v1743 = vmul.f32 %v1736, %v1741
    %1745 = vrot.lane.b32.xlu0 %v1743, 32
    %v1746 = vpop.permute.xlu0 %1745
    %v1748 = vadd.f32 %v1738, %v1746
    %v1749 = vtanh.pop %v1748
    %1751 = vrot.lane.b32.xlu0 %v1749, 32
    %v1752 = vpop.permute.xlu0 %1751
    %v1754 = vmul.f32 %v1736, %v1752
    %v1755 = vmax.f32 %v1623, %v1690
    %v1756 = vadd.f32 %v1624, %v1690
    %v1757 = vmax.f32 %v1625, %v1754
    %v1758 = vadd.f32 %v1626, %v1754
    %v1759 = vld [vmem:[#allocation2 + $0x6] sm:$0x3]
    %1761 = vrot.lane.b32.xlu0 %v1690, 64
    %v1762 = vpop.permute.xlu0 %1761
    %v1763 = vsel %vm98, %v1762, 0
    %1765 = vmatpush.msra.mxu0 0.0
    %1766 = vmatpush.msra.mxu0 0.0
    %1767 = vmatpush.msra.mxu0 0.0
    %1768 = vmatpush.msra.mxu0 0.0
    %1769 = vmatpush.msra.mxu0 0.0
    %1770 = vmatpush.msra.mxu0 0.0
    %1771 = vmatpush.msra.mxu0 0.0
    %1772 = vmatpush.msra.mxu0 0.0
    %1773 = vmatpush.msra.mxu0 0.0
    %1774 = vmatpush.msra.mxu0 0.0
    %1775 = vmatpush.msra.mxu0 0.0
    %1776 = vmatpush.msra.mxu0 0.0
    %1777 = vmatpush.msra.mxu0 %v1370
    %1778 = vmatpush.msra.mxu0 %v1369
    %1779 = vmatpush.msra.mxu0 %v1368
    %1780 = vmatpush.msra.mxu0 %v1367
    %1781 = vmatmul.f32.gmra.mxu0 %v1763
    %v1782 = vpop.f32.mrf.mxu0
    %v1783 = vadd.f32 0.0, %v1782
    %1784 = vdwg.mxu0
    %v1785 = vadd.f32 %v1759, %v1783
    %v1786 = vxor.u32 %v1785, 2147483648
    %v1787 = vmul.f32 %v1786, 1.442695
    %v1788 = vpow.pop %v1787
    %v1789 = vadd.f32 %v1788, 1.0
    %v1790 = vrcp.pop %v1789
    %v1791 = vmul.f32 %v1789, %v1790
    %v1792 = vsub.f32 1.0, %v1791
    %v1793 = vmul.f32 %v1790, %v1792
    %v1794 = vadd.f32 %v1790, %v1793
    %vm1795 = vweird.f32 %v1789
    %vm1796 = vweird.f32 %v1790
    %vm1797 = vmor %vm1795, %vm1796
    %v1798 = vsel %vm1797, %v1790, %v1794
    %v1799 = vand.u32 2147483647, %v1789
    %vm1800 = vcmp.eq.f32.partialorder %v1799, 8.507059e+37
    %v1801 = vand.u32 %v1789, 2147483648
    %v1802 = vor.u32 1.1754944e-38, %v1801
    %v1803 = vsel %vm1800, %v1802, %v1798
    %v1804 = vmul.f32 1.0, %v1803
    %v1805 = vtanh.pop %v1785
    %v1806 = vmul.f32 %v1804, %v1684
    %1808 = vrot.lane.b32.xlu0 %v1805, 32
    %v1809 = vpop.permute.xlu0 %1808
    %v1811 = vmul.f32 %v1804, %v1809
    %1813 = vrot.lane.b32.xlu0 %v1811, 32
    %v1814 = vpop.permute.xlu0 %1813
    %v1816 = vadd.f32 %v1806, %v1814
    %v1817 = vtanh.pop %v1816
    %1819 = vrot.lane.b32.xlu0 %v1817, 32
    %v1820 = vpop.permute.xlu0 %1819
    %v1822 = vmul.f32 %v1804, %v1820
    %v1823 = vld [vmem:[#allocation3 + $0x8] sm:$0x3]
    %1825 = vrot.lane.b32.xlu0 %v1754, 64
    %v1826 = vpop.permute.xlu0 %1825
    %v1827 = vsel %vm98, %v1826, 0
    %1829 = vmatpush.msra.mxu0 0.0
    %1830 = vmatpush.msra.mxu0 0.0
    %1831 = vmatpush.msra.mxu0 0.0
    %1832 = vmatpush.msra.mxu0 0.0
    %1833 = vmatpush.msra.mxu0 0.0
    %1834 = vmatpush.msra.mxu0 0.0
    %1835 = vmatpush.msra.mxu0 0.0
    %1836 = vmatpush.msra.mxu0 0.0
    %1837 = vmatpush.msra.mxu0 0.0
    %1838 = vmatpush.msra.mxu0 0.0
    %1839 = vmatpush.msra.mxu0 0.0
    %1840 = vmatpush.msra.mxu0 0.0
    %1841 = vmatpush.msra.mxu0 %v1374
    %1842 = vmatpush.msra.mxu0 %v1373
    %1843 = vmatpush.msra.mxu0 %v1372
    %1844 = vmatpush.msra.mxu0 %v1371
    %1845 = vmatmul.f32.gmra.mxu0 %v1827
    %v1846 = vpop.f32.mrf.mxu0
    %v1847 = vadd.f32 0.0, %v1846
    %1848 = vdwg.mxu0
    %v1849 = vadd.f32 %v1823, %v1847
    %v1850 = vxor.u32 %v1849, 2147483648
    %v1851 = vmul.f32 %v1850, 1.442695
    %v1852 = vpow.pop %v1851
    %v1853 = vadd.f32 %v1852, 1.0
    %v1854 = vrcp.pop %v1853
    %v1855 = vmul.f32 %v1853, %v1854
    %v1856 = vsub.f32 1.0, %v1855
    %v1857 = vmul.f32 %v1854, %v1856
    %v1858 = vadd.f32 %v1854, %v1857
    %vm1859 = vweird.f32 %v1853
    %vm1860 = vweird.f32 %v1854
    %vm1861 = vmor %vm1859, %vm1860
    %v1862 = vsel %vm1861, %v1854, %v1858
    %v1863 = vand.u32 2147483647, %v1853
    %vm1864 = vcmp.eq.f32.partialorder %v1863, 8.507059e+37
    %v1865 = vand.u32 %v1853, 2147483648
    %v1866 = vor.u32 1.1754944e-38, %v1865
    %v1867 = vsel %vm1864, %v1866, %v1862
    %v1868 = vmul.f32 1.0, %v1867
    %v1869 = vtanh.pop %v1849
    %v1870 = vmul.f32 %v1868, %v1748
    %1872 = vrot.lane.b32.xlu0 %v1869, 32
    %v1873 = vpop.permute.xlu0 %1872
    %v1875 = vmul.f32 %v1868, %v1873
    %1877 = vrot.lane.b32.xlu0 %v1875, 32
    %v1878 = vpop.permute.xlu0 %1877
    %v1880 = vadd.f32 %v1870, %v1878
    %v1881 = vtanh.pop %v1880
    %1883 = vrot.lane.b32.xlu0 %v1881, 32
    %v1884 = vpop.permute.xlu0 %1883
    %v1886 = vmul.f32 %v1868, %v1884
    %v1887 = vmax.f32 %v1755, %v1822
    %v1888 = vadd.f32 %v1756, %v1822
    %v1889 = vmax.f32 %v1757, %v1886
    %v1890 = vadd.f32 %v1758, %v1886
    %v1891 = vld [vmem:[#allocation2 + $0x8] sm:$0x3]
    %1893 = vrot.lane.b32.xlu0 %v1822, 64
    %v1894 = vpop.permute.xlu0 %1893
    %v1895 = vsel %vm98, %v1894, 0
    %1897 = vmatpush.msra.mxu0 0.0
    %1898 = vmatpush.msra.mxu0 0.0
    %1899 = vmatpush.msra.mxu0 0.0
    %1900 = vmatpush.msra.mxu0 0.0
    %1901 = vmatpush.msra.mxu0 0.0
    %1902 = vmatpush.msra.mxu0 0.0
    %1903 = vmatpush.msra.mxu0 0.0
    %1904 = vmatpush.msra.mxu0 0.0
    %1905 = vmatpush.msra.mxu0 0.0
    %1906 = vmatpush.msra.mxu0 0.0
    %1907 = vmatpush.msra.mxu0 0.0
    %1908 = vmatpush.msra.mxu0 0.0
    %1909 = vmatpush.msra.mxu0 %v1370
    %1910 = vmatpush.msra.mxu0 %v1369
    %1911 = vmatpush.msra.mxu0 %v1368
    %1912 = vmatpush.msra.mxu0 %v1367
    %1913 = vmatmul.f32.gmra.mxu0 %v1895
    %v1914 = vpop.f32.mrf.mxu0
    %v1915 = vadd.f32 0.0, %v1914
    %1916 = vdwg.mxu0
    %v1917 = vadd.f32 %v1891, %v1915
    %v1918 = vxor.u32 %v1917, 2147483648
    %v1919 = vmul.f32 %v1918, 1.442695
    %v1920 = vpow.pop %v1919
    %v1921 = vadd.f32 %v1920, 1.0
    %v1922 = vrcp.pop %v1921
    %v1923 = vmul.f32 %v1921, %v1922
    %v1924 = vsub.f32 1.0, %v1923
    %v1925 = vmul.f32 %v1922, %v1924
    %v1926 = vadd.f32 %v1922, %v1925
    %vm1927 = vweird.f32 %v1921
    %vm1928 = vweird.f32 %v1922
    %vm1929 = vmor %vm1927, %vm1928
    %v1930 = vsel %vm1929, %v1922, %v1926
    %v1931 = vand.u32 2147483647, %v1921
    %vm1932 = vcmp.eq.f32.partialorder %v1931, 8.507059e+37
    %v1933 = vand.u32 %v1921, 2147483648
    %v1934 = vor.u32 1.1754944e-38, %v1933
    %v1935 = vsel %vm1932, %v1934, %v1930
    %v1936 = vmul.f32 1.0, %v1935
    %v1937 = vtanh.pop %v1917
    %v1938 = vmul.f32 %v1936, %v1816
    %1940 = vrot.lane.b32.xlu0 %v1937, 32
    %v1941 = vpop.permute.xlu0 %1940
    %v1943 = vmul.f32 %v1936, %v1941
    %1945 = vrot.lane.b32.xlu0 %v1943, 32
    %v1946 = vpop.permute.xlu0 %1945
    %v1948 = vadd.f32 %v1938, %v1946
    %v1949 = vtanh.pop %v1948
    %1951 = vrot.lane.b32.xlu0 %v1949, 32
    %v1952 = vpop.permute.xlu0 %1951
    %v1954 = vmul.f32 %v1936, %v1952
    %v1955 = vld [vmem:[#allocation3 + $0x6] sm:$0x3]
    %1957 = vrot.lane.b32.xlu0 %v1886, 64
    %v1958 = vpop.permute.xlu0 %1957
    %v1959 = vsel %vm98, %v1958, 0
    %1961 = vmatpush.msra.mxu0 0.0
    %1962 = vmatpush.msra.mxu0 0.0
    %1963 = vmatpush.msra.mxu0 0.0
    %1964 = vmatpush.msra.mxu0 0.0
    %1965 = vmatpush.msra.mxu0 0.0
    %1966 = vmatpush.msra.mxu0 0.0
    %1967 = vmatpush.msra.mxu0 0.0
    %1968 = vmatpush.msra.mxu0 0.0
    %1969 = vmatpush.msra.mxu0 0.0
    %1970 = vmatpush.msra.mxu0 0.0
    %1971 = vmatpush.msra.mxu0 0.0
    %1972 = vmatpush.msra.mxu0 0.0
    %1973 = vmatpush.msra.mxu0 %v1374
    %1974 = vmatpush.msra.mxu0 %v1373
    %1975 = vmatpush.msra.mxu0 %v1372
    %1976 = vmatpush.msra.mxu0 %v1371
    %1977 = vmatmul.f32.gmra.mxu0 %v1959
    %v1978 = vpop.f32.mrf.mxu0
    %v1979 = vadd.f32 0.0, %v1978
    %1980 = vdwg.mxu0
    %v1981 = vadd.f32 %v1955, %v1979
    %v1982 = vxor.u32 %v1981, 2147483648
    %v1983 = vmul.f32 %v1982, 1.442695
    %v1984 = vpow.pop %v1983
    %v1985 = vadd.f32 %v1984, 1.0
    %v1986 = vrcp.pop %v1985
    %v1987 = vmul.f32 %v1985, %v1986
    %v1988 = vsub.f32 1.0, %v1987
    %v1989 = vmul.f32 %v1986, %v1988
    %v1990 = vadd.f32 %v1986, %v1989
    %vm1991 = vweird.f32 %v1985
    %vm1992 = vweird.f32 %v1986
    %vm1993 = vmor %vm1991, %vm1992
    %v1994 = vsel %vm1993, %v1986, %v1990
    %v1995 = vand.u32 2147483647, %v1985
    %vm1996 = vcmp.eq.f32.partialorder %v1995, 8.507059e+37
    %v1997 = vand.u32 %v1985, 2147483648
    %v1998 = vor.u32 1.1754944e-38, %v1997
    %v1999 = vsel %vm1996, %v1998, %v1994
    %v2000 = vmul.f32 1.0, %v1999
    %v2001 = vtanh.pop %v1981
    %v2002 = vmul.f32 %v2000, %v1880
    %2004 = vrot.lane.b32.xlu0 %v2001, 32
    %v2005 = vpop.permute.xlu0 %2004
    %v2007 = vmul.f32 %v2000, %v2005
    %2009 = vrot.lane.b32.xlu0 %v2007, 32
    %v2010 = vpop.permute.xlu0 %2009
    %v2012 = vadd.f32 %v2002, %v2010
    %v2013 = vtanh.pop %v2012
    %2015 = vrot.lane.b32.xlu0 %v2013, 32
    %v2016 = vpop.permute.xlu0 %2015
    %v2018 = vmul.f32 %v2000, %v2016
    %v2019 = vmax.f32 %v1887, %v1954
    %v2020 = vadd.f32 %v1888, %v1954
    %v2021 = vmax.f32 %v1889, %v2018
    %v2022 = vadd.f32 %v1890, %v2018
    %v2023 = vld [vmem:[#allocation2 + $0xa] sm:$0x3]
    %2025 = vrot.lane.b32.xlu0 %v1954, 64
    %v2026 = vpop.permute.xlu0 %2025
    %v2027 = vsel %vm98, %v2026, 0
    %2029 = vmatpush.msra.mxu0 0.0
    %2030 = vmatpush.msra.mxu0 0.0
    %2031 = vmatpush.msra.mxu0 0.0
    %2032 = vmatpush.msra.mxu0 0.0
    %2033 = vmatpush.msra.mxu0 0.0
    %2034 = vmatpush.msra.mxu0 0.0
    %2035 = vmatpush.msra.mxu0 0.0
    %2036 = vmatpush.msra.mxu0 0.0
    %2037 = vmatpush.msra.mxu0 0.0
    %2038 = vmatpush.msra.mxu0 0.0
    %2039 = vmatpush.msra.mxu0 0.0
    %2040 = vmatpush.msra.mxu0 0.0
    %2041 = vmatpush.msra.mxu0 %v1370
    %2042 = vmatpush.msra.mxu0 %v1369
    %2043 = vmatpush.msra.mxu0 %v1368
    %2044 = vmatpush.msra.mxu0 %v1367
    %2045 = vmatmul.f32.gmra.mxu0 %v2027
    %v2046 = vpop.f32.mrf.mxu0
    %v2047 = vadd.f32 0.0, %v2046
    %2048 = vdwg.mxu0
    %v2049 = vadd.f32 %v2023, %v2047
    %v2050 = vxor.u32 %v2049, 2147483648
    %v2051 = vmul.f32 %v2050, 1.442695
    %v2052 = vpow.pop %v2051
    %v2053 = vadd.f32 %v2052, 1.0
    %v2054 = vrcp.pop %v2053
    %v2055 = vmul.f32 %v2053, %v2054
    %v2056 = vsub.f32 1.0, %v2055
    %v2057 = vmul.f32 %v2054, %v2056
    %v2058 = vadd.f32 %v2054, %v2057
    %vm2059 = vweird.f32 %v2053
    %vm2060 = vweird.f32 %v2054
    %vm2061 = vmor %vm2059, %vm2060
    %v2062 = vsel %vm2061, %v2054, %v2058
    %v2063 = vand.u32 2147483647, %v2053
    %vm2064 = vcmp.eq.f32.partialorder %v2063, 8.507059e+37
    %v2065 = vand.u32 %v2053, 2147483648
    %v2066 = vor.u32 1.1754944e-38, %v2065
    %v2067 = vsel %vm2064, %v2066, %v2062
    %v2068 = vmul.f32 1.0, %v2067
    %v2069 = vtanh.pop %v2049
    %v2070 = vmul.f32 %v2068, %v1948
    %2072 = vrot.lane.b32.xlu0 %v2069, 32
    %v2073 = vpop.permute.xlu0 %2072
    %v2075 = vmul.f32 %v2068, %v2073
    %2077 = vrot.lane.b32.xlu0 %v2075, 32
    %v2078 = vpop.permute.xlu0 %2077
    %v2080 = vadd.f32 %v2070, %v2078
    %v2081 = vtanh.pop %v2080
    %2083 = vrot.lane.b32.xlu0 %v2081, 32
    %v2084 = vpop.permute.xlu0 %2083
    %v2086 = vmul.f32 %v2068, %v2084
    %v2087 = vld [vmem:[#allocation3 + $0x4] sm:$0x3]
    %2089 = vrot.lane.b32.xlu0 %v2018, 64
    %v2090 = vpop.permute.xlu0 %2089
    %v2091 = vsel %vm98, %v2090, 0
    %2093 = vmatpush.msra.mxu0 0.0
    %2094 = vmatpush.msra.mxu0 0.0
    %2095 = vmatpush.msra.mxu0 0.0
    %2096 = vmatpush.msra.mxu0 0.0
    %2097 = vmatpush.msra.mxu0 0.0
    %2098 = vmatpush.msra.mxu0 0.0
    %2099 = vmatpush.msra.mxu0 0.0
    %2100 = vmatpush.msra.mxu0 0.0
    %2101 = vmatpush.msra.mxu0 0.0
    %2102 = vmatpush.msra.mxu0 0.0
    %2103 = vmatpush.msra.mxu0 0.0
    %2104 = vmatpush.msra.mxu0 0.0
    %2105 = vmatpush.msra.mxu0 %v1374
    %2106 = vmatpush.msra.mxu0 %v1373
    %2107 = vmatpush.msra.mxu0 %v1372
    %2108 = vmatpush.msra.mxu0 %v1371
    %2109 = vmatmul.f32.gmra.mxu0 %v2091
    %v2110 = vpop.f32.mrf.mxu0
    %v2111 = vadd.f32 0.0, %v2110
    %2112 = vdwg.mxu0
    %v2113 = vadd.f32 %v2087, %v2111
    %v2114 = vxor.u32 %v2113, 2147483648
    %v2115 = vmul.f32 %v2114, 1.442695
    %v2116 = vpow.pop %v2115
    %v2117 = vadd.f32 %v2116, 1.0
    %v2118 = vrcp.pop %v2117
    %v2119 = vmul.f32 %v2117, %v2118
    %v2120 = vsub.f32 1.0, %v2119
    %v2121 = vmul.f32 %v2118, %v2120
    %v2122 = vadd.f32 %v2118, %v2121
    %vm2123 = vweird.f32 %v2117
    %vm2124 = vweird.f32 %v2118
    %vm2125 = vmor %vm2123, %vm2124
    %v2126 = vsel %vm2125, %v2118, %v2122
    %v2127 = vand.u32 2147483647, %v2117
    %vm2128 = vcmp.eq.f32.partialorder %v2127, 8.507059e+37
    %v2129 = vand.u32 %v2117, 2147483648
    %v2130 = vor.u32 1.1754944e-38, %v2129
    %v2131 = vsel %vm2128, %v2130, %v2126
    %v2132 = vmul.f32 1.0, %v2131
    %v2133 = vtanh.pop %v2113
    %v2134 = vmul.f32 %v2132, %v2012
    %2136 = vrot.lane.b32.xlu0 %v2133, 32
    %v2137 = vpop.permute.xlu0 %2136
    %v2139 = vmul.f32 %v2132, %v2137
    %2141 = vrot.lane.b32.xlu0 %v2139, 32
    %v2142 = vpop.permute.xlu0 %2141
    %v2144 = vadd.f32 %v2134, %v2142
    %v2145 = vtanh.pop %v2144
    %2147 = vrot.lane.b32.xlu0 %v2145, 32
    %v2148 = vpop.permute.xlu0 %2147
    %v2150 = vmul.f32 %v2132, %v2148
    %v2151 = vmax.f32 %v2019, %v2086
    %v2152 = vadd.f32 %v2020, %v2086
    %v2153 = vmax.f32 %v2021, %v2150
    %v2154 = vadd.f32 %v2022, %v2150
    %v2155 = vld [vmem:[#allocation2 + $0xc] sm:$0x3]
    %2157 = vrot.lane.b32.xlu0 %v2086, 64
    %v2158 = vpop.permute.xlu0 %2157
    %v2159 = vsel %vm98, %v2158, 0
    %2161 = vmatpush.msra.mxu0 0.0
    %2162 = vmatpush.msra.mxu0 0.0
    %2163 = vmatpush.msra.mxu0 0.0
    %2164 = vmatpush.msra.mxu0 0.0
    %2165 = vmatpush.msra.mxu0 0.0
    %2166 = vmatpush.msra.mxu0 0.0
    %2167 = vmatpush.msra.mxu0 0.0
    %2168 = vmatpush.msra.mxu0 0.0
    %2169 = vmatpush.msra.mxu0 0.0
    %2170 = vmatpush.msra.mxu0 0.0
    %2171 = vmatpush.msra.mxu0 0.0
    %2172 = vmatpush.msra.mxu0 0.0
    %2173 = vmatpush.msra.mxu0 %v1370
    %2174 = vmatpush.msra.mxu0 %v1369
    %2175 = vmatpush.msra.mxu0 %v1368
    %2176 = vmatpush.msra.mxu0 %v1367
    %2177 = vmatmul.f32.gmra.mxu0 %v2159
    %v2178 = vpop.f32.mrf.mxu0
    %v2179 = vadd.f32 0.0, %v2178
    %2180 = vdwg.mxu0
    %v2181 = vadd.f32 %v2155, %v2179
    %v2182 = vxor.u32 %v2181, 2147483648
    %v2183 = vmul.f32 %v2182, 1.442695
    %v2184 = vpow.pop %v2183
    %v2185 = vadd.f32 %v2184, 1.0
    %v2186 = vrcp.pop %v2185
    %v2187 = vmul.f32 %v2185, %v2186
    %v2188 = vsub.f32 1.0, %v2187
    %v2189 = vmul.f32 %v2186, %v2188
    %v2190 = vadd.f32 %v2186, %v2189
    %vm2191 = vweird.f32 %v2185
    %vm2192 = vweird.f32 %v2186
    %vm2193 = vmor %vm2191, %vm2192
    %v2194 = vsel %vm2193, %v2186, %v2190
    %v2195 = vand.u32 2147483647, %v2185
    %vm2196 = vcmp.eq.f32.partialorder %v2195, 8.507059e+37
    %v2197 = vand.u32 %v2185, 2147483648
    %v2198 = vor.u32 1.1754944e-38, %v2197
    %v2199 = vsel %vm2196, %v2198, %v2194
    %v2200 = vmul.f32 1.0, %v2199
    %v2201 = vtanh.pop %v2181
    %v2202 = vmul.f32 %v2200, %v2080
    %2204 = vrot.lane.b32.xlu0 %v2201, 32
    %v2205 = vpop.permute.xlu0 %2204
    %v2207 = vmul.f32 %v2200, %v2205
    %2209 = vrot.lane.b32.xlu0 %v2207, 32
    %v2210 = vpop.permute.xlu0 %2209
    %v2212 = vadd.f32 %v2202, %v2210
    %v2213 = vtanh.pop %v2212
    %2215 = vrot.lane.b32.xlu0 %v2213, 32
    %v2216 = vpop.permute.xlu0 %2215
    %v2218 = vmul.f32 %v2200, %v2216
    %v2219 = vld [vmem:[#allocation3 + $0x2] sm:$0x3]
    %2221 = vrot.lane.b32.xlu0 %v2150, 64
    %v2222 = vpop.permute.xlu0 %2221
    %v2223 = vsel %vm98, %v2222, 0
    %2225 = vmatpush.msra.mxu0 0.0
    %2226 = vmatpush.msra.mxu0 0.0
    %2227 = vmatpush.msra.mxu0 0.0
    %2228 = vmatpush.msra.mxu0 0.0
    %2229 = vmatpush.msra.mxu0 0.0
    %2230 = vmatpush.msra.mxu0 0.0
    %2231 = vmatpush.msra.mxu0 0.0
    %2232 = vmatpush.msra.mxu0 0.0
    %2233 = vmatpush.msra.mxu0 0.0
    %2234 = vmatpush.msra.mxu0 0.0
    %2235 = vmatpush.msra.mxu0 0.0
    %2236 = vmatpush.msra.mxu0 0.0
    %2237 = vmatpush.msra.mxu0 %v1374
    %2238 = vmatpush.msra.mxu0 %v1373
    %2239 = vmatpush.msra.mxu0 %v1372
    %2240 = vmatpush.msra.mxu0 %v1371
    %2241 = vmatmul.f32.gmra.mxu0 %v2223
    %v2242 = vpop.f32.mrf.mxu0
    %v2243 = vadd.f32 0.0, %v2242
    %2244 = vdwg.mxu0
    %v2245 = vadd.f32 %v2219, %v2243
    %v2246 = vxor.u32 %v2245, 2147483648
    %v2247 = vmul.f32 %v2246, 1.442695
    %v2248 = vpow.pop %v2247
    %v2249 = vadd.f32 %v2248, 1.0
    %v2250 = vrcp.pop %v2249
    %v2251 = vmul.f32 %v2249, %v2250
    %v2252 = vsub.f32 1.0, %v2251
    %v2253 = vmul.f32 %v2250, %v2252
    %v2254 = vadd.f32 %v2250, %v2253
    %vm2255 = vweird.f32 %v2249
    %vm2256 = vweird.f32 %v2250
    %vm2257 = vmor %vm2255, %vm2256
    %v2258 = vsel %vm2257, %v2250, %v2254
    %v2259 = vand.u32 2147483647, %v2249
    %vm2260 = vcmp.eq.f32.partialorder %v2259, 8.507059e+37
    %v2261 = vand.u32 %v2249, 2147483648
    %v2262 = vor.u32 1.1754944e-38, %v2261
    %v2263 = vsel %vm2260, %v2262, %v2258
    %v2264 = vmul.f32 1.0, %v2263
    %v2265 = vtanh.pop %v2245
    %v2266 = vmul.f32 %v2264, %v2144
    %2268 = vrot.lane.b32.xlu0 %v2265, 32
    %v2269 = vpop.permute.xlu0 %2268
    %v2271 = vmul.f32 %v2264, %v2269
    %2273 = vrot.lane.b32.xlu0 %v2271, 32
    %v2274 = vpop.permute.xlu0 %2273
    %v2276 = vadd.f32 %v2266, %v2274
    %v2277 = vtanh.pop %v2276
    %2279 = vrot.lane.b32.xlu0 %v2277, 32
    %v2280 = vpop.permute.xlu0 %2279
    %v2282 = vmul.f32 %v2264, %v2280
    %v2283 = vmax.f32 %v2151, %v2218
    %v2284 = vadd.f32 %v2152, %v2218
    %v2285 = vmax.f32 %v2153, %v2282
    %v2286 = vadd.f32 %v2154, %v2282
    %v2287 = vld [vmem:[#allocation2 + $0xe] sm:$0x3]
    %2289 = vrot.lane.b32.xlu0 %v2218, 64
    %v2290 = vpop.permute.xlu0 %2289
    %v2291 = vsel %vm98, %v2290, 0
    %2293 = vmatpush.msra.mxu0 0.0
    %2294 = vmatpush.msra.mxu0 0.0
    %2295 = vmatpush.msra.mxu0 0.0
    %2296 = vmatpush.msra.mxu0 0.0
    %2297 = vmatpush.msra.mxu0 0.0
    %2298 = vmatpush.msra.mxu0 0.0
    %2299 = vmatpush.msra.mxu0 0.0
    %2300 = vmatpush.msra.mxu0 0.0
    %2301 = vmatpush.msra.mxu0 0.0
    %2302 = vmatpush.msra.mxu0 0.0
    %2303 = vmatpush.msra.mxu0 0.0
    %2304 = vmatpush.msra.mxu0 0.0
    %2305 = vmatpush.msra.mxu0 %v1370
    %2306 = vmatpush.msra.mxu0 %v1369
    %2307 = vmatpush.msra.mxu0 %v1368
    %2308 = vmatpush.msra.mxu0 %v1367
    %2309 = vmatmul.f32.gmra.mxu0 %v2291
    %v2310 = vpop.f32.mrf.mxu0
    %v2311 = vadd.f32 0.0, %v2310
    %2312 = vdwg.mxu0
    %v2313 = vadd.f32 %v2287, %v2311
    %v2314 = vxor.u32 %v2313, 2147483648
    %v2315 = vmul.f32 %v2314, 1.442695
    %v2316 = vpow.pop %v2315
    %v2317 = vadd.f32 %v2316, 1.0
    %v2318 = vrcp.pop %v2317
    %v2319 = vmul.f32 %v2317, %v2318
    %v2320 = vsub.f32 1.0, %v2319
    %v2321 = vmul.f32 %v2318, %v2320
    %v2322 = vadd.f32 %v2318, %v2321
    %vm2323 = vweird.f32 %v2317
    %vm2324 = vweird.f32 %v2318
    %vm2325 = vmor %vm2323, %vm2324
    %v2326 = vsel %vm2325, %v2318, %v2322
    %v2327 = vand.u32 2147483647, %v2317
    %vm2328 = vcmp.eq.f32.partialorder %v2327, 8.507059e+37
    %v2329 = vand.u32 %v2317, 2147483648
    %v2330 = vor.u32 1.1754944e-38, %v2329
    %v2331 = vsel %vm2328, %v2330, %v2326
    %v2332 = vmul.f32 1.0, %v2331
    %v2333 = vtanh.pop %v2313
    %v2334 = vmul.f32 %v2332, %v2212
    %2336 = vrot.lane.b32.xlu0 %v2333, 32
    %v2337 = vpop.permute.xlu0 %2336
    %v2339 = vmul.f32 %v2332, %v2337
    %2341 = vrot.lane.b32.xlu0 %v2339, 32
    %v2342 = vpop.permute.xlu0 %2341
    %v2344 = vadd.f32 %v2334, %v2342
    %v2345 = vtanh.pop %v2344
    %2347 = vrot.lane.b32.xlu0 %v2345, 32
    %v2348 = vpop.permute.xlu0 %2347
    %v2350 = vmul.f32 %v2332, %v2348
    %v2351 = vld [vmem:[#allocation3] sm:$0x3]
    %2353 = vrot.lane.b32.xlu0 %v2282, 64
    %v2354 = vpop.permute.xlu0 %2353
    %v2355 = vsel %vm98, %v2354, 0
    %2357 = vmatpush.msra.mxu0 0.0
    %2358 = vmatpush.msra.mxu0 0.0
    %2359 = vmatpush.msra.mxu0 0.0
    %2360 = vmatpush.msra.mxu0 0.0
    %2361 = vmatpush.msra.mxu0 0.0
    %2362 = vmatpush.msra.mxu0 0.0
    %2363 = vmatpush.msra.mxu0 0.0
    %2364 = vmatpush.msra.mxu0 0.0
    %2365 = vmatpush.msra.mxu0 0.0
    %2366 = vmatpush.msra.mxu0 0.0
    %2367 = vmatpush.msra.mxu0 0.0
    %2368 = vmatpush.msra.mxu0 0.0
    %2369 = vmatpush.msra.mxu0 %v1374
    %2370 = vmatpush.msra.mxu0 %v1373
    %2371 = vmatpush.msra.mxu0 %v1372
    %2372 = vmatpush.msra.mxu0 %v1371
    %2373 = vmatmul.f32.gmra.mxu0 %v2355
    %v2374 = vpop.f32.mrf.mxu0
    %v2375 = vadd.f32 0.0, %v2374
    %2376 = vdwg.mxu0
    %v2377 = vadd.f32 %v2351, %v2375
    %v2378 = vxor.u32 %v2377, 2147483648
    %v2379 = vmul.f32 %v2378, 1.442695
    %v2380 = vpow.pop %v2379
    %v2381 = vadd.f32 %v2380, 1.0
    %v2382 = vrcp.pop %v2381
    %v2383 = vmul.f32 %v2381, %v2382
    %v2384 = vsub.f32 1.0, %v2383
    %v2385 = vmul.f32 %v2382, %v2384
    %v2386 = vadd.f32 %v2382, %v2385
    %vm2387 = vweird.f32 %v2381
    %vm2388 = vweird.f32 %v2382
    %vm2389 = vmor %vm2387, %vm2388
    %v2390 = vsel %vm2389, %v2382, %v2386
    %v2391 = vand.u32 2147483647, %v2381
    %vm2392 = vcmp.eq.f32.partialorder %v2391, 8.507059e+37
    %v2393 = vand.u32 %v2381, 2147483648
    %v2394 = vor.u32 1.1754944e-38, %v2393
    %v2395 = vsel %vm2392, %v2394, %v2390
    %v2396 = vmul.f32 1.0, %v2395
    %v2397 = vtanh.pop %v2377
    %v2398 = vmul.f32 %v2396, %v2276
    %2400 = vrot.lane.b32.xlu0 %v2397, 32
    %v2401 = vpop.permute.xlu0 %2400
    %v2403 = vmul.f32 %v2396, %v2401
    %2405 = vrot.lane.b32.xlu0 %v2403, 32
    %v2406 = vpop.permute.xlu0 %2405
    %v2408 = vadd.f32 %v2398, %v2406
    %v2409 = vtanh.pop %v2408
    %2411 = vrot.lane.b32.xlu0 %v2409, 32
    %v2412 = vpop.permute.xlu0 %2411
    %v2414 = vmul.f32 %v2396, %v2412
    %v2415 = vmax.f32 %v2283, %v2350
    %v2416 = vadd.f32 %v2284, %v2350
    %v2417 = vmax.f32 %v2285, %v2414
    %v2418 = vadd.f32 %v2286, %v2414
    %v2419 = vmul.f32 %v2416, 0.125
    %v2420 = vmul.f32 %v2418, 0.125
    %2422 = vrot.lane.b32.xlu0 %v2415, 64
    %v2423 = vpop.permute.xlu0 %2422
    %2426 = vrot.lane.b32.xlu0 %v2417, 96
    %v2427 = vpop.permute.xlu0 %2426
    %2430 = vrot.lane.b32.xlu0 %v2420, 32
    %v2431 = vpop.permute.xlu0 %2430
    %v2433 = vsel %vm98, %v2423, %v2427
    %vm2434 = vcmask 523264
    %v2435 = vsel %vm2434, %v2433, %v2419
    %vm2436 = vcmask 785408
    %v2437 = vsel %vm2436, %v2435, %v2431
    %v2438 = vld [vmem:[%s13] sm:$0xff]
    %v2439 = vld [vmem:[%s13 + $0x8] sm:$0xff]
    %v2440 = vld [vmem:[%s13 + $0x10] sm:$0xff]
    %v2441 = vld [vmem:[%s13 + $0x18] sm:$0xff]
    %v2442 = vld [vmem:[%s13 + $0x20] sm:$0xff]
    %v2443 = vld [vmem:[%s13 + $0x28] sm:$0xff]
    %v2444 = vld [vmem:[%s13 + $0x30] sm:$0xff]
    %v2445 = vld [vmem:[%s13 + $0x38] sm:$0xff]
    %v2446 = vld [vmem:[%s13 + $0x40] sm:$0xff]
    %v2447 = vld [vmem:[%s13 + $0x48] sm:$0xff]
    %v2448 = vld [vmem:[%s13 + $0x50] sm:$0xff]
    %v2449 = vld [vmem:[%s13 + $0x58] sm:$0xff]
    %v2450 = vld [vmem:[%s13 + $0x60] sm:$0xff]
    %v2451 = vld [vmem:[%s13 + $0x68] sm:$0xff]
    %v2452 = vld [vmem:[%s13 + $0x70] sm:$0xff]
    %v2453 = vld [vmem:[%s13 + $0x78] sm:$0xff]
    %v2454 = vld [vmem:[%s14] sm:$0x1]
    %v2456 = vperm.slane %v2454, 0
    %2458 = vmatpush.msra.mxu0 %v2453
    %2459 = vmatpush.msra.mxu0 %v2452
    %2460 = vmatpush.msra.mxu0 %v2451
    %2461 = vmatpush.msra.mxu0 %v2450
    %2462 = vmatpush.msra.mxu0 %v2449
    %2463 = vmatpush.msra.mxu0 %v2448
    %2464 = vmatpush.msra.mxu0 %v2447
    %2465 = vmatpush.msra.mxu0 %v2446
    %2466 = vmatpush.msra.mxu0 %v2445
    %2467 = vmatpush.msra.mxu0 %v2444
    %2468 = vmatpush.msra.mxu0 %v2443
    %2469 = vmatpush.msra.mxu0 %v2442
    %2470 = vmatpush.msra.mxu0 %v2441
    %2471 = vmatpush.msra.mxu0 %v2440
    %2472 = vmatpush.msra.mxu0 %v2439
    %2473 = vmatpush.msra.mxu0 %v2438
    %2474 = vmatmul.f32.gmra.mxu0 %v2437
    %v2475 = vpop.f32.mrf.mxu0
    %v2476 = vadd.f32 %v2456, %v2475
    %2477 = vdwg.mxu0
    %v2478 = vmax.f32 %v2476, 0.0
    %v2479 = vadd.f32 %v2437, %v2478
    %v2480 = vld [vmem:[%s15] sm:$0xff]
    %v2481 = vld [vmem:[%s15 + $0x8] sm:$0xff]
    %v2482 = vld [vmem:[%s15 + $0x10] sm:$0xff]
    %v2483 = vld [vmem:[%s15 + $0x18] sm:$0xff]
    %v2484 = vld [vmem:[%s15 + $0x20] sm:$0xff]
    %v2485 = vld [vmem:[%s15 + $0x28] sm:$0xff]
    %v2486 = vld [vmem:[%s15 + $0x30] sm:$0xff]
    %v2487 = vld [vmem:[%s15 + $0x38] sm:$0xff]
    %v2488 = vld [vmem:[%s15 + $0x40] sm:$0xff]
    %v2489 = vld [vmem:[%s15 + $0x48] sm:$0xff]
    %v2490 = vld [vmem:[%s15 + $0x50] sm:$0xff]
    %v2491 = vld [vmem:[%s15 + $0x58] sm:$0xff]
    %v2492 = vld [vmem:[%s15 + $0x60] sm:$0xff]
    %v2493 = vld [vmem:[%s15 + $0x68] sm:$0xff]
    %v2494 = vld [vmem:[%s15 + $0x70] sm:$0xff]
    %v2495 = vld [vmem:[%s15 + $0x78] sm:$0xff]
    %v2496 = vld [vmem:[#allocation6] sm:$0x1]
    %v2498 = vperm.slane %v2496, 0
    %2500 = vmatpush.msra.mxu0 %v2495
    %2501 = vmatpush.msra.mxu0 %v2494
    %2502 = vmatpush.msra.mxu0 %v2493
    %2503 = vmatpush.msra.mxu0 %v2492
    %2504 = vmatpush.msra.mxu0 %v2491
    %2505 = vmatpush.msra.mxu0 %v2490
    %2506 = vmatpush.msra.mxu0 %v2489
    %2507 = vmatpush.msra.mxu0 %v2488
    %2508 = vmatpush.msra.mxu0 %v2487
    %2509 = vmatpush.msra.mxu0 %v2486
    %2510 = vmatpush.msra.mxu0 %v2485
    %2511 = vmatpush.msra.mxu0 %v2484
    %2512 = vmatpush.msra.mxu0 %v2483
    %2513 = vmatpush.msra.mxu0 %v2482
    %2514 = vmatpush.msra.mxu0 %v2481
    %2515 = vmatpush.msra.mxu0 %v2480
    %2516 = vmatmul.f32.gmra.mxu0 %v2479
    %v2517 = vpop.f32.mrf.mxu0
    %v2518 = vadd.f32 %v2498, %v2517
    %2519 = vdwg.mxu0
    %vm2520 = vcmask 1024
    %2521 = vst.msk [vmem:[%s17] sm:$0x3] %vm2520, %v2518
    // Predicated region
    $region78: #{neural_net_forward.1} parent=1 // pred_check
      _
    $region79: #{neural_net_forward.1} parent=1 // pred_check_branch
      %2523 = sbr.rel (0) target = $region81
    $region80: #{neural_net_forward.1} parent=1 // pred_region
      _
    $region81: #{neural_net_forward.1} parent=1 // pred_fallthru
      _
    // Predicated region
    $region82: #{neural_net_forward.1} parent=1 // pred_check
      _
    $region83: #{neural_net_forward.1} parent=1 // pred_check_branch
      %2525 = sbr.rel (0) target = $region85
    $region84: #{neural_net_forward.1} parent=1 // pred_region
      _
    $region85: #{neural_net_forward.1} parent=1 // pred_fallthru
      _
    %2526 = vsyncpa [#allocation8], 1
    %2527 = vsyncpa [#allocation10], 1

</llo_original>
